<compile_context>
chip_gen: v7x
topology: tpu7x:2x2x1
jax: 0.10.0
libtpu: 0.0.40
codegen_flags: <defaults>
</compile_context>

<pallas_src>
import math
import functools

import jax
import jax.numpy as jnp
from jax.experimental import pallas as pl
from jax.experimental.pallas import tpu as pltpu


def _mha_kernel(q_ref, k_ref, v_ref, g_ref,
                wq_ref, bq_ref, wk_ref, bk_ref, wgk_ref, bgk_ref,
                wv_ref, bv_ref, wgv_ref, bgv_ref, wo_ref, bo_ref,
                gamma_ref, beta_ref,
                o_ref,
                *, h, d_k, d_v, nq, nk, ng, tb, compute_dtype):
    f32 = jnp.float32
    cdt = compute_dtype
    scale = 1.0 / math.sqrt(d_k)

    x_q = q_ref[...]                       # (tb*nq, d_model) f32 — kept for residual
    xq = x_q.astype(cdt)
    xk = k_ref[...].astype(cdt)
    xv = v_ref[...].astype(cdt)
    xg = g_ref[...].astype(cdt)

    # --- projections: batch folded into MXU rows, single wide matmuls (f32 accum) ---
    q_p = jnp.dot(xq, wq_ref[...], preferred_element_type=f32) + bq_ref[0]
    k_p = jnp.dot(xk, wk_ref[...], preferred_element_type=f32) + bk_ref[0]
    gk_p = jnp.dot(xg, wgk_ref[...], preferred_element_type=f32) + bgk_ref[0]
    v_p = jnp.dot(xv, wv_ref[...], preferred_element_type=f32) + bv_ref[0]
    gv_p = jnp.dot(xg, wgv_ref[...], preferred_element_type=f32) + bgv_ref[0]

    # fold 1/sqrt(d_k) into Q once (one VPU multiply instead of one per head)
    q_p = q_p * scale

    # --- split heads ONCE: (rows, h*d) -> (h, rows, d) ---
    def split_heads(x, d):
        return jnp.concatenate(
            [x[:, i * d:(i + 1) * d].astype(cdt)[None] for i in range(h)], axis=0)

    qh = split_heads(q_p, d_k)     # (h, tb*nq, d_k)
    kh = split_heads(k_p, d_k)     # (h, tb*nk, d_k)
    gkh = split_heads(gk_p, d_k)   # (h, tb*ng, d_k)
    vh = split_heads(v_p, d_v)     # (h, tb*nk, d_v)
    gvh = split_heads(gv_p, d_v)   # (h, tb*ng, d_v)

    # --- attention: per batch element, all heads batched in one contraction ---
    outs = []
    for bi in range(tb):                       # tb is small & static -> unrolled
        qb = qh[:, bi * nq:(bi + 1) * nq, :]
        kb = kh[:, bi * nk:(bi + 1) * nk, :]
        gb = gkh[:, bi * ng:(bi + 1) * ng, :]
        vb = vh[:, bi * nk:(bi + 1) * nk, :]
        gvb = gvh[:, bi * ng:(bi + 1) * ng, :]

        # scores: contraction on the last axis of both operands -> no transposes
        s_k = jnp.einsum('hqd,hkd->hqk', qb, kb, preferred_element_type=f32)
        s_g = jnp.einsum('hqd,hgd->hqg', qb, gb, preferred_element_type=f32)

        # joint softmax over [keys | memory slots] without concatenating K/V
        m = jnp.maximum(jnp.max(s_k, axis=-1, keepdims=True),
                        jnp.max(s_g, axis=-1, keepdims=True))
        p_k = jnp.exp(s_k - m)
        p_g = jnp.exp(s_g - m)
        denom = (jnp.sum(p_k, axis=-1, keepdims=True)
                 + jnp.sum(p_g, axis=-1, keepdims=True))
        inv = pl.reciprocal(denom, approx=True)

        o_b = (jnp.einsum('hqk,hkd->hqd', p_k.astype(cdt), vb,
                          preferred_element_type=f32)
               + jnp.einsum('hqg,hgd->hqd', p_g.astype(cdt), gvb,
                            preferred_element_type=f32))
        o_b = o_b * inv                                  # (h, nq, d_v) f32
        outs.append(jnp.concatenate([o_b[i] for i in range(h)], axis=-1))  # (nq, h*d_v)

    att = jnp.concatenate(outs, axis=0)                  # (tb*nq, h*d_v)

    out = jnp.dot(att.astype(cdt), wo_ref[...], preferred_element_type=f32) + bo_ref[0]

    # TODO(synk): nn.Dropout(p=0.1) is stochastic train-time only; eval mode => identity.

    # residual + LayerNorm(d_model), eps=1e-5, biased variance (PyTorch semantics), f32
    x = x_q + out
    mean = jnp.mean(x, axis=-1, keepdims=True)
    var = jnp.mean((x - mean) ** 2, axis=-1, keepdims=True)
    xn = (x - mean) * jax.lax.rsqrt(var + 1e-5)
    o_ref[...] = (xn * gamma_ref[0] + beta_ref[0]).astype(o_ref.dtype)


def multi_head_attention(queries, keys, values, key_grid, params,
                         *, h, d_k, d_v, batch_tile=None,
                         compute_dtype=jnp.float32):
    """queries: (b, nq, d_model); keys/values: (b, nk, d_model);
    key_grid: (b, d_model) or (b, ng, d_model)."""
    if key_grid.ndim == 2:
        key_grid = key_grid[:, None, :]
    b_s, nq, d_model = queries.shape
    nk = keys.shape[1]
    ng = key_grid.shape[1]
    hdk, hdv = h * d_k, h * d_v

    if batch_tile is None:
        batch_tile = b_s          # toy shapes: whole batch per step; tune for real sizes
    assert b_s % batch_tile == 0
    num_tiles = b_s // batch_tile
    tb = batch_tile

    # Flatten (b, s, d) -> (b*s, d) outside the kernel (free metadata reshape) so the
    # kernel sees 2-D row-major activations and folds batch into the matmul rows.
    q2 = queries.reshape(b_s * nq, d_model)
    k2 = keys.reshape(b_s * nk, d_model)
    v2 = values.reshape(b_s * nk, d_model)
    g2 = key_grid.reshape(b_s * ng, d_model)

    # Cast weights once in the wrapper (halves weight DMA bytes in bf16 mode).
    wdt = compute_dtype
    wq = params["wq"].astype(wdt); wk = params["wk"].astype(wdt)
    wgk = params["wgk"].astype(wdt); wv = params["wv"].astype(wdt)
    wgv = params["wgv"].astype(wdt); wo = params["wo"].astype(wdt)

    def full_spec(shape):
        return pl.BlockSpec(shape, lambda i: (0,) * len(shape))

    in_specs = [
        pl.BlockSpec((tb * nq, d_model), lambda i: (i, 0)),   # queries (flattened)
        pl.BlockSpec((tb * nk, d_model), lambda i: (i, 0)),   # keys
        pl.BlockSpec((tb * nk, d_model), lambda i: (i, 0)),   # values
        pl.BlockSpec((tb * ng, d_model), lambda i: (i, 0)),   # key_grid
        full_spec((d_model, hdk)), full_spec((1, hdk)),       # Wq, bq
        full_spec((d_model, hdk)), full_spec((1, hdk)),       # Wk, bk
        full_spec((d_model, hdk)), full_spec((1, hdk)),       # Wgk, bgk
        full_spec((d_model, hdv)), full_spec((1, hdv)),       # Wv, bv
        full_spec((d_model, hdv)), full_spec((1, hdv)),       # Wgv, bgv
        full_spec((hdv, d_model)), full_spec((1, d_model)),   # Wo, bo
        full_spec((1, d_model)), full_spec((1, d_model)),     # gamma, beta
    ]

    kernel = functools.partial(_mha_kernel, h=h, d_k=d_k, d_v=d_v,
                               nq=nq, nk=nk, ng=ng, tb=tb,
                               compute_dtype=compute_dtype)
    out2 = pl.pallas_call(
        kernel,
        out_shape=jax.ShapeDtypeStruct((b_s * nq, d_model), queries.dtype),
        grid_spec=pltpu.PrefetchScalarGridSpec(
            num_scalar_prefetch=0,
            grid=(num_tiles,),
            in_specs=in_specs,
            out_specs=pl.BlockSpec((tb * nq, d_model), lambda i: (i, 0)),
        ),
        compiler_params=pltpu.CompilerParams(
            dimension_semantics=("parallel",),
            vmem_limit_bytes=32 * 1024 * 1024),
    )(q2, k2, v2, g2,
      wq, params["bq"], wk, params["bk"],
      wgk, params["bgk"], wv, params["bv"],
      wgv, params["bgv"], wo, params["bo"],
      params["gamma"], params["beta"])
    return out2.reshape(b_s, nq, d_model)


def _xavier_uniform(key, in_f, out_f, dtype=jnp.float32):
    # torch.nn.init.xavier_uniform_ on weight (out_f, in_f); we store transposed (in_f, out_f)
    bound = math.sqrt(6.0 / (in_f + out_f))
    return jax.random.uniform(key, (in_f, out_f), dtype, minval=-bound, maxval=bound)


def make_params(key, d_model, d_k, d_v, h):
    hdk, hdv = h * d_k, h * d_v
    ks = jax.random.split(key, 6)
    return {
        "wq": _xavier_uniform(ks[0], d_model, hdk), "bq": jnp.zeros((1, hdk), jnp.float32),
        "wk": _xavier_uniform(ks[1], d_model, hdk), "bk": jnp.zeros((1, hdk), jnp.float32),
        "wgk": _xavier_uniform(ks[2], d_model, hdk), "bgk": jnp.zeros((1, hdk), jnp.float32),
        "wv": _xavier_uniform(ks[3], d_model, hdv), "bv": jnp.zeros((1, hdv), jnp.float32),
        "wgv": _xavier_uniform(ks[4], d_model, hdv), "bgv": jnp.zeros((1, hdv), jnp.float32),
        "wo": _xavier_uniform(ks[5], hdv, d_model), "bo": jnp.zeros((1, d_model), jnp.float32),
        "gamma": jnp.ones((1, d_model), jnp.float32),
        "beta": jnp.zeros((1, d_model), jnp.float32),
    }


def reference_forward(queries, keys, values, key_grid, params, *, h, d_k, d_v):
    """Pure-JAX reference matching the PyTorch forward (eval mode)."""
    if key_grid.ndim == 2:
        key_grid = key_grid[:, None, :]
    b_s, nq, d_model = queries.shape
    k = keys @ params["wk"] + params["bk"]
    gk = key_grid @ params["wgk"] + params["bgk"]
    k_new = jnp.concatenate([k, gk], axis=1)
    k_new = k_new.reshape(b_s, -1, h, d_k).transpose(0, 2, 3, 1)
    v = values @ params["wv"] + params["bv"]
    gv = key_grid @ params["wgv"] + params["bgv"]
    v_new = jnp.concatenate([v, gv], axis=1)
    v_new = v_new.reshape(b_s, -1, h, d_v).transpose(0, 2, 1, 3)
    q = (queries @ params["wq"] + params["bq"]).reshape(b_s, nq, h, d_k).transpose(0, 2, 1, 3)
    att = jnp.matmul(q, k_new) / math.sqrt(d_k)
    att = jax.nn.softmax(att, axis=-1)
    out = jnp.matmul(att, v_new).transpose(0, 2, 1, 3).reshape(b_s, nq, h * d_v)
    out = out @ params["wo"] + params["bo"]
    x = queries + out
    mean = jnp.mean(x, axis=-1, keepdims=True)
    var = jnp.mean((x - mean) ** 2, axis=-1, keepdims=True)
    return (x - mean) / jnp.sqrt(var + 1e-5) * params["gamma"] + params["beta"]


if __name__ == "__main__":
    d_model, d_k, d_v, h = 32, 8, 8, 4
    b_s, nq, nk = 2, 8, 8

    key = jax.random.PRNGKey(0)
    kq, kk, kv, kg, kp = jax.random.split(key, 5)
    queries = jax.random.normal(kq, (b_s, nq, d_model), jnp.float32)
    keys = jax.random.normal(kk, (b_s, nk, d_model), jnp.float32)
    values = jax.random.normal(kv, (b_s, nk, d_model), jnp.float32)
    key_grid = jax.random.normal(kg, (b_s, d_model), jnp.float32)  # 2D -> unsqueezed like PyTorch
    params = make_params(kp, d_model, d_k, d_v, h)

    ref = reference_forward(queries, keys, values, key_grid, params,
                            h=h, d_k=d_k, d_v=d_v)

    # f32 MXU path (approx EUP reciprocal in the softmax -> slightly loosened tol)
    out = multi_head_attention(queries, keys, values, key_grid, params,
                               h=h, d_k=d_k, d_v=d_v, compute_dtype=jnp.float32)
    out = jax.block_until_ready(out)
    assert out.shape == (b_s, nq, d_model)
    err = float(jnp.max(jnp.abs(out - ref)))
    assert err < 1e-2, f"f32 kernel mismatch vs JAX reference: {err}"

    # bf16 MXU-operand path (f32 accumulation / softmax / LayerNorm), looser tolerance
    out_bf16 = multi_head_attention(queries, keys, values, key_grid, params,
                                    h=h, d_k=d_k, d_v=d_v,
                                    compute_dtype=jnp.bfloat16)
    out_bf16 = jax.block_until_ready(out_bf16)
    err_bf16 = float(jnp.max(jnp.abs(out_bf16 - ref)))
    assert err_bf16 < 1e-1, f"bf16 kernel mismatch vs JAX reference: {err_bf16}"

    print("KERNEL_OK")
</pallas_src>

<mosaic_0001>
module attributes {stable_mosaic.version = 11 : i64} {
  func.func @_mha_kernel(%arg0: i32, %arg1: memref<16x32xf32, #tpu.memory_space<vmem>>, %arg2: memref<16x32xf32, #tpu.memory_space<vmem>>, %arg3: memref<16x32xf32, #tpu.memory_space<vmem>>, %arg4: memref<2x32xf32, #tpu.memory_space<vmem>>, %arg5: memref<32x32xf32, #tpu.memory_space<vmem>>, %arg6: memref<1x32xf32, #tpu.memory_space<vmem>>, %arg7: memref<32x32xf32, #tpu.memory_space<vmem>>, %arg8: memref<1x32xf32, #tpu.memory_space<vmem>>, %arg9: memref<32x32xf32, #tpu.memory_space<vmem>>, %arg10: memref<1x32xf32, #tpu.memory_space<vmem>>, %arg11: memref<32x32xf32, #tpu.memory_space<vmem>>, %arg12: memref<1x32xf32, #tpu.memory_space<vmem>>, %arg13: memref<32x32xf32, #tpu.memory_space<vmem>>, %arg14: memref<1x32xf32, #tpu.memory_space<vmem>>, %arg15: memref<32x32xf32, #tpu.memory_space<vmem>>, %arg16: memref<1x32xf32, #tpu.memory_space<vmem>>, %arg17: memref<1x32xf32, #tpu.memory_space<vmem>>, %arg18: memref<1x32xf32, #tpu.memory_space<vmem>>, %arg19: memref<16x32xf32, #tpu.memory_space<vmem>>) attributes {dimension_semantics = [#tpu.dimension_semantics<parallel>], iteration_bounds = array<i64: 1>, scalar_prefetch = 0 : i64, scratch_operands = 0 : i64, tpu.core_type = #tpu.core_type<tc>, window_params = [{transform_indices = @transform_0, window_bounds = array<i64: 16, 32>}, {transform_indices = @transform_1, window_bounds = array<i64: 16, 32>}, {transform_indices = @transform_2, window_bounds = array<i64: 16, 32>}, {transform_indices = @transform_3, window_bounds = array<i64: 2, 32>}, {pipeline_mode = #tpu.pipeline_mode<synchronous>, transform_indices = @transform_4, window_bounds = array<i64: 32, 32>}, {pipeline_mode = #tpu.pipeline_mode<synchronous>, transform_indices = @transform_5, window_bounds = array<i64: 1, 32>}, {pipeline_mode = #tpu.pipeline_mode<synchronous>, transform_indices = @transform_6, window_bounds = array<i64: 32, 32>}, {pipeline_mode = #tpu.pipeline_mode<synchronous>, transform_indices = @transform_7, window_bounds = array<i64: 1, 32>}, {pipeline_mode = #tpu.pipeline_mode<synchronous>, transform_indices = @transform_8, window_bounds = array<i64: 32, 32>}, {pipeline_mode = #tpu.pipeline_mode<synchronous>, transform_indices = @transform_9, window_bounds = array<i64: 1, 32>}, {pipeline_mode = #tpu.pipeline_mode<synchronous>, transform_indices = @transform_10, window_bounds = array<i64: 32, 32>}, {pipeline_mode = #tpu.pipeline_mode<synchronous>, transform_indices = @transform_11, window_bounds = array<i64: 1, 32>}, {pipeline_mode = #tpu.pipeline_mode<synchronous>, transform_indices = @transform_12, window_bounds = array<i64: 32, 32>}, {pipeline_mode = #tpu.pipeline_mode<synchronous>, transform_indices = @transform_13, window_bounds = array<i64: 1, 32>}, {pipeline_mode = #tpu.pipeline_mode<synchronous>, transform_indices = @transform_14, window_bounds = array<i64: 32, 32>}, {pipeline_mode = #tpu.pipeline_mode<synchronous>, transform_indices = @transform_15, window_bounds = array<i64: 1, 32>}, {pipeline_mode = #tpu.pipeline_mode<synchronous>, transform_indices = @transform_16, window_bounds = array<i64: 1, 32>}, {pipeline_mode = #tpu.pipeline_mode<synchronous>, transform_indices = @transform_17, window_bounds = array<i64: 1, 32>}, {transform_indices = @transform_18, window_bounds = array<i64: 16, 32>}]} {
    %c0 = arith.constant 0 : index
    %c0_0 = arith.constant 0 : index
    %0 = vector.load %arg1[%c0, %c0_0] : memref<16x32xf32, #tpu.memory_space<vmem>>, vector<16x32xf32>
    %c0_1 = arith.constant 0 : index
    %c0_2 = arith.constant 0 : index
    %1 = vector.load %arg2[%c0_1, %c0_2] : memref<16x32xf32, #tpu.memory_space<vmem>>, vector<16x32xf32>
    %c0_3 = arith.constant 0 : index
    %c0_4 = arith.constant 0 : index
    %2 = vector.load %arg3[%c0_3, %c0_4] : memref<16x32xf32, #tpu.memory_space<vmem>>, vector<16x32xf32>
    %c0_5 = arith.constant 0 : index
    %c0_6 = arith.constant 0 : index
    %3 = vector.load %arg4[%c0_5, %c0_6] : memref<2x32xf32, #tpu.memory_space<vmem>>, vector<2x32xf32>
    %c0_7 = arith.constant 0 : index
    %c0_8 = arith.constant 0 : index
    %4 = vector.load %arg5[%c0_7, %c0_8] : memref<32x32xf32, #tpu.memory_space<vmem>>, vector<32x32xf32>
    %cst = arith.constant dense<0.000000e+00> : vector<16x32xf32>
    %5 = tpu.matmul %0, %4, %cst {dimension_numbers = #tpu.dot_dimension_numbers<[1], [0], [0], [1], [0, 0, 1, 1], [], []>} : vector<16x32xf32>, vector<32x32xf32>, vector<16x32xf32> -> vector<16x32xf32>
    %c0_9 = arith.constant 0 : index
    %c0_10 = arith.constant 0 : index
    %6 = vector.load %arg6[%c0_9, %c0_10] : memref<1x32xf32, #tpu.memory_space<vmem>>, vector<1x32xf32>
    %7 = vector.shape_cast %6 : vector<1x32xf32> to vector<32xf32>
    %8 = vector.shape_cast %7 : vector<32xf32> to vector<1x32xf32>
    %9 = vector.broadcast %8 : vector<1x32xf32> to vector<16x32xf32>
    %10 = arith.addf %5, %9 : vector<16x32xf32>
    %c0_11 = arith.constant 0 : index
    %c0_12 = arith.constant 0 : index
    %11 = vector.load %arg7[%c0_11, %c0_12] : memref<32x32xf32, #tpu.memory_space<vmem>>, vector<32x32xf32>
    %cst_13 = arith.constant dense<0.000000e+00> : vector<16x32xf32>
    %12 = tpu.matmul %1, %11, %cst_13 {dimension_numbers = #tpu.dot_dimension_numbers<[1], [0], [0], [1], [0, 0, 1, 1], [], []>} : vector<16x32xf32>, vector<32x32xf32>, vector<16x32xf32> -> vector<16x32xf32>
    %c0_14 = arith.constant 0 : index
    %c0_15 = arith.constant 0 : index
    %13 = vector.load %arg8[%c0_14, %c0_15] : memref<1x32xf32, #tpu.memory_space<vmem>>, vector<1x32xf32>
    %14 = vector.shape_cast %13 : vector<1x32xf32> to vector<32xf32>
    %15 = vector.shape_cast %14 : vector<32xf32> to vector<1x32xf32>
    %16 = vector.broadcast %15 : vector<1x32xf32> to vector<16x32xf32>
    %17 = arith.addf %12, %16 : vector<16x32xf32>
    %c0_16 = arith.constant 0 : index
    %c0_17 = arith.constant 0 : index
    %18 = vector.load %arg9[%c0_16, %c0_17] : memref<32x32xf32, #tpu.memory_space<vmem>>, vector<32x32xf32>
    %cst_18 = arith.constant dense<0.000000e+00> : vector<2x32xf32>
    %19 = tpu.matmul %3, %18, %cst_18 {dimension_numbers = #tpu.dot_dimension_numbers<[1], [0], [0], [1], [0, 0, 1, 1], [], []>} : vector<2x32xf32>, vector<32x32xf32>, vector<2x32xf32> -> vector<2x32xf32>
    %c0_19 = arith.constant 0 : index
    %c0_20 = arith.constant 0 : index
    %20 = vector.load %arg10[%c0_19, %c0_20] : memref<1x32xf32, #tpu.memory_space<vmem>>, vector<1x32xf32>
    %21 = vector.shape_cast %20 : vector<1x32xf32> to vector<32xf32>
    %22 = vector.shape_cast %21 : vector<32xf32> to vector<1x32xf32>
    %23 = vector.broadcast %22 : vector<1x32xf32> to vector<2x32xf32>
    %24 = arith.addf %19, %23 : vector<2x32xf32>
    %c0_21 = arith.constant 0 : index
    %c0_22 = arith.constant 0 : index
    %25 = vector.load %arg11[%c0_21, %c0_22] : memref<32x32xf32, #tpu.memory_space<vmem>>, vector<32x32xf32>
    %cst_23 = arith.constant dense<0.000000e+00> : vector<16x32xf32>
    %26 = tpu.matmul %2, %25, %cst_23 {dimension_numbers = #tpu.dot_dimension_numbers<[1], [0], [0], [1], [0, 0, 1, 1], [], []>} : vector<16x32xf32>, vector<32x32xf32>, vector<16x32xf32> -> vector<16x32xf32>
    %c0_24 = arith.constant 0 : index
    %c0_25 = arith.constant 0 : index
    %27 = vector.load %arg12[%c0_24, %c0_25] : memref<1x32xf32, #tpu.memory_space<vmem>>, vector<1x32xf32>
    %28 = vector.shape_cast %27 : vector<1x32xf32> to vector<32xf32>
    %29 = vector.shape_cast %28 : vector<32xf32> to vector<1x32xf32>
    %30 = vector.broadcast %29 : vector<1x32xf32> to vector<16x32xf32>
    %31 = arith.addf %26, %30 : vector<16x32xf32>
    %c0_26 = arith.constant 0 : index
    %c0_27 = arith.constant 0 : index
    %32 = vector.load %arg13[%c0_26, %c0_27] : memref<32x32xf32, #tpu.memory_space<vmem>>, vector<32x32xf32>
    %cst_28 = arith.constant dense<0.000000e+00> : vector<2x32xf32>
    %33 = tpu.matmul %3, %32, %cst_28 {dimension_numbers = #tpu.dot_dimension_numbers<[1], [0], [0], [1], [0, 0, 1, 1], [], []>} : vector<2x32xf32>, vector<32x32xf32>, vector<2x32xf32> -> vector<2x32xf32>
    %c0_29 = arith.constant 0 : index
    %c0_30 = arith.constant 0 : index
    %34 = vector.load %arg14[%c0_29, %c0_30] : memref<1x32xf32, #tpu.memory_space<vmem>>, vector<1x32xf32>
    %35 = vector.shape_cast %34 : vector<1x32xf32> to vector<32xf32>
    %36 = vector.shape_cast %35 : vector<32xf32> to vector<1x32xf32>
    %37 = vector.broadcast %36 : vector<1x32xf32> to vector<2x32xf32>
    %38 = arith.addf %33, %37 : vector<2x32xf32>
    %cst_31 = arith.constant 0.353553385 : f32
    %39 = vector.broadcast %cst_31 : f32 to vector<16x32xf32>
    %40 = arith.mulf %10, %39 : vector<16x32xf32>
    %41 = vector.extract_strided_slice %40 {offsets = [0, 0], sizes = [16, 8], strides = [1, 1]} : vector<16x32xf32> to vector<16x8xf32>
    %42 = vector.shape_cast %41 : vector<16x8xf32> to vector<1x16x8xf32>
    %43 = vector.extract_strided_slice %40 {offsets = [0, 8], sizes = [16, 8], strides = [1, 1]} : vector<16x32xf32> to vector<16x8xf32>
    %44 = vector.shape_cast %43 : vector<16x8xf32> to vector<1x16x8xf32>
    %45 = vector.extract_strided_slice %40 {offsets = [0, 16], sizes = [16, 8], strides = [1, 1]} : vector<16x32xf32> to vector<16x8xf32>
    %46 = vector.shape_cast %45 : vector<16x8xf32> to vector<1x16x8xf32>
    %47 = vector.extract_strided_slice %40 {offsets = [0, 24], sizes = [16, 8], strides = [1, 1]} : vector<16x32xf32> to vector<16x8xf32>
    %48 = vector.shape_cast %47 : vector<16x8xf32> to vector<1x16x8xf32>
    %49 = tpu.concatenate %42, %44, %46, %48 in 0 : vector<1x16x8xf32>, vector<1x16x8xf32>, vector<1x16x8xf32>, vector<1x16x8xf32> -> vector<4x16x8xf32>
    %50 = vector.extract_strided_slice %17 {offsets = [0, 0], sizes = [16, 8], strides = [1, 1]} : vector<16x32xf32> to vector<16x8xf32>
    %51 = vector.shape_cast %50 : vector<16x8xf32> to vector<1x16x8xf32>
    %52 = vector.extract_strided_slice %17 {offsets = [0, 8], sizes = [16, 8], strides = [1, 1]} : vector<16x32xf32> to vector<16x8xf32>
    %53 = vector.shape_cast %52 : vector<16x8xf32> to vector<1x16x8xf32>
    %54 = vector.extract_strided_slice %17 {offsets = [0, 16], sizes = [16, 8], strides = [1, 1]} : vector<16x32xf32> to vector<16x8xf32>
    %55 = vector.shape_cast %54 : vector<16x8xf32> to vector<1x16x8xf32>
    %56 = vector.extract_strided_slice %17 {offsets = [0, 24], sizes = [16, 8], strides = [1, 1]} : vector<16x32xf32> to vector<16x8xf32>
    %57 = vector.shape_cast %56 : vector<16x8xf32> to vector<1x16x8xf32>
    %58 = tpu.concatenate %51, %53, %55, %57 in 0 : vector<1x16x8xf32>, vector<1x16x8xf32>, vector<1x16x8xf32>, vector<1x16x8xf32> -> vector<4x16x8xf32>
    %59 = vector.extract_strided_slice %24 {offsets = [0, 0], sizes = [2, 8], strides = [1, 1]} : vector<2x32xf32> to vector<2x8xf32>
    %60 = vector.shape_cast %59 : vector<2x8xf32> to vector<1x2x8xf32>
    %61 = vector.extract_strided_slice %24 {offsets = [0, 8], sizes = [2, 8], strides = [1, 1]} : vector<2x32xf32> to vector<2x8xf32>
    %62 = vector.shape_cast %61 : vector<2x8xf32> to vector<1x2x8xf32>
    %63 = vector.extract_strided_slice %24 {offsets = [0, 16], sizes = [2, 8], strides = [1, 1]} : vector<2x32xf32> to vector<2x8xf32>
    %64 = vector.shape_cast %63 : vector<2x8xf32> to vector<1x2x8xf32>
    %65 = vector.extract_strided_slice %24 {offsets = [0, 24], sizes = [2, 8], strides = [1, 1]} : vector<2x32xf32> to vector<2x8xf32>
    %66 = vector.shape_cast %65 : vector<2x8xf32> to vector<1x2x8xf32>
    %67 = tpu.concatenate %60, %62, %64, %66 in 0 : vector<1x2x8xf32>, vector<1x2x8xf32>, vector<1x2x8xf32>, vector<1x2x8xf32> -> vector<4x2x8xf32>
    %68 = vector.extract_strided_slice %31 {offsets = [0, 0], sizes = [16, 8], strides = [1, 1]} : vector<16x32xf32> to vector<16x8xf32>
    %69 = vector.shape_cast %68 : vector<16x8xf32> to vector<1x16x8xf32>
    %70 = vector.extract_strided_slice %31 {offsets = [0, 8], sizes = [16, 8], strides = [1, 1]} : vector<16x32xf32> to vector<16x8xf32>
    %71 = vector.shape_cast %70 : vector<16x8xf32> to vector<1x16x8xf32>
    %72 = vector.extract_strided_slice %31 {offsets = [0, 16], sizes = [16, 8], strides = [1, 1]} : vector<16x32xf32> to vector<16x8xf32>
    %73 = vector.shape_cast %72 : vector<16x8xf32> to vector<1x16x8xf32>
    %74 = vector.extract_strided_slice %31 {offsets = [0, 24], sizes = [16, 8], strides = [1, 1]} : vector<16x32xf32> to vector<16x8xf32>
    %75 = vector.shape_cast %74 : vector<16x8xf32> to vector<1x16x8xf32>
    %76 = tpu.concatenate %69, %71, %73, %75 in 0 : vector<1x16x8xf32>, vector<1x16x8xf32>, vector<1x16x8xf32>, vector<1x16x8xf32> -> vector<4x16x8xf32>
    %77 = vector.extract_strided_slice %38 {offsets = [0, 0], sizes = [2, 8], strides = [1, 1]} : vector<2x32xf32> to vector<2x8xf32>
    %78 = vector.shape_cast %77 : vector<2x8xf32> to vector<1x2x8xf32>
    %79 = vector.extract_strided_slice %38 {offsets = [0, 8], sizes = [2, 8], strides = [1, 1]} : vector<2x32xf32> to vector<2x8xf32>
    %80 = vector.shape_cast %79 : vector<2x8xf32> to vector<1x2x8xf32>
    %81 = vector.extract_strided_slice %38 {offsets = [0, 16], sizes = [2, 8], strides = [1, 1]} : vector<2x32xf32> to vector<2x8xf32>
    %82 = vector.shape_cast %81 : vector<2x8xf32> to vector<1x2x8xf32>
    %83 = vector.extract_strided_slice %38 {offsets = [0, 24], sizes = [2, 8], strides = [1, 1]} : vector<2x32xf32> to vector<2x8xf32>
    %84 = vector.shape_cast %83 : vector<2x8xf32> to vector<1x2x8xf32>
    %85 = tpu.concatenate %78, %80, %82, %84 in 0 : vector<1x2x8xf32>, vector<1x2x8xf32>, vector<1x2x8xf32>, vector<1x2x8xf32> -> vector<4x2x8xf32>
    %86 = vector.extract_strided_slice %49 {offsets = [0, 0, 0], sizes = [4, 8, 8], strides = [1, 1, 1]} : vector<4x16x8xf32> to vector<4x8x8xf32>
    %87 = vector.extract_strided_slice %58 {offsets = [0, 0, 0], sizes = [4, 8, 8], strides = [1, 1, 1]} : vector<4x16x8xf32> to vector<4x8x8xf32>
    %88 = vector.extract_strided_slice %67 {offsets = [0, 0, 0], sizes = [4, 1, 8], strides = [1, 1, 1]} : vector<4x2x8xf32> to vector<4x1x8xf32>
    %89 = vector.extract_strided_slice %76 {offsets = [0, 0, 0], sizes = [4, 8, 8], strides = [1, 1, 1]} : vector<4x16x8xf32> to vector<4x8x8xf32>
    %90 = vector.extract_strided_slice %85 {offsets = [0, 0, 0], sizes = [4, 1, 8], strides = [1, 1, 1]} : vector<4x2x8xf32> to vector<4x1x8xf32>
    "tpu.trace_start"() <{level = 10 : i32, message = "hqd,hkd->hqk"}> : () -> ()
    %cst_32 = arith.constant dense<0.000000e+00> : vector<4x8x8xf32>
    %91 = tpu.matmul %86, %87, %cst_32 {dimension_numbers = #tpu.dot_dimension_numbers<[2], [2], [1], [1], [0, 0, 0, 1, 1, 1], [0], [0]>} : vector<4x8x8xf32>, vector<4x8x8xf32>, vector<4x8x8xf32> -> vector<4x8x8xf32>
    "tpu.trace_stop"() : () -> ()
    "tpu.trace_start"() <{level = 10 : i32, message = "hqd,hgd->hqg"}> : () -> ()
    %cst_33 = arith.constant dense<0.000000e+00> : vector<4x8x1xf32>
    %92 = tpu.matmul %86, %88, %cst_33 {dimension_numbers = #tpu.dot_dimension_numbers<[2], [2], [1], [1], [0, 0, 0, 1, 1, 1], [0], [0]>} : vector<4x8x8xf32>, vector<4x1x8xf32>, vector<4x8x1xf32> -> vector<4x8x1xf32>
    "tpu.trace_stop"() : () -> ()
    %cst_34 = arith.constant dense<0xFF800000> : vector<4x8xf32>
    %93 = vector.multi_reduction <maximumf>, %91, %cst_34 [2] : vector<4x8x8xf32> to vector<4x8xf32>
    %94 = vector.shape_cast %93 : vector<4x8xf32> to vector<4x8x1xf32>
    %cst_35 = arith.constant dense<0xFF800000> : vector<4x8xf32>
    %95 = vector.multi_reduction <maximumf>, %92, %cst_35 [2] : vector<4x8x1xf32> to vector<4x8xf32>
    %96 = vector.shape_cast %95 : vector<4x8xf32> to vector<4x8x1xf32>
    %97 = arith.maximumf %94, %96 : vector<4x8x1xf32>
    %98 = vector.broadcast %97 : vector<4x8x1xf32> to vector<4x8x8xf32>
    %99 = arith.subf %91, %98 : vector<4x8x8xf32>
    %100 = math.exp %99 : vector<4x8x8xf32>
    %101 = arith.subf %92, %97 : vector<4x8x1xf32>
    %102 = math.exp %101 : vector<4x8x1xf32>
    %cst_36 = arith.constant dense<0.000000e+00> : vector<4x8xf32>
    %103 = vector.multi_reduction <add>, %100, %cst_36 [2] : vector<4x8x8xf32> to vector<4x8xf32>
    %104 = vector.shape_cast %103 : vector<4x8xf32> to vector<4x8x1xf32>
    %cst_37 = arith.constant dense<0.000000e+00> : vector<4x8xf32>
    %105 = vector.multi_reduction <add>, %102, %cst_37 [2] : vector<4x8x1xf32> to vector<4x8xf32>
    %106 = vector.shape_cast %105 : vector<4x8xf32> to vector<4x8x1xf32>
    %107 = arith.addf %104, %106 : vector<4x8x1xf32>
    %108 = tpu.reciprocal %107 {approx = true} : vector<4x8x1xf32> -> vector<4x8x1xf32>
    "tpu.trace_start"() <{level = 10 : i32, message = "hqk,hkd->hqd"}> : () -> ()
    %cst_38 = arith.constant dense<0.000000e+00> : vector<4x8x8xf32>
    %109 = tpu.matmul %100, %89, %cst_38 {dimension_numbers = #tpu.dot_dimension_numbers<[2], [1], [1], [2], [0, 0, 0, 1, 1, 2], [0], [0]>} : vector<4x8x8xf32>, vector<4x8x8xf32>, vector<4x8x8xf32> -> vector<4x8x8xf32>
    "tpu.trace_stop"() : () -> ()
    "tpu.trace_start"() <{level = 10 : i32, message = "hqg,hgd->hqd"}> : () -> ()
    %cst_39 = arith.constant dense<0.000000e+00> : vector<4x8x8xf32>
    %110 = tpu.matmul %102, %90, %cst_39 {dimension_numbers = #tpu.dot_dimension_numbers<[2], [1], [1], [2], [0, 0, 0, 1, 1, 2], [0], [0]>} : vector<4x8x1xf32>, vector<4x1x8xf32>, vector<4x8x8xf32> -> vector<4x8x8xf32>
    "tpu.trace_stop"() : () -> ()
    %111 = arith.addf %109, %110 : vector<4x8x8xf32>
    %112 = vector.broadcast %108 : vector<4x8x1xf32> to vector<4x8x8xf32>
    %113 = arith.mulf %111, %112 : vector<4x8x8xf32>
    %114 = vector.extract_strided_slice %113 {offsets = [0, 0, 0], sizes = [1, 8, 8], strides = [1, 1, 1]} : vector<4x8x8xf32> to vector<1x8x8xf32>
    %115 = vector.shape_cast %114 : vector<1x8x8xf32> to vector<8x8xf32>
    %116 = vector.extract_strided_slice %113 {offsets = [1, 0, 0], sizes = [1, 8, 8], strides = [1, 1, 1]} : vector<4x8x8xf32> to vector<1x8x8xf32>
    %117 = vector.shape_cast %116 : vector<1x8x8xf32> to vector<8x8xf32>
    %118 = vector.extract_strided_slice %113 {offsets = [2, 0, 0], sizes = [1, 8, 8], strides = [1, 1, 1]} : vector<4x8x8xf32> to vector<1x8x8xf32>
    %119 = vector.shape_cast %118 : vector<1x8x8xf32> to vector<8x8xf32>
    %120 = vector.extract_strided_slice %113 {offsets = [3, 0, 0], sizes = [1, 8, 8], strides = [1, 1, 1]} : vector<4x8x8xf32> to vector<1x8x8xf32>
    %121 = vector.shape_cast %120 : vector<1x8x8xf32> to vector<8x8xf32>
    %122 = tpu.concatenate %115, %117, %119, %121 in 1 : vector<8x8xf32>, vector<8x8xf32>, vector<8x8xf32>, vector<8x8xf32> -> vector<8x32xf32>
    %123 = vector.extract_strided_slice %49 {offsets = [0, 8, 0], sizes = [4, 8, 8], strides = [1, 1, 1]} : vector<4x16x8xf32> to vector<4x8x8xf32>
    %124 = vector.extract_strided_slice %58 {offsets = [0, 8, 0], sizes = [4, 8, 8], strides = [1, 1, 1]} : vector<4x16x8xf32> to vector<4x8x8xf32>
    %125 = vector.extract_strided_slice %67 {offsets = [0, 1, 0], sizes = [4, 1, 8], strides = [1, 1, 1]} : vector<4x2x8xf32> to vector<4x1x8xf32>
    %126 = vector.extract_strided_slice %76 {offsets = [0, 8, 0], sizes = [4, 8, 8], strides = [1, 1, 1]} : vector<4x16x8xf32> to vector<4x8x8xf32>
    %127 = vector.extract_strided_slice %85 {offsets = [0, 1, 0], sizes = [4, 1, 8], strides = [1, 1, 1]} : vector<4x2x8xf32> to vector<4x1x8xf32>
    "tpu.trace_start"() <{level = 10 : i32, message = "hqd,hkd->hqk"}> : () -> ()
    %cst_40 = arith.constant dense<0.000000e+00> : vector<4x8x8xf32>
    %128 = tpu.matmul %123, %124, %cst_40 {dimension_numbers = #tpu.dot_dimension_numbers<[2], [2], [1], [1], [0, 0, 0, 1, 1, 1], [0], [0]>} : vector<4x8x8xf32>, vector<4x8x8xf32>, vector<4x8x8xf32> -> vector<4x8x8xf32>
    "tpu.trace_stop"() : () -> ()
    "tpu.trace_start"() <{level = 10 : i32, message = "hqd,hgd->hqg"}> : () -> ()
    %cst_41 = arith.constant dense<0.000000e+00> : vector<4x8x1xf32>
    %129 = tpu.matmul %123, %125, %cst_41 {dimension_numbers = #tpu.dot_dimension_numbers<[2], [2], [1], [1], [0, 0, 0, 1, 1, 1], [0], [0]>} : vector<4x8x8xf32>, vector<4x1x8xf32>, vector<4x8x1xf32> -> vector<4x8x1xf32>
    "tpu.trace_stop"() : () -> ()
    %cst_42 = arith.constant dense<0xFF800000> : vector<4x8xf32>
    %130 = vector.multi_reduction <maximumf>, %128, %cst_42 [2] : vector<4x8x8xf32> to vector<4x8xf32>
    %131 = vector.shape_cast %130 : vector<4x8xf32> to vector<4x8x1xf32>
    %cst_43 = arith.constant dense<0xFF800000> : vector<4x8xf32>
    %132 = vector.multi_reduction <maximumf>, %129, %cst_43 [2] : vector<4x8x1xf32> to vector<4x8xf32>
    %133 = vector.shape_cast %132 : vector<4x8xf32> to vector<4x8x1xf32>
    %134 = arith.maximumf %131, %133 : vector<4x8x1xf32>
    %135 = vector.broadcast %134 : vector<4x8x1xf32> to vector<4x8x8xf32>
    %136 = arith.subf %128, %135 : vector<4x8x8xf32>
    %137 = math.exp %136 : vector<4x8x8xf32>
    %138 = arith.subf %129, %134 : vector<4x8x1xf32>
    %139 = math.exp %138 : vector<4x8x1xf32>
    %cst_44 = arith.constant dense<0.000000e+00> : vector<4x8xf32>
    %140 = vector.multi_reduction <add>, %137, %cst_44 [2] : vector<4x8x8xf32> to vector<4x8xf32>
    %141 = vector.shape_cast %140 : vector<4x8xf32> to vector<4x8x1xf32>
    %cst_45 = arith.constant dense<0.000000e+00> : vector<4x8xf32>
    %142 = vector.multi_reduction <add>, %139, %cst_45 [2] : vector<4x8x1xf32> to vector<4x8xf32>
    %143 = vector.shape_cast %142 : vector<4x8xf32> to vector<4x8x1xf32>
    %144 = arith.addf %141, %143 : vector<4x8x1xf32>
    %145 = tpu.reciprocal %144 {approx = true} : vector<4x8x1xf32> -> vector<4x8x1xf32>
    "tpu.trace_start"() <{level = 10 : i32, message = "hqk,hkd->hqd"}> : () -> ()
    %cst_46 = arith.constant dense<0.000000e+00> : vector<4x8x8xf32>
    %146 = tpu.matmul %137, %126, %cst_46 {dimension_numbers = #tpu.dot_dimension_numbers<[2], [1], [1], [2], [0, 0, 0, 1, 1, 2], [0], [0]>} : vector<4x8x8xf32>, vector<4x8x8xf32>, vector<4x8x8xf32> -> vector<4x8x8xf32>
    "tpu.trace_stop"() : () -> ()
    "tpu.trace_start"() <{level = 10 : i32, message = "hqg,hgd->hqd"}> : () -> ()
    %cst_47 = arith.constant dense<0.000000e+00> : vector<4x8x8xf32>
    %147 = tpu.matmul %139, %127, %cst_47 {dimension_numbers = #tpu.dot_dimension_numbers<[2], [1], [1], [2], [0, 0, 0, 1, 1, 2], [0], [0]>} : vector<4x8x1xf32>, vector<4x1x8xf32>, vector<4x8x8xf32> -> vector<4x8x8xf32>
    "tpu.trace_stop"() : () -> ()
    %148 = arith.addf %146, %147 : vector<4x8x8xf32>
    %149 = vector.broadcast %145 : vector<4x8x1xf32> to vector<4x8x8xf32>
    %150 = arith.mulf %148, %149 : vector<4x8x8xf32>
    %151 = vector.extract_strided_slice %150 {offsets = [0, 0, 0], sizes = [1, 8, 8], strides = [1, 1, 1]} : vector<4x8x8xf32> to vector<1x8x8xf32>
    %152 = vector.shape_cast %151 : vector<1x8x8xf32> to vector<8x8xf32>
    %153 = vector.extract_strided_slice %150 {offsets = [1, 0, 0], sizes = [1, 8, 8], strides = [1, 1, 1]} : vector<4x8x8xf32> to vector<1x8x8xf32>
    %154 = vector.shape_cast %153 : vector<1x8x8xf32> to vector<8x8xf32>
    %155 = vector.extract_strided_slice %150 {offsets = [2, 0, 0], sizes = [1, 8, 8], strides = [1, 1, 1]} : vector<4x8x8xf32> to vector<1x8x8xf32>
    %156 = vector.shape_cast %155 : vector<1x8x8xf32> to vector<8x8xf32>
    %157 = vector.extract_strided_slice %150 {offsets = [3, 0, 0], sizes = [1, 8, 8], strides = [1, 1, 1]} : vector<4x8x8xf32> to vector<1x8x8xf32>
    %158 = vector.shape_cast %157 : vector<1x8x8xf32> to vector<8x8xf32>
    %159 = tpu.concatenate %152, %154, %156, %158 in 1 : vector<8x8xf32>, vector<8x8xf32>, vector<8x8xf32>, vector<8x8xf32> -> vector<8x32xf32>
    %160 = tpu.concatenate %122, %159 in 0 : vector<8x32xf32>, vector<8x32xf32> -> vector<16x32xf32>
    %c0_48 = arith.constant 0 : index
    %c0_49 = arith.constant 0 : index
    %161 = vector.load %arg15[%c0_48, %c0_49] : memref<32x32xf32, #tpu.memory_space<vmem>>, vector<32x32xf32>
    %cst_50 = arith.constant dense<0.000000e+00> : vector<16x32xf32>
    %162 = tpu.matmul %160, %161, %cst_50 {dimension_numbers = #tpu.dot_dimension_numbers<[1], [0], [0], [1], [0, 0, 1, 1], [], []>} : vector<16x32xf32>, vector<32x32xf32>, vector<16x32xf32> -> vector<16x32xf32>
    %c0_51 = arith.constant 0 : index
    %c0_52 = arith.constant 0 : index
    %163 = vector.load %arg16[%c0_51, %c0_52] : memref<1x32xf32, #tpu.memory_space<vmem>>, vector<1x32xf32>
    %164 = vector.shape_cast %163 : vector<1x32xf32> to vector<32xf32>
    %165 = vector.shape_cast %164 : vector<32xf32> to vector<1x32xf32>
    %166 = vector.broadcast %165 : vector<1x32xf32> to vector<16x32xf32>
    %167 = arith.addf %162, %166 : vector<16x32xf32>
    %168 = arith.addf %0, %167 : vector<16x32xf32>
    %cst_53 = arith.constant dense<0.000000e+00> : vector<16xf32>
    %169 = vector.multi_reduction <add>, %168, %cst_53 [1] : vector<16x32xf32> to vector<16xf32>
    %170 = vector.shape_cast %169 : vector<16xf32> to vector<16x1xf32>
    %cst_54 = arith.constant 3.200000e+01 : f32
    %171 = vector.broadcast %cst_54 : f32 to vector<16x1xf32>
    %172 = arith.divf %170, %171 : vector<16x1xf32>
    %173 = vector.broadcast %172 : vector<16x1xf32> to vector<16x32xf32>
    %174 = arith.subf %168, %173 : vector<16x32xf32>
    %175 = arith.mulf %174, %174 : vector<16x32xf32>
    %cst_55 = arith.constant dense<0.000000e+00> : vector<16xf32>
    %176 = vector.multi_reduction <add>, %175, %cst_55 [1] : vector<16x32xf32> to vector<16xf32>
    %177 = vector.shape_cast %176 : vector<16xf32> to vector<16x1xf32>
    %cst_56 = arith.constant 3.200000e+01 : f32
    %178 = vector.broadcast %cst_56 : f32 to vector<16x1xf32>
    %179 = arith.divf %177, %178 : vector<16x1xf32>
    %180 = vector.broadcast %172 : vector<16x1xf32> to vector<16x32xf32>
    %181 = arith.subf %168, %180 : vector<16x32xf32>
    %cst_57 = arith.constant 9.99999974E-6 : f32
    %182 = vector.broadcast %cst_57 : f32 to vector<16x1xf32>
    %183 = arith.addf %179, %182 : vector<16x1xf32>
    %184 = math.rsqrt %183 : vector<16x1xf32>
    %185 = vector.broadcast %184 : vector<16x1xf32> to vector<16x32xf32>
    %186 = arith.mulf %181, %185 : vector<16x32xf32>
    %c0_58 = arith.constant 0 : index
    %c0_59 = arith.constant 0 : index
    %187 = vector.load %arg17[%c0_58, %c0_59] : memref<1x32xf32, #tpu.memory_space<vmem>>, vector<1x32xf32>
    %188 = vector.shape_cast %187 : vector<1x32xf32> to vector<32xf32>
    %189 = vector.shape_cast %188 : vector<32xf32> to vector<1x32xf32>
    %190 = vector.broadcast %189 : vector<1x32xf32> to vector<16x32xf32>
    %191 = arith.mulf %186, %190 : vector<16x32xf32>
    %c0_60 = arith.constant 0 : index
    %c0_61 = arith.constant 0 : index
    %192 = vector.load %arg18[%c0_60, %c0_61] : memref<1x32xf32, #tpu.memory_space<vmem>>, vector<1x32xf32>
    %193 = vector.shape_cast %192 : vector<1x32xf32> to vector<32xf32>
    %194 = vector.shape_cast %193 : vector<32xf32> to vector<1x32xf32>
    %195 = vector.broadcast %194 : vector<1x32xf32> to vector<16x32xf32>
    %196 = arith.addf %191, %195 : vector<16x32xf32>
    %c0_62 = arith.constant 0 : index
    %c0_63 = arith.constant 0 : index
    %197 = vector.load %arg19[%c0_62, %c0_63] : memref<16x32xf32, #tpu.memory_space<vmem>>, vector<16x32xf32>
    tpu.vector_store %arg19[%c0_62, %c0_63], %196 {strides = array<i32>} : memref<16x32xf32, #tpu.memory_space<vmem>>, vector<16x32xf32>,
    return
  }
  func.func @transform_0(%arg0: i32) -> (i32, i32) {
    %c0_i32 = arith.constant 0 : i32
    %c0_i32_0 = arith.constant 0 : i32
    return %arg0, %c0_i32 : i32, i32
  }
  func.func @transform_1(%arg0: i32) -> (i32, i32) {
    %c0_i32 = arith.constant 0 : i32
    %c0_i32_0 = arith.constant 0 : i32
    return %arg0, %c0_i32 : i32, i32
  }
  func.func @transform_2(%arg0: i32) -> (i32, i32) {
    %c0_i32 = arith.constant 0 : i32
    %c0_i32_0 = arith.constant 0 : i32
    return %arg0, %c0_i32 : i32, i32
  }
  func.func @transform_3(%arg0: i32) -> (i32, i32) {
    %c0_i32 = arith.constant 0 : i32
    %c0_i32_0 = arith.constant 0 : i32
    return %arg0, %c0_i32 : i32, i32
  }
  func.func @transform_4(%arg0: i32) -> (i32, i32) {
    %c0_i32 = arith.constant 0 : i32
    %c0_i32_0 = arith.constant 0 : i32
    %c0_i32_1 = arith.constant 0 : i32
    return %c0_i32, %c0_i32_0 : i32, i32
  }
  func.func @transform_5(%arg0: i32) -> (i32, i32) {
    %c0_i32 = arith.constant 0 : i32
    %c0_i32_0 = arith.constant 0 : i32
    %c0_i32_1 = arith.constant 0 : i32
    return %c0_i32, %c0_i32_0 : i32, i32
  }
  func.func @transform_6(%arg0: i32) -> (i32, i32) {
    %c0_i32 = arith.constant 0 : i32
    %c0_i32_0 = arith.constant 0 : i32
    %c0_i32_1 = arith.constant 0 : i32
    return %c0_i32, %c0_i32_0 : i32, i32
  }
  func.func @transform_7(%arg0: i32) -> (i32, i32) {
    %c0_i32 = arith.constant 0 : i32
    %c0_i32_0 = arith.constant 0 : i32
    %c0_i32_1 = arith.constant 0 : i32
    return %c0_i32, %c0_i32_0 : i32, i32
  }
  func.func @transform_8(%arg0: i32) -> (i32, i32) {
    %c0_i32 = arith.constant 0 : i32
    %c0_i32_0 = arith.constant 0 : i32
    %c0_i32_1 = arith.constant 0 : i32
    return %c0_i32, %c0_i32_0 : i32, i32
  }
  func.func @transform_9(%arg0: i32) -> (i32, i32) {
    %c0_i32 = arith.constant 0 : i32
    %c0_i32_0 = arith.constant 0 : i32
    %c0_i32_1 = arith.constant 0 : i32
    return %c0_i32, %c0_i32_0 : i32, i32
  }
  func.func @transform_10(%arg0: i32) -> (i32, i32) {
    %c0_i32 = arith.constant 0 : i32
    %c0_i32_0 = arith.constant 0 : i32
    %c0_i32_1 = arith.constant 0 : i32
    return %c0_i32, %c0_i32_0 : i32, i32
  }
  func.func @transform_11(%arg0: i32) -> (i32, i32) {
    %c0_i32 = arith.constant 0 : i32
    %c0_i32_0 = arith.constant 0 : i32
    %c0_i32_1 = arith.constant 0 : i32
    return %c0_i32, %c0_i32_0 : i32, i32
  }
  func.func @transform_12(%arg0: i32) -> (i32, i32) {
    %c0_i32 = arith.constant 0 : i32
    %c0_i32_0 = arith.constant 0 : i32
    %c0_i32_1 = arith.constant 0 : i32
    return %c0_i32, %c0_i32_0 : i32, i32
  }
  func.func @transform_13(%arg0: i32) -> (i32, i32) {
    %c0_i32 = arith.constant 0 : i32
    %c0_i32_0 = arith.constant 0 : i32
    %c0_i32_1 = arith.constant 0 : i32
    return %c0_i32, %c0_i32_0 : i32, i32
  }
  func.func @transform_14(%arg0: i32) -> (i32, i32) {
    %c0_i32 = arith.constant 0 : i32
    %c0_i32_0 = arith.constant 0 : i32
    %c0_i32_1 = arith.constant 0 : i32
    return %c0_i32, %c0_i32_0 : i32, i32
  }
  func.func @transform_15(%arg0: i32) -> (i32, i32) {
    %c0_i32 = arith.constant 0 : i32
    %c0_i32_0 = arith.constant 0 : i32
    %c0_i32_1 = arith.constant 0 : i32
    return %c0_i32, %c0_i32_0 : i32, i32
  }
  func.func @transform_16(%arg0: i32) -> (i32, i32) {
    %c0_i32 = arith.constant 0 : i32
    %c0_i32_0 = arith.constant 0 : i32
    %c0_i32_1 = arith.constant 0 : i32
    return %c0_i32, %c0_i32_0 : i32, i32
  }
  func.func @transform_17(%arg0: i32) -> (i32, i32) {
    %c0_i32 = arith.constant 0 : i32
    %c0_i32_0 = arith.constant 0 : i32
    %c0_i32_1 = arith.constant 0 : i32
    return %c0_i32, %c0_i32_0 : i32, i32
  }
  func.func @transform_18(%arg0: i32) -> (i32, i32) {
    %c0_i32 = arith.constant 0 : i32
    %c0_i32_0 = arith.constant 0 : i32
    return %arg0, %c0_i32 : i32, i32
  }
}

</mosaic_0001>

<llo_original>
// kernel: tpu_custom_call.1
$region0: #{tpu_custom_call.1}
  #allocation0 [shape = 'u32[]', space=smem, size = 0x4, offset = 0x4, fixed_abs, tag = 'smem constant byte address 0x4 - core index']
  #allocation1 [shape = 'u32[144,128]{1,0:T(1,128)}', space=vmem, size = 0x12000, scoped, tag = 'internal scratch']
  %s0 = inlined_call_operand.hbm [shape: f32[16,32], index: 0, kind: input, shape index: {}]
  %s1 = inlined_call_operand.hbm [shape: f32[16,32], index: 1, kind: input, shape index: {}]
  %s2 = inlined_call_operand.hbm [shape: f32[16,32], index: 2, kind: input, shape index: {}]
  %s3 = inlined_call_operand.vmem [shape: f32[2,32], index: 3, kind: input, shape index: {}]
  %s4 = inlined_call_operand.hbm [shape: f32[32,32], index: 4, kind: input, shape index: {}]
  %s5 = inlined_call_operand.vmem [shape: f32[1,32], index: 5, kind: input, shape index: {}]
  %s6 = inlined_call_operand.hbm [shape: f32[32,32], index: 6, kind: input, shape index: {}]
  %s7 = inlined_call_operand.vmem [shape: f32[1,32], index: 7, kind: input, shape index: {}]
  %s8 = inlined_call_operand.hbm [shape: f32[32,32], index: 8, kind: input, shape index: {}]
  %s9 = inlined_call_operand.vmem [shape: f32[1,32], index: 9, kind: input, shape index: {}]
  %s10 = inlined_call_operand.vmem [shape: f32[32,32], index: 10, kind: input, shape index: {}]
  %s11 = inlined_call_operand.vmem [shape: f32[1,32], index: 11, kind: input, shape index: {}]
  %s12 = inlined_call_operand.hbm [shape: f32[32,32], index: 12, kind: input, shape index: {}]
  %s13 = inlined_call_operand.vmem [shape: f32[1,32], index: 13, kind: input, shape index: {}]
  %s14 = inlined_call_operand.hbm [shape: f32[32,32], index: 14, kind: input, shape index: {}]
  %s15 = inlined_call_operand.vmem [shape: f32[1,32], index: 15, kind: input, shape index: {}]
  %s16 = inlined_call_operand.vmem [shape: f32[1,32], index: 16, kind: input, shape index: {}]
  %s17 = inlined_call_operand.vmem [shape: f32[1,32], index: 17, kind: input, shape index: {}]
  %s18 = inlined_call_operand.hbm [shape: f32[16,32], index: 18, kind: output, shape index: {}]
  %s19 = sld [smem:[#allocation0]]
  $region114: #{tpu_custom_call.1} parent=0
    _
  %s21 = ssub.s32 1, %s19
  %s22 = scalar_select 0, %s21, %s19
  $region1: #{tpu_custom_call.1} parent=0
    #allocation2 [shape = 'u8[8192]{0}', space=vmem, size = 0x2000, scoped, tag = 'input window, operand 0, single buffered']
    #allocation3 [shape = 's32[1]{0}', space=sflag, size = 0x4, scoped, tag = 'scoped memory for tpu_custom_call.1']
    #allocation4 [shape = 's32[1]{0}', space=sflag, size = 0x4, scoped, tag = 'scoped memory for tpu_custom_call.1']
    #allocation5 [shape = 'u8[8192]{0}', space=vmem, size = 0x2000, scoped, tag = 'input window, operand 1, single buffered']
    #allocation6 [shape = 's32[1]{0}', space=sflag, size = 0x4, scoped, tag = 'scoped memory for tpu_custom_call.1']
    #allocation7 [shape = 'u8[8192]{0}', space=vmem, size = 0x2000, scoped, tag = 'input window, operand 2, single buffered']
    #allocation8 [shape = 'u8[16384]{0}', space=vmem, size = 0x4000, scoped, tag = 'input window, operand 4, single buffered']
    #allocation9 [shape = 's32[1]{0}', space=sflag, size = 0x4, scoped, tag = 'scoped memory for tpu_custom_call.1']
    #allocation10 [shape = 'u8[16384]{0}', space=vmem, size = 0x4000, scoped, tag = 'input window, operand 6, single buffered']
    #allocation11 [shape = 'u8[16384]{0}', space=vmem, size = 0x4000, scoped, tag = 'input window, operand 8, single buffered']
    #allocation12 [shape = 's32[1]{0}', space=sflag, size = 0x4, scoped, tag = 'scoped memory for tpu_custom_call.1']
    #allocation13 [shape = 'u8[16384]{0}', space=vmem, size = 0x4000, scoped, tag = 'input window, operand 12, single buffered']
    #allocation14 [shape = 'u8[16384]{0}', space=vmem, size = 0x4000, scoped, tag = 'input window, operand 14, single buffered']
    #allocation15 [shape = 's32[1]{0}', space=sflag, size = 0x4, scoped, tag = 'scoped memory for tpu_custom_call.1']
    #allocation16 [shape = 'u8[8192]{0}', space=vmem, size = 0x2000, scoped, tag = 'output window, operand 0, single buffered']
    %23 = vsyncpa [#allocation3], 0
    %24 = vsyncpa [#allocation6], 0
    %25 = vsyncpa [#allocation9], 0
    %26 = vsyncpa [#allocation12], 0
    %27 = vsyncpa [#allocation15], 0
    %28 = vsyncpa [#allocation4], 0
    // Predicated region
    $region2: #{tpu_custom_call.1} parent=1 // pred_check
      _
    $region3: #{tpu_custom_call.1} parent=1 // pred_check_branch
      %30 = sbr.rel (0) target = $region5
    $region4: #{tpu_custom_call.1} parent=1 // pred_region
      %s32 = ssub.s32 256, 256
      %33 = vsyncadd [#allocation3], %s32
      %s34 = sshll.u32 [#allocation2], 4
      %s35 = int_to_ptr.vmem [resolvable:$true] %s34
      %40 = dma.hbm_to_vmem [thread:$0]  %s0, 256, %s35, [#allocation3], 128, 128, 8
    $region5: #{tpu_custom_call.1} parent=1 // pred_fallthru
      _
    // Predicated region
    $region6: #{tpu_custom_call.1} parent=1 // pred_check
      _
    $region7: #{tpu_custom_call.1} parent=1 // pred_check_branch
      %42 = sbr.rel (0) target = $region9
    $region8: #{tpu_custom_call.1} parent=1 // pred_region
      %s44 = ssub.s32 256, 256
      %45 = vsyncadd [#allocation6], %s44
      %s46 = sshll.u32 [#allocation5], 4
      %s47 = int_to_ptr.vmem [resolvable:$true] %s46
      %52 = dma.hbm_to_vmem [thread:$0]  %s1, 256, %s47, [#allocation6], 128, 128, 8
    $region9: #{tpu_custom_call.1} parent=1 // pred_fallthru
      _
    // Predicated region
    $region10: #{tpu_custom_call.1} parent=1 // pred_check
      _
    $region11: #{tpu_custom_call.1} parent=1 // pred_check_branch
      %54 = sbr.rel (0) target = $region13
    $region12: #{tpu_custom_call.1} parent=1 // pred_region
      %s56 = ssub.s32 256, 256
      %57 = vsyncadd [#allocation6], %s56
      %s58 = sshll.u32 [#allocation7], 4
      %s59 = int_to_ptr.vmem [resolvable:$true] %s58
      %64 = dma.hbm_to_vmem [thread:$0]  %s2, 256, %s59, [#allocation6], 128, 128, 8
    $region13: #{tpu_custom_call.1} parent=1 // pred_fallthru
      _
    // Predicated region
    $region14: #{tpu_custom_call.1} parent=1 // pred_check
      _
    $region15: #{tpu_custom_call.1} parent=1 // pred_check_branch
      %66 = sbr.rel (0) target = $region17
    $region16: #{tpu_custom_call.1} parent=1 // pred_region
      _
    $region17: #{tpu_custom_call.1} parent=1 // pred_fallthru
      _
    // Predicated region
    $region18: #{tpu_custom_call.1} parent=1 // pred_check
      _
    $region19: #{tpu_custom_call.1} parent=1 // pred_check_branch
      %68 = sbr.rel (0) target = $region21
    $region20: #{tpu_custom_call.1} parent=1 // pred_region
      %s70 = ssub.s32 512, 512
      %71 = vsyncadd [#allocation9], %s70
      %s72 = sshll.u32 [#allocation8], 4
      %s73 = int_to_ptr.vmem [resolvable:$true] %s72
      %78 = dma.hbm_to_vmem [thread:$0]  %s4, 512, %s73, [#allocation9], 128, 128, 8
    $region21: #{tpu_custom_call.1} parent=1 // pred_fallthru
      _
    // Predicated region
    $region22: #{tpu_custom_call.1} parent=1 // pred_check
      _
    $region23: #{tpu_custom_call.1} parent=1 // pred_check_branch
      %80 = sbr.rel (0) target = $region25
    $region24: #{tpu_custom_call.1} parent=1 // pred_region
      _
    $region25: #{tpu_custom_call.1} parent=1 // pred_fallthru
      _
    // Predicated region
    $region26: #{tpu_custom_call.1} parent=1 // pred_check
      _
    $region27: #{tpu_custom_call.1} parent=1 // pred_check_branch
      %82 = sbr.rel (0) target = $region29
    $region28: #{tpu_custom_call.1} parent=1 // pred_region
      %s84 = ssub.s32 512, 512
      %85 = vsyncadd [#allocation9], %s84
      %s86 = sshll.u32 [#allocation10], 4
      %s87 = int_to_ptr.vmem [resolvable:$true] %s86
      %92 = dma.hbm_to_vmem [thread:$0]  %s6, 512, %s87, [#allocation9], 128, 128, 8
    $region29: #{tpu_custom_call.1} parent=1 // pred_fallthru
      _
    // Predicated region
    $region30: #{tpu_custom_call.1} parent=1 // pred_check
      _
    $region31: #{tpu_custom_call.1} parent=1 // pred_check_branch
      %94 = sbr.rel (0) target = $region33
    $region32: #{tpu_custom_call.1} parent=1 // pred_region
      _
    $region33: #{tpu_custom_call.1} parent=1 // pred_fallthru
      _
    // Predicated region
    $region34: #{tpu_custom_call.1} parent=1 // pred_check
      _
    $region35: #{tpu_custom_call.1} parent=1 // pred_check_branch
      %96 = sbr.rel (0) target = $region37
    $region36: #{tpu_custom_call.1} parent=1 // pred_region
      %s98 = ssub.s32 512, 512
      %99 = vsyncadd [#allocation12], %s98
      %s100 = sshll.u32 [#allocation11], 4
      %s101 = int_to_ptr.vmem [resolvable:$true] %s100
      %106 = dma.hbm_to_vmem [thread:$0]  %s8, 512, %s101, [#allocation12], 128, 128, 8
    $region37: #{tpu_custom_call.1} parent=1 // pred_fallthru
      _
    // Predicated region
    $region38: #{tpu_custom_call.1} parent=1 // pred_check
      _
    $region39: #{tpu_custom_call.1} parent=1 // pred_check_branch
      %108 = sbr.rel (0) target = $region41
    $region40: #{tpu_custom_call.1} parent=1 // pred_region
      _
    $region41: #{tpu_custom_call.1} parent=1 // pred_fallthru
      _
    // Predicated region
    $region42: #{tpu_custom_call.1} parent=1 // pred_check
      _
    $region43: #{tpu_custom_call.1} parent=1 // pred_check_branch
      %110 = sbr.rel (0) target = $region45
    $region44: #{tpu_custom_call.1} parent=1 // pred_region
      _
    $region45: #{tpu_custom_call.1} parent=1 // pred_fallthru
      _
    // Predicated region
    $region46: #{tpu_custom_call.1} parent=1 // pred_check
      _
    $region47: #{tpu_custom_call.1} parent=1 // pred_check_branch
      %112 = sbr.rel (0) target = $region49
    $region48: #{tpu_custom_call.1} parent=1 // pred_region
      _
    $region49: #{tpu_custom_call.1} parent=1 // pred_fallthru
      _
    // Predicated region
    $region50: #{tpu_custom_call.1} parent=1 // pred_check
      _
    $region51: #{tpu_custom_call.1} parent=1 // pred_check_branch
      %114 = sbr.rel (0) target = $region53
    $region52: #{tpu_custom_call.1} parent=1 // pred_region
      %s116 = ssub.s32 512, 512
      %117 = vsyncadd [#allocation12], %s116
      %s118 = sshll.u32 [#allocation13], 4
      %s119 = int_to_ptr.vmem [resolvable:$true] %s118
      %124 = dma.hbm_to_vmem [thread:$0]  %s12, 512, %s119, [#allocation12], 128, 128, 8
    $region53: #{tpu_custom_call.1} parent=1 // pred_fallthru
      _
    // Predicated region
    $region54: #{tpu_custom_call.1} parent=1 // pred_check
      _
    $region55: #{tpu_custom_call.1} parent=1 // pred_check_branch
      %126 = sbr.rel (0) target = $region57
    $region56: #{tpu_custom_call.1} parent=1 // pred_region
      _
    $region57: #{tpu_custom_call.1} parent=1 // pred_fallthru
      _
    // Predicated region
    $region58: #{tpu_custom_call.1} parent=1 // pred_check
      _
    $region59: #{tpu_custom_call.1} parent=1 // pred_check_branch
      %128 = sbr.rel (0) target = $region61
    $region60: #{tpu_custom_call.1} parent=1 // pred_region
      %s130 = ssub.s32 512, 512
      %131 = vsyncadd [#allocation15], %s130
      %s132 = sshll.u32 [#allocation14], 4
      %s133 = int_to_ptr.vmem [resolvable:$true] %s132
      %138 = dma.hbm_to_vmem [thread:$0]  %s14, 512, %s133, [#allocation15], 128, 128, 8
    $region61: #{tpu_custom_call.1} parent=1 // pred_fallthru
      _
    // Predicated region
    $region62: #{tpu_custom_call.1} parent=1 // pred_check
      _
    $region63: #{tpu_custom_call.1} parent=1 // pred_check_branch
      %140 = sbr.rel (0) target = $region65
    $region64: #{tpu_custom_call.1} parent=1 // pred_region
      _
    $region65: #{tpu_custom_call.1} parent=1 // pred_fallthru
      _
    // Predicated region
    $region66: #{tpu_custom_call.1} parent=1 // pred_check
      _
    $region67: #{tpu_custom_call.1} parent=1 // pred_check_branch
      %142 = sbr.rel (0) target = $region69
    $region68: #{tpu_custom_call.1} parent=1 // pred_region
      _
    $region69: #{tpu_custom_call.1} parent=1 // pred_fallthru
      _
    // Predicated region
    $region70: #{tpu_custom_call.1} parent=1 // pred_check
      _
    $region71: #{tpu_custom_call.1} parent=1 // pred_check_branch
      %144 = sbr.rel (0) target = $region73
    $region72: #{tpu_custom_call.1} parent=1 // pred_region
      _
    $region73: #{tpu_custom_call.1} parent=1 // pred_fallthru
      _
    // Predicated region
    $region74: #{tpu_custom_call.1} parent=1 // pred_check
      _
    $region75: #{tpu_custom_call.1} parent=1 // pred_check_branch
      %146 = sbr.rel (0) target = $region77
    $region76: #{tpu_custom_call.1} parent=1 // pred_region
      %147 = dma.done [#allocation3], 256
    $region77: #{tpu_custom_call.1} parent=1 // pred_fallthru
      _
    // Predicated region
    $region78: #{tpu_custom_call.1} parent=1 // pred_check
      _
    $region79: #{tpu_custom_call.1} parent=1 // pred_check_branch
      %149 = sbr.rel (0) target = $region81
    $region80: #{tpu_custom_call.1} parent=1 // pred_region
      %150 = dma.done [#allocation6], 256
    $region81: #{tpu_custom_call.1} parent=1 // pred_fallthru
      _
    // Predicated region
    $region82: #{tpu_custom_call.1} parent=1 // pred_check
      _
    $region83: #{tpu_custom_call.1} parent=1 // pred_check_branch
      %152 = sbr.rel (0) target = $region85
    $region84: #{tpu_custom_call.1} parent=1 // pred_region
      %153 = dma.done [#allocation6], 256
    $region85: #{tpu_custom_call.1} parent=1 // pred_fallthru
      _
    // Predicated region
    $region86: #{tpu_custom_call.1} parent=1 // pred_check
      _
    $region87: #{tpu_custom_call.1} parent=1 // pred_check_branch
      %155 = sbr.rel (0) target = $region89
    $region88: #{tpu_custom_call.1} parent=1 // pred_region
      %156 = dma.done [#allocation9], 512
    $region89: #{tpu_custom_call.1} parent=1 // pred_fallthru
      _
    // Predicated region
    $region90: #{tpu_custom_call.1} parent=1 // pred_check
      _
    $region91: #{tpu_custom_call.1} parent=1 // pred_check_branch
      %158 = sbr.rel (0) target = $region93
    $region92: #{tpu_custom_call.1} parent=1 // pred_region
      %159 = dma.done [#allocation9], 512
    $region93: #{tpu_custom_call.1} parent=1 // pred_fallthru
      _
    // Predicated region
    $region94: #{tpu_custom_call.1} parent=1 // pred_check
      _
    $region95: #{tpu_custom_call.1} parent=1 // pred_check_branch
      %161 = sbr.rel (0) target = $region97
    $region96: #{tpu_custom_call.1} parent=1 // pred_region
      %162 = dma.done [#allocation12], 512
    $region97: #{tpu_custom_call.1} parent=1 // pred_fallthru
      _
    // Predicated region
    $region98: #{tpu_custom_call.1} parent=1 // pred_check
      _
    $region99: #{tpu_custom_call.1} parent=1 // pred_check_branch
      %164 = sbr.rel (0) target = $region101
    $region100: #{tpu_custom_call.1} parent=1 // pred_region
      %165 = dma.done [#allocation12], 512
    $region101: #{tpu_custom_call.1} parent=1 // pred_fallthru
      _
    // Predicated region
    $region102: #{tpu_custom_call.1} parent=1 // pred_check
      _
    $region103: #{tpu_custom_call.1} parent=1 // pred_check_branch
      %167 = sbr.rel (0) target = $region105
    $region104: #{tpu_custom_call.1} parent=1 // pred_region
      %168 = dma.done [#allocation15], 512
    $region105: #{tpu_custom_call.1} parent=1 // pred_fallthru
      _
    %v169 = vld [vmem:[#allocation2] sm:$0xff]
    %v170 = vld [vmem:[#allocation2 + $0x8] sm:$0xff]
    %v171 = vld [vmem:[#allocation5] sm:$0xff]
    %v172 = vld [vmem:[#allocation5 + $0x8] sm:$0xff]
    %v173 = vld [vmem:[#allocation7] sm:$0xff]
    %v174 = vld [vmem:[#allocation7 + $0x8] sm:$0xff]
    %v175 = vld [vmem:[%s3] sm:$0x3]
    %v176 = vld [vmem:[#allocation8] sm:$0xff]
    %v177 = vld [vmem:[#allocation8 + $0x8] sm:$0xff]
    %v178 = vld [vmem:[#allocation8 + $0x10] sm:$0xff]
    %v179 = vld [vmem:[#allocation8 + $0x18] sm:$0xff]
    %v180 = vld [vmem:[%s5] sm:$0x1]
    %v182 = vlaneseq
    %v183 = vshrl.u32 %v182, 7
    %v184 = vsub.s32 0, %v183
    %v185 = vrot.slane %v180, %v184
    %vm187 = vcmask 261120
    %v189 = vsel %vm187, %v169, 0
    %v192 = vsel %vm187, %v170, 0
    %194 = vmatprep.subr.mxu0 0.0
    %195 = vmatpush1.msra.mxu0 %v176
    %196 = vmatprep.subr.mxu0 0.0
    %197 = vmatpush1.msra.mxu0 %v177
    %198 = vmatprep.subr.mxu0 0.0
    %199 = vmatpush1.msra.mxu0 %v178
    %200 = vmatprep.subr.mxu0 0.0
    %201 = vmatpush1.msra.mxu0 %v179
    %202 = vmatprep.subr.mxu0 0.0
    %203 = vmatpush1.msra.mxu0 0.0
    %204 = vmatprep.subr.mxu0 0.0
    %205 = vmatpush1.msra.mxu0 0.0
    %206 = vmatprep.subr.mxu0 0.0
    %207 = vmatpush1.msra.mxu0 0.0
    %208 = vmatprep.subr.mxu0 0.0
    %209 = vmatpush1.msra.mxu0 0.0
    %210 = vmatprep.subr.mxu0 0.0
    %211 = vmatpush1.msra.mxu0 0.0
    %212 = vmatprep.subr.mxu0 0.0
    %213 = vmatpush1.msra.mxu0 0.0
    %214 = vmatprep.subr.mxu0 0.0
    %215 = vmatpush1.msra.mxu0 0.0
    %216 = vmatprep.subr.mxu0 0.0
    %217 = vmatpush1.msra.mxu0 0.0
    %218 = vmatprep.subr.mxu0 0.0
    %219 = vmatpush1.msra.mxu0 0.0
    %220 = vmatprep.subr.mxu0 0.0
    %221 = vmatpush1.msra.mxu0 0.0
    %222 = vmatprep.subr.mxu0 0.0
    %223 = vmatpush1.msra.mxu0 0.0
    %224 = vmatprep.subr.mxu0 0.0
    %225 = vmatpush1.msra.mxu0 0.0
    %226 = vmatprep.subr.mxu0 0.0
    %227 = vmatpush1.msra.mxu0 0.0
    %228 = vmatprep.subr.mxu0 0.0
    %229 = vmatpush1.msra.mxu0 0.0
    %230 = vmatprep.subr.mxu0 0.0
    %231 = vmatpush1.msra.mxu0 0.0
    %232 = vmatprep.subr.mxu0 0.0
    %233 = vmatpush1.msra.mxu0 0.0
    %234 = vmatprep.subr.mxu0 0.0
    %235 = vmatpush1.msra.mxu0 0.0
    %236 = vmatprep.subr.mxu0 0.0
    %237 = vmatpush1.msra.mxu0 0.0
    %238 = vmatprep.subr.mxu0 0.0
    %239 = vmatpush1.msra.mxu0 0.0
    %240 = vmatprep.subr.mxu0 0.0
    %241 = vmatpush1.msra.mxu0 0.0
    %242 = vmatprep.subr.mxu0 0.0
    %243 = vmatpush1.msra.mxu0 0.0
    %244 = vmatprep.subr.mxu0 0.0
    %245 = vmatpush1.msra.mxu0 0.0
    %246 = vmatprep.subr.mxu0 0.0
    %247 = vmatpush1.msra.mxu0 0.0
    %248 = vmatprep.subr.mxu0 0.0
    %249 = vmatpush1.msra.mxu0 0.0
    %250 = vmatprep.subr.mxu0 0.0
    %251 = vmatpush1.msra.mxu0 0.0
    %252 = vmatprep.subr.mxu0 0.0
    %253 = vmatpush1.msra.mxu0 0.0
    %254 = vmatprep.subr.mxu0 0.0
    %255 = vmatpush1.msra.mxu0 0.0
    %256 = vmatprep.subr.mxu0 0.0
    %257 = vmatpush1.msra.mxu0 0.0
    %258 = vmatprep.mubr.f32.mxu0 0.0
    %259 = vmatmul.mubr.f32.gmra.mrb[0].mxu0 %v189
    %v260 = vpop.f32.mrb[0].mxu0
    %v261 = vadd.f32 %v185, %v260
    %v262 = vpop.f32.mrb[0].mxu0
    %263 = vmatprep.mubr.f32.mxu0 0.0
    %264 = vmatmul.mubr.f32.gmra.mrb[0].mxu0 %v192
    %v265 = vpop.f32.mrb[0].mxu0
    %v266 = vadd.f32 %v185, %v265
    %v267 = vpop.f32.mrb[0].mxu0
    %268 = vdwg.mxu0
    %v269 = vld [vmem:[#allocation10] sm:$0xff]
    %v270 = vld [vmem:[#allocation10 + $0x8] sm:$0xff]
    %v271 = vld [vmem:[#allocation10 + $0x10] sm:$0xff]
    %v272 = vld [vmem:[#allocation10 + $0x18] sm:$0xff]
    %v273 = vld [vmem:[%s7] sm:$0x1]
    %v275 = vlaneseq
    %v276 = vshrl.u32 %v275, 7
    %v277 = vsub.s32 0, %v276
    %v278 = vrot.slane %v273, %v277
    %v281 = vsel %vm187, %v171, 0
    %v284 = vsel %vm187, %v172, 0
    %286 = vmatprep.subr.mxu0 0.0
    %287 = vmatpush1.msra.mxu0 %v269
    %288 = vmatprep.subr.mxu0 0.0
    %289 = vmatpush1.msra.mxu0 %v270
    %290 = vmatprep.subr.mxu0 0.0
    %291 = vmatpush1.msra.mxu0 %v271
    %292 = vmatprep.subr.mxu0 0.0
    %293 = vmatpush1.msra.mxu0 %v272
    %294 = vmatprep.subr.mxu0 0.0
    %295 = vmatpush1.msra.mxu0 0.0
    %296 = vmatprep.subr.mxu0 0.0
    %297 = vmatpush1.msra.mxu0 0.0
    %298 = vmatprep.subr.mxu0 0.0
    %299 = vmatpush1.msra.mxu0 0.0
    %300 = vmatprep.subr.mxu0 0.0
    %301 = vmatpush1.msra.mxu0 0.0
    %302 = vmatprep.subr.mxu0 0.0
    %303 = vmatpush1.msra.mxu0 0.0
    %304 = vmatprep.subr.mxu0 0.0
    %305 = vmatpush1.msra.mxu0 0.0
    %306 = vmatprep.subr.mxu0 0.0
    %307 = vmatpush1.msra.mxu0 0.0
    %308 = vmatprep.subr.mxu0 0.0
    %309 = vmatpush1.msra.mxu0 0.0
    %310 = vmatprep.subr.mxu0 0.0
    %311 = vmatpush1.msra.mxu0 0.0
    %312 = vmatprep.subr.mxu0 0.0
    %313 = vmatpush1.msra.mxu0 0.0
    %314 = vmatprep.subr.mxu0 0.0
    %315 = vmatpush1.msra.mxu0 0.0
    %316 = vmatprep.subr.mxu0 0.0
    %317 = vmatpush1.msra.mxu0 0.0
    %318 = vmatprep.subr.mxu0 0.0
    %319 = vmatpush1.msra.mxu0 0.0
    %320 = vmatprep.subr.mxu0 0.0
    %321 = vmatpush1.msra.mxu0 0.0
    %322 = vmatprep.subr.mxu0 0.0
    %323 = vmatpush1.msra.mxu0 0.0
    %324 = vmatprep.subr.mxu0 0.0
    %325 = vmatpush1.msra.mxu0 0.0
    %326 = vmatprep.subr.mxu0 0.0
    %327 = vmatpush1.msra.mxu0 0.0
    %328 = vmatprep.subr.mxu0 0.0
    %329 = vmatpush1.msra.mxu0 0.0
    %330 = vmatprep.subr.mxu0 0.0
    %331 = vmatpush1.msra.mxu0 0.0
    %332 = vmatprep.subr.mxu0 0.0
    %333 = vmatpush1.msra.mxu0 0.0
    %334 = vmatprep.subr.mxu0 0.0
    %335 = vmatpush1.msra.mxu0 0.0
    %336 = vmatprep.subr.mxu0 0.0
    %337 = vmatpush1.msra.mxu0 0.0
    %338 = vmatprep.subr.mxu0 0.0
    %339 = vmatpush1.msra.mxu0 0.0
    %340 = vmatprep.subr.mxu0 0.0
    %341 = vmatpush1.msra.mxu0 0.0
    %342 = vmatprep.subr.mxu0 0.0
    %343 = vmatpush1.msra.mxu0 0.0
    %344 = vmatprep.subr.mxu0 0.0
    %345 = vmatpush1.msra.mxu0 0.0
    %346 = vmatprep.subr.mxu0 0.0
    %347 = vmatpush1.msra.mxu0 0.0
    %348 = vmatprep.subr.mxu0 0.0
    %349 = vmatpush1.msra.mxu0 0.0
    %350 = vmatprep.mubr.f32.mxu0 0.0
    %351 = vmatmul.mubr.f32.gmra.mrb[0].mxu0 %v281
    %v352 = vpop.f32.mrb[0].mxu0
    %v353 = vadd.f32 %v278, %v352
    %v354 = vpop.f32.mrb[0].mxu0
    %355 = vmatprep.mubr.f32.mxu0 0.0
    %356 = vmatmul.mubr.f32.gmra.mrb[0].mxu0 %v284
    %v357 = vpop.f32.mrb[0].mxu0
    %v358 = vadd.f32 %v278, %v357
    %v359 = vpop.f32.mrb[0].mxu0
    %360 = vdwg.mxu0
    %v361 = vld [vmem:[#allocation11] sm:$0xff]
    %v362 = vld [vmem:[#allocation11 + $0x8] sm:$0xff]
    %v363 = vld [vmem:[#allocation11 + $0x10] sm:$0xff]
    %v364 = vld [vmem:[#allocation11 + $0x18] sm:$0xff]
    %v365 = vld [vmem:[%s9] sm:$0x1]
    %v367 = vlaneseq
    %v368 = vshrl.u32 %v367, 7
    %v369 = vsub.s32 0, %v368
    %v370 = vrot.slane %v365, %v369
    %v373 = vsel %vm187, %v175, 0
    %375 = vmatprep.subr.mxu0 0.0
    %376 = vmatpush1.msra.mxu0 %v361
    %377 = vmatprep.subr.mxu0 0.0
    %378 = vmatpush1.msra.mxu0 %v362
    %379 = vmatprep.subr.mxu0 0.0
    %380 = vmatpush1.msra.mxu0 %v363
    %381 = vmatprep.subr.mxu0 0.0
    %382 = vmatpush1.msra.mxu0 %v364
    %383 = vmatprep.subr.mxu0 0.0
    %384 = vmatpush1.msra.mxu0 0.0
    %385 = vmatprep.subr.mxu0 0.0
    %386 = vmatpush1.msra.mxu0 0.0
    %387 = vmatprep.subr.mxu0 0.0
    %388 = vmatpush1.msra.mxu0 0.0
    %389 = vmatprep.subr.mxu0 0.0
    %390 = vmatpush1.msra.mxu0 0.0
    %391 = vmatprep.subr.mxu0 0.0
    %392 = vmatpush1.msra.mxu0 0.0
    %393 = vmatprep.subr.mxu0 0.0
    %394 = vmatpush1.msra.mxu0 0.0
    %395 = vmatprep.subr.mxu0 0.0
    %396 = vmatpush1.msra.mxu0 0.0
    %397 = vmatprep.subr.mxu0 0.0
    %398 = vmatpush1.msra.mxu0 0.0
    %399 = vmatprep.subr.mxu0 0.0
    %400 = vmatpush1.msra.mxu0 0.0
    %401 = vmatprep.subr.mxu0 0.0
    %402 = vmatpush1.msra.mxu0 0.0
    %403 = vmatprep.subr.mxu0 0.0
    %404 = vmatpush1.msra.mxu0 0.0
    %405 = vmatprep.subr.mxu0 0.0
    %406 = vmatpush1.msra.mxu0 0.0
    %407 = vmatprep.subr.mxu0 0.0
    %408 = vmatpush1.msra.mxu0 0.0
    %409 = vmatprep.subr.mxu0 0.0
    %410 = vmatpush1.msra.mxu0 0.0
    %411 = vmatprep.subr.mxu0 0.0
    %412 = vmatpush1.msra.mxu0 0.0
    %413 = vmatprep.subr.mxu0 0.0
    %414 = vmatpush1.msra.mxu0 0.0
    %415 = vmatprep.subr.mxu0 0.0
    %416 = vmatpush1.msra.mxu0 0.0
    %417 = vmatprep.subr.mxu0 0.0
    %418 = vmatpush1.msra.mxu0 0.0
    %419 = vmatprep.subr.mxu0 0.0
    %420 = vmatpush1.msra.mxu0 0.0
    %421 = vmatprep.subr.mxu0 0.0
    %422 = vmatpush1.msra.mxu0 0.0
    %423 = vmatprep.subr.mxu0 0.0
    %424 = vmatpush1.msra.mxu0 0.0
    %425 = vmatprep.subr.mxu0 0.0
    %426 = vmatpush1.msra.mxu0 0.0
    %427 = vmatprep.subr.mxu0 0.0
    %428 = vmatpush1.msra.mxu0 0.0
    %429 = vmatprep.subr.mxu0 0.0
    %430 = vmatpush1.msra.mxu0 0.0
    %431 = vmatprep.subr.mxu0 0.0
    %432 = vmatpush1.msra.mxu0 0.0
    %433 = vmatprep.subr.mxu0 0.0
    %434 = vmatpush1.msra.mxu0 0.0
    %435 = vmatprep.subr.mxu0 0.0
    %436 = vmatpush1.msra.mxu0 0.0
    %437 = vmatprep.subr.mxu0 0.0
    %438 = vmatpush1.msra.mxu0 0.0
    %439 = vmatprep.mubr.f32.mxu0 0.0
    %440 = vmatmul.mubr.f32.gmra.mrb[0].mxu0 %v373
    %v441 = vpop.f32.mrb[0].mxu0
    %v442 = vadd.f32 %v370, %v441
    %v443 = vpop.f32.mrb[0].mxu0
    %444 = vdwg.mxu0
    %v445 = vld [vmem:[%s10] sm:$0xff]
    %v446 = vld [vmem:[%s10 + $0x8] sm:$0xff]
    %v447 = vld [vmem:[%s10 + $0x10] sm:$0xff]
    %v448 = vld [vmem:[%s10 + $0x18] sm:$0xff]
    %v449 = vld [vmem:[%s11] sm:$0x1]
    %v451 = vlaneseq
    %v452 = vshrl.u32 %v451, 7
    %v453 = vsub.s32 0, %v452
    %v454 = vrot.slane %v449, %v453
    %v457 = vsel %vm187, %v173, 0
    %v460 = vsel %vm187, %v174, 0
    %462 = vmatprep.subr.mxu0 0.0
    %463 = vmatpush1.msra.mxu0 %v445
    %464 = vmatprep.subr.mxu0 0.0
    %465 = vmatpush1.msra.mxu0 %v446
    %466 = vmatprep.subr.mxu0 0.0
    %467 = vmatpush1.msra.mxu0 %v447
    %468 = vmatprep.subr.mxu0 0.0
    %469 = vmatpush1.msra.mxu0 %v448
    %470 = vmatprep.subr.mxu0 0.0
    %471 = vmatpush1.msra.mxu0 0.0
    %472 = vmatprep.subr.mxu0 0.0
    %473 = vmatpush1.msra.mxu0 0.0
    %474 = vmatprep.subr.mxu0 0.0
    %475 = vmatpush1.msra.mxu0 0.0
    %476 = vmatprep.subr.mxu0 0.0
    %477 = vmatpush1.msra.mxu0 0.0
    %478 = vmatprep.subr.mxu0 0.0
    %479 = vmatpush1.msra.mxu0 0.0
    %480 = vmatprep.subr.mxu0 0.0
    %481 = vmatpush1.msra.mxu0 0.0
    %482 = vmatprep.subr.mxu0 0.0
    %483 = vmatpush1.msra.mxu0 0.0
    %484 = vmatprep.subr.mxu0 0.0
    %485 = vmatpush1.msra.mxu0 0.0
    %486 = vmatprep.subr.mxu0 0.0
    %487 = vmatpush1.msra.mxu0 0.0
    %488 = vmatprep.subr.mxu0 0.0
    %489 = vmatpush1.msra.mxu0 0.0
    %490 = vmatprep.subr.mxu0 0.0
    %491 = vmatpush1.msra.mxu0 0.0
    %492 = vmatprep.subr.mxu0 0.0
    %493 = vmatpush1.msra.mxu0 0.0
    %494 = vmatprep.subr.mxu0 0.0
    %495 = vmatpush1.msra.mxu0 0.0
    %496 = vmatprep.subr.mxu0 0.0
    %497 = vmatpush1.msra.mxu0 0.0
    %498 = vmatprep.subr.mxu0 0.0
    %499 = vmatpush1.msra.mxu0 0.0
    %500 = vmatprep.subr.mxu0 0.0
    %501 = vmatpush1.msra.mxu0 0.0
    %502 = vmatprep.subr.mxu0 0.0
    %503 = vmatpush1.msra.mxu0 0.0
    %504 = vmatprep.subr.mxu0 0.0
    %505 = vmatpush1.msra.mxu0 0.0
    %506 = vmatprep.subr.mxu0 0.0
    %507 = vmatpush1.msra.mxu0 0.0
    %508 = vmatprep.subr.mxu0 0.0
    %509 = vmatpush1.msra.mxu0 0.0
    %510 = vmatprep.subr.mxu0 0.0
    %511 = vmatpush1.msra.mxu0 0.0
    %512 = vmatprep.subr.mxu0 0.0
    %513 = vmatpush1.msra.mxu0 0.0
    %514 = vmatprep.subr.mxu0 0.0
    %515 = vmatpush1.msra.mxu0 0.0
    %516 = vmatprep.subr.mxu0 0.0
    %517 = vmatpush1.msra.mxu0 0.0
    %518 = vmatprep.subr.mxu0 0.0
    %519 = vmatpush1.msra.mxu0 0.0
    %520 = vmatprep.subr.mxu0 0.0
    %521 = vmatpush1.msra.mxu0 0.0
    %522 = vmatprep.subr.mxu0 0.0
    %523 = vmatpush1.msra.mxu0 0.0
    %524 = vmatprep.subr.mxu0 0.0
    %525 = vmatpush1.msra.mxu0 0.0
    %526 = vmatprep.mubr.f32.mxu0 0.0
    %527 = vmatmul.mubr.f32.gmra.mrb[0].mxu0 %v457
    %v528 = vpop.f32.mrb[0].mxu0
    %v529 = vadd.f32 %v454, %v528
    %v530 = vpop.f32.mrb[0].mxu0
    %531 = vmatprep.mubr.f32.mxu0 0.0
    %532 = vmatmul.mubr.f32.gmra.mrb[0].mxu0 %v460
    %v533 = vpop.f32.mrb[0].mxu0
    %v534 = vadd.f32 %v454, %v533
    %v535 = vpop.f32.mrb[0].mxu0
    %536 = vdwg.mxu0
    %v537 = vld [vmem:[#allocation13] sm:$0xff]
    %v538 = vld [vmem:[#allocation13 + $0x8] sm:$0xff]
    %v539 = vld [vmem:[#allocation13 + $0x10] sm:$0xff]
    %v540 = vld [vmem:[#allocation13 + $0x18] sm:$0xff]
    %v541 = vld [vmem:[%s13] sm:$0x1]
    %v543 = vlaneseq
    %v544 = vshrl.u32 %v543, 7
    %v545 = vsub.s32 0, %v544
    %v546 = vrot.slane %v541, %v545
    %548 = vmatprep.subr.mxu0 0.0
    %549 = vmatpush1.msra.mxu0 %v537
    %550 = vmatprep.subr.mxu0 0.0
    %551 = vmatpush1.msra.mxu0 %v538
    %552 = vmatprep.subr.mxu0 0.0
    %553 = vmatpush1.msra.mxu0 %v539
    %554 = vmatprep.subr.mxu0 0.0
    %555 = vmatpush1.msra.mxu0 %v540
    %556 = vmatprep.subr.mxu0 0.0
    %557 = vmatpush1.msra.mxu0 0.0
    %558 = vmatprep.subr.mxu0 0.0
    %559 = vmatpush1.msra.mxu0 0.0
    %560 = vmatprep.subr.mxu0 0.0
    %561 = vmatpush1.msra.mxu0 0.0
    %562 = vmatprep.subr.mxu0 0.0
    %563 = vmatpush1.msra.mxu0 0.0
    %564 = vmatprep.subr.mxu0 0.0
    %565 = vmatpush1.msra.mxu0 0.0
    %566 = vmatprep.subr.mxu0 0.0
    %567 = vmatpush1.msra.mxu0 0.0
    %568 = vmatprep.subr.mxu0 0.0
    %569 = vmatpush1.msra.mxu0 0.0
    %570 = vmatprep.subr.mxu0 0.0
    %571 = vmatpush1.msra.mxu0 0.0
    %572 = vmatprep.subr.mxu0 0.0
    %573 = vmatpush1.msra.mxu0 0.0
    %574 = vmatprep.subr.mxu0 0.0
    %575 = vmatpush1.msra.mxu0 0.0
    %576 = vmatprep.subr.mxu0 0.0
    %577 = vmatpush1.msra.mxu0 0.0
    %578 = vmatprep.subr.mxu0 0.0
    %579 = vmatpush1.msra.mxu0 0.0
    %580 = vmatprep.subr.mxu0 0.0
    %581 = vmatpush1.msra.mxu0 0.0
    %582 = vmatprep.subr.mxu0 0.0
    %583 = vmatpush1.msra.mxu0 0.0
    %584 = vmatprep.subr.mxu0 0.0
    %585 = vmatpush1.msra.mxu0 0.0
    %586 = vmatprep.subr.mxu0 0.0
    %587 = vmatpush1.msra.mxu0 0.0
    %588 = vmatprep.subr.mxu0 0.0
    %589 = vmatpush1.msra.mxu0 0.0
    %590 = vmatprep.subr.mxu0 0.0
    %591 = vmatpush1.msra.mxu0 0.0
    %592 = vmatprep.subr.mxu0 0.0
    %593 = vmatpush1.msra.mxu0 0.0
    %594 = vmatprep.subr.mxu0 0.0
    %595 = vmatpush1.msra.mxu0 0.0
    %596 = vmatprep.subr.mxu0 0.0
    %597 = vmatpush1.msra.mxu0 0.0
    %598 = vmatprep.subr.mxu0 0.0
    %599 = vmatpush1.msra.mxu0 0.0
    %600 = vmatprep.subr.mxu0 0.0
    %601 = vmatpush1.msra.mxu0 0.0
    %602 = vmatprep.subr.mxu0 0.0
    %603 = vmatpush1.msra.mxu0 0.0
    %604 = vmatprep.subr.mxu0 0.0
    %605 = vmatpush1.msra.mxu0 0.0
    %606 = vmatprep.subr.mxu0 0.0
    %607 = vmatpush1.msra.mxu0 0.0
    %608 = vmatprep.subr.mxu0 0.0
    %609 = vmatpush1.msra.mxu0 0.0
    %610 = vmatprep.subr.mxu0 0.0
    %611 = vmatpush1.msra.mxu0 0.0
    %612 = vmatprep.mubr.f32.mxu0 0.0
    %613 = vmatmul.mubr.f32.gmra.mrb[0].mxu0 %v373
    %v614 = vpop.f32.mrb[0].mxu0
    %v615 = vadd.f32 %v546, %v614
    %v616 = vpop.f32.mrb[0].mxu0
    %617 = vdwg.mxu0
    %v618 = vmul.f32 %v261, 0.35355338
    %v619 = vmul.f32 %v266, 0.35355338
    %622 = vrot.lane.b32.xlu0 %v618, 120
    %v623 = vpop.permute.xlu0 %622
    %624 = vrot.lane.b32.xlu0 %v619, 120
    %v625 = vpop.permute.xlu0 %624
    %628 = vrot.lane.b32.xlu0 %v618, 112
    %v629 = vpop.permute.xlu0 %628
    %630 = vrot.lane.b32.xlu0 %v619, 112
    %v631 = vpop.permute.xlu0 %630
    %634 = vrot.lane.b32.xlu0 %v618, 104
    %v635 = vpop.permute.xlu0 %634
    %636 = vrot.lane.b32.xlu0 %v619, 104
    %v637 = vpop.permute.xlu0 %636
    %642 = vrot.lane.b32.xlu0 %v353, 120
    %v643 = vpop.permute.xlu0 %642
    %644 = vrot.lane.b32.xlu0 %v358, 120
    %v645 = vpop.permute.xlu0 %644
    %646 = vrot.lane.b32.xlu0 %v353, 112
    %v647 = vpop.permute.xlu0 %646
    %648 = vrot.lane.b32.xlu0 %v358, 112
    %v649 = vpop.permute.xlu0 %648
    %650 = vrot.lane.b32.xlu0 %v353, 104
    %v651 = vpop.permute.xlu0 %650
    %652 = vrot.lane.b32.xlu0 %v358, 104
    %v653 = vpop.permute.xlu0 %652
    %655 = vrot.lane.b32.xlu0 %v442, 120
    %v656 = vpop.permute.xlu0 %655
    %658 = vrot.lane.b32.xlu0 %v442, 112
    %v659 = vpop.permute.xlu0 %658
    %661 = vrot.lane.b32.xlu0 %v442, 104
    %v662 = vpop.permute.xlu0 %661
    %666 = vrot.lane.b32.xlu0 %v529, 120
    %v667 = vpop.permute.xlu0 %666
    %668 = vrot.lane.b32.xlu0 %v534, 120
    %v669 = vpop.permute.xlu0 %668
    %672 = vrot.lane.b32.xlu0 %v529, 112
    %v673 = vpop.permute.xlu0 %672
    %674 = vrot.lane.b32.xlu0 %v534, 112
    %v675 = vpop.permute.xlu0 %674
    %678 = vrot.lane.b32.xlu0 %v529, 104
    %v679 = vpop.permute.xlu0 %678
    %680 = vrot.lane.b32.xlu0 %v534, 104
    %v681 = vpop.permute.xlu0 %680
    %685 = vrot.lane.b32.xlu0 %v615, 120
    %v686 = vpop.permute.xlu0 %685
    %687 = vrot.lane.b32.xlu0 %v615, 112
    %v688 = vpop.permute.xlu0 %687
    %689 = vrot.lane.b32.xlu0 %v615, 104
    %v690 = vpop.permute.xlu0 %689
    %vm691 = vcmask 64512
    %v692 = vsel %vm691, %v618, 0
    %v694 = vsel %vm691, %v353, 0
    %696 = vmatprep.subr.mxu0 0.0
    %697 = vmatpush1.xpose.msra.mxu0 %v694
    %698 = vmatprep.subr.mxu0 0.0
    %699 = vmatpush1.xpose.msra.mxu0 0.0
    %700 = vmatprep.subr.mxu0 0.0
    %701 = vmatpush1.xpose.msra.mxu0 0.0
    %702 = vmatprep.subr.mxu0 0.0
    %703 = vmatpush1.xpose.msra.mxu0 0.0
    %704 = vmatprep.subr.mxu0 0.0
    %705 = vmatpush1.xpose.msra.mxu0 0.0
    %706 = vmatprep.subr.mxu0 0.0
    %707 = vmatpush1.xpose.msra.mxu0 0.0
    %708 = vmatprep.subr.mxu0 0.0
    %709 = vmatpush1.xpose.msra.mxu0 0.0
    %710 = vmatprep.subr.mxu0 0.0
    %711 = vmatpush1.xpose.msra.mxu0 0.0
    %712 = vmatprep.subr.mxu0 0.0
    %713 = vmatpush1.xpose.msra.mxu0 0.0
    %714 = vmatprep.subr.mxu0 0.0
    %715 = vmatpush1.xpose.msra.mxu0 0.0
    %716 = vmatprep.subr.mxu0 0.0
    %717 = vmatpush1.xpose.msra.mxu0 0.0
    %718 = vmatprep.subr.mxu0 0.0
    %719 = vmatpush1.xpose.msra.mxu0 0.0
    %720 = vmatprep.subr.mxu0 0.0
    %721 = vmatpush1.xpose.msra.mxu0 0.0
    %722 = vmatprep.subr.mxu0 0.0
    %723 = vmatpush1.xpose.msra.mxu0 0.0
    %724 = vmatprep.subr.mxu0 0.0
    %725 = vmatpush1.xpose.msra.mxu0 0.0
    %726 = vmatprep.subr.mxu0 0.0
    %727 = vmatpush1.xpose.msra.mxu0 0.0
    %728 = vmatprep.subr.mxu0 0.0
    %729 = vmatpush1.xpose.msra.mxu0 0.0
    %730 = vmatprep.subr.mxu0 0.0
    %731 = vmatpush1.xpose.msra.mxu0 0.0
    %732 = vmatprep.subr.mxu0 0.0
    %733 = vmatpush1.xpose.msra.mxu0 0.0
    %734 = vmatprep.subr.mxu0 0.0
    %735 = vmatpush1.xpose.msra.mxu0 0.0
    %736 = vmatprep.subr.mxu0 0.0
    %737 = vmatpush1.xpose.msra.mxu0 0.0
    %738 = vmatprep.subr.mxu0 0.0
    %739 = vmatpush1.xpose.msra.mxu0 0.0
    %740 = vmatprep.subr.mxu0 0.0
    %741 = vmatpush1.xpose.msra.mxu0 0.0
    %742 = vmatprep.subr.mxu0 0.0
    %743 = vmatpush1.xpose.msra.mxu0 0.0
    %744 = vmatprep.subr.mxu0 0.0
    %745 = vmatpush1.xpose.msra.mxu0 0.0
    %746 = vmatprep.subr.mxu0 0.0
    %747 = vmatpush1.xpose.msra.mxu0 0.0
    %748 = vmatprep.subr.mxu0 0.0
    %749 = vmatpush1.xpose.msra.mxu0 0.0
    %750 = vmatprep.subr.mxu0 0.0
    %751 = vmatpush1.xpose.msra.mxu0 0.0
    %752 = vmatprep.subr.mxu0 0.0
    %753 = vmatpush1.xpose.msra.mxu0 0.0
    %754 = vmatprep.subr.mxu0 0.0
    %755 = vmatpush1.xpose.msra.mxu0 0.0
    %756 = vmatprep.subr.mxu0 0.0
    %757 = vmatpush1.xpose.msra.mxu0 0.0
    %758 = vmatprep.subr.mxu0 0.0
    %759 = vmatpush1.xpose.msra.mxu0 0.0
    %760 = vmatprep.mubr.f32.mxu0 0.0
    %761 = vmatmul.mubr.f32.gmra.mrb[0].mxu0 %v692
    %v762 = vpop.f32.mrb[0].mxu0
    %v763 = vadd.f32 0.0, %v762
    %v764 = vpop.f32.mrb[0].mxu0
    %765 = vdwg.mxu0
    %v766 = vsel %vm691, %v623, 0
    %v768 = vsel %vm691, %v643, 0
    %770 = vmatprep.subr.mxu0 0.0
    %771 = vmatpush1.xpose.msra.mxu0 %v768
    %772 = vmatprep.subr.mxu0 0.0
    %773 = vmatpush1.xpose.msra.mxu0 0.0
    %774 = vmatprep.subr.mxu0 0.0
    %775 = vmatpush1.xpose.msra.mxu0 0.0
    %776 = vmatprep.subr.mxu0 0.0
    %777 = vmatpush1.xpose.msra.mxu0 0.0
    %778 = vmatprep.subr.mxu0 0.0
    %779 = vmatpush1.xpose.msra.mxu0 0.0
    %780 = vmatprep.subr.mxu0 0.0
    %781 = vmatpush1.xpose.msra.mxu0 0.0
    %782 = vmatprep.subr.mxu0 0.0
    %783 = vmatpush1.xpose.msra.mxu0 0.0
    %784 = vmatprep.subr.mxu0 0.0
    %785 = vmatpush1.xpose.msra.mxu0 0.0
    %786 = vmatprep.subr.mxu0 0.0
    %787 = vmatpush1.xpose.msra.mxu0 0.0
    %788 = vmatprep.subr.mxu0 0.0
    %789 = vmatpush1.xpose.msra.mxu0 0.0
    %790 = vmatprep.subr.mxu0 0.0
    %791 = vmatpush1.xpose.msra.mxu0 0.0
    %792 = vmatprep.subr.mxu0 0.0
    %793 = vmatpush1.xpose.msra.mxu0 0.0
    %794 = vmatprep.subr.mxu0 0.0
    %795 = vmatpush1.xpose.msra.mxu0 0.0
    %796 = vmatprep.subr.mxu0 0.0
    %797 = vmatpush1.xpose.msra.mxu0 0.0
    %798 = vmatprep.subr.mxu0 0.0
    %799 = vmatpush1.xpose.msra.mxu0 0.0
    %800 = vmatprep.subr.mxu0 0.0
    %801 = vmatpush1.xpose.msra.mxu0 0.0
    %802 = vmatprep.subr.mxu0 0.0
    %803 = vmatpush1.xpose.msra.mxu0 0.0
    %804 = vmatprep.subr.mxu0 0.0
    %805 = vmatpush1.xpose.msra.mxu0 0.0
    %806 = vmatprep.subr.mxu0 0.0
    %807 = vmatpush1.xpose.msra.mxu0 0.0
    %808 = vmatprep.subr.mxu0 0.0
    %809 = vmatpush1.xpose.msra.mxu0 0.0
    %810 = vmatprep.subr.mxu0 0.0
    %811 = vmatpush1.xpose.msra.mxu0 0.0
    %812 = vmatprep.subr.mxu0 0.0
    %813 = vmatpush1.xpose.msra.mxu0 0.0
    %814 = vmatprep.subr.mxu0 0.0
    %815 = vmatpush1.xpose.msra.mxu0 0.0
    %816 = vmatprep.subr.mxu0 0.0
    %817 = vmatpush1.xpose.msra.mxu0 0.0
    %818 = vmatprep.subr.mxu0 0.0
    %819 = vmatpush1.xpose.msra.mxu0 0.0
    %820 = vmatprep.subr.mxu0 0.0
    %821 = vmatpush1.xpose.msra.mxu0 0.0
    %822 = vmatprep.subr.mxu0 0.0
    %823 = vmatpush1.xpose.msra.mxu0 0.0
    %824 = vmatprep.subr.mxu0 0.0
    %825 = vmatpush1.xpose.msra.mxu0 0.0
    %826 = vmatprep.subr.mxu0 0.0
    %827 = vmatpush1.xpose.msra.mxu0 0.0
    %828 = vmatprep.subr.mxu0 0.0
    %829 = vmatpush1.xpose.msra.mxu0 0.0
    %830 = vmatprep.subr.mxu0 0.0
    %831 = vmatpush1.xpose.msra.mxu0 0.0
    %832 = vmatprep.subr.mxu0 0.0
    %833 = vmatpush1.xpose.msra.mxu0 0.0
    %834 = vmatprep.mubr.f32.mxu0 0.0
    %835 = vmatmul.mubr.f32.gmra.mrb[0].mxu0 %v766
    %v836 = vpop.f32.mrb[0].mxu0
    %v837 = vadd.f32 0.0, %v836
    %v838 = vpop.f32.mrb[0].mxu0
    %839 = vdwg.mxu0
    %v840 = vsel %vm691, %v629, 0
    %v842 = vsel %vm691, %v647, 0
    %844 = vmatprep.subr.mxu0 0.0
    %845 = vmatpush1.xpose.msra.mxu0 %v842
    %846 = vmatprep.subr.mxu0 0.0
    %847 = vmatpush1.xpose.msra.mxu0 0.0
    %848 = vmatprep.subr.mxu0 0.0
    %849 = vmatpush1.xpose.msra.mxu0 0.0
    %850 = vmatprep.subr.mxu0 0.0
    %851 = vmatpush1.xpose.msra.mxu0 0.0
    %852 = vmatprep.subr.mxu0 0.0
    %853 = vmatpush1.xpose.msra.mxu0 0.0
    %854 = vmatprep.subr.mxu0 0.0
    %855 = vmatpush1.xpose.msra.mxu0 0.0
    %856 = vmatprep.subr.mxu0 0.0
    %857 = vmatpush1.xpose.msra.mxu0 0.0
    %858 = vmatprep.subr.mxu0 0.0
    %859 = vmatpush1.xpose.msra.mxu0 0.0
    %860 = vmatprep.subr.mxu0 0.0
    %861 = vmatpush1.xpose.msra.mxu0 0.0
    %862 = vmatprep.subr.mxu0 0.0
    %863 = vmatpush1.xpose.msra.mxu0 0.0
    %864 = vmatprep.subr.mxu0 0.0
    %865 = vmatpush1.xpose.msra.mxu0 0.0
    %866 = vmatprep.subr.mxu0 0.0
    %867 = vmatpush1.xpose.msra.mxu0 0.0
    %868 = vmatprep.subr.mxu0 0.0
    %869 = vmatpush1.xpose.msra.mxu0 0.0
    %870 = vmatprep.subr.mxu0 0.0
    %871 = vmatpush1.xpose.msra.mxu0 0.0
    %872 = vmatprep.subr.mxu0 0.0
    %873 = vmatpush1.xpose.msra.mxu0 0.0
    %874 = vmatprep.subr.mxu0 0.0
    %875 = vmatpush1.xpose.msra.mxu0 0.0
    %876 = vmatprep.subr.mxu0 0.0
    %877 = vmatpush1.xpose.msra.mxu0 0.0
    %878 = vmatprep.subr.mxu0 0.0
    %879 = vmatpush1.xpose.msra.mxu0 0.0
    %880 = vmatprep.subr.mxu0 0.0
    %881 = vmatpush1.xpose.msra.mxu0 0.0
    %882 = vmatprep.subr.mxu0 0.0
    %883 = vmatpush1.xpose.msra.mxu0 0.0
    %884 = vmatprep.subr.mxu0 0.0
    %885 = vmatpush1.xpose.msra.mxu0 0.0
    %886 = vmatprep.subr.mxu0 0.0
    %887 = vmatpush1.xpose.msra.mxu0 0.0
    %888 = vmatprep.subr.mxu0 0.0
    %889 = vmatpush1.xpose.msra.mxu0 0.0
    %890 = vmatprep.subr.mxu0 0.0
    %891 = vmatpush1.xpose.msra.mxu0 0.0
    %892 = vmatprep.subr.mxu0 0.0
    %893 = vmatpush1.xpose.msra.mxu0 0.0
    %894 = vmatprep.subr.mxu0 0.0
    %895 = vmatpush1.xpose.msra.mxu0 0.0
    %896 = vmatprep.subr.mxu0 0.0
    %897 = vmatpush1.xpose.msra.mxu0 0.0
    %898 = vmatprep.subr.mxu0 0.0
    %899 = vmatpush1.xpose.msra.mxu0 0.0
    %900 = vmatprep.subr.mxu0 0.0
    %901 = vmatpush1.xpose.msra.mxu0 0.0
    %902 = vmatprep.subr.mxu0 0.0
    %903 = vmatpush1.xpose.msra.mxu0 0.0
    %904 = vmatprep.subr.mxu0 0.0
    %905 = vmatpush1.xpose.msra.mxu0 0.0
    %906 = vmatprep.subr.mxu0 0.0
    %907 = vmatpush1.xpose.msra.mxu0 0.0
    %908 = vmatprep.mubr.f32.mxu0 0.0
    %909 = vmatmul.mubr.f32.gmra.mrb[0].mxu0 %v840
    %v910 = vpop.f32.mrb[0].mxu0
    %v911 = vadd.f32 0.0, %v910
    %v912 = vpop.f32.mrb[0].mxu0
    %913 = vdwg.mxu0
    %v914 = vsel %vm691, %v635, 0
    %v916 = vsel %vm691, %v651, 0
    %918 = vmatprep.subr.mxu0 0.0
    %919 = vmatpush1.xpose.msra.mxu0 %v916
    %920 = vmatprep.subr.mxu0 0.0
    %921 = vmatpush1.xpose.msra.mxu0 0.0
    %922 = vmatprep.subr.mxu0 0.0
    %923 = vmatpush1.xpose.msra.mxu0 0.0
    %924 = vmatprep.subr.mxu0 0.0
    %925 = vmatpush1.xpose.msra.mxu0 0.0
    %926 = vmatprep.subr.mxu0 0.0
    %927 = vmatpush1.xpose.msra.mxu0 0.0
    %928 = vmatprep.subr.mxu0 0.0
    %929 = vmatpush1.xpose.msra.mxu0 0.0
    %930 = vmatprep.subr.mxu0 0.0
    %931 = vmatpush1.xpose.msra.mxu0 0.0
    %932 = vmatprep.subr.mxu0 0.0
    %933 = vmatpush1.xpose.msra.mxu0 0.0
    %934 = vmatprep.subr.mxu0 0.0
    %935 = vmatpush1.xpose.msra.mxu0 0.0
    %936 = vmatprep.subr.mxu0 0.0
    %937 = vmatpush1.xpose.msra.mxu0 0.0
    %938 = vmatprep.subr.mxu0 0.0
    %939 = vmatpush1.xpose.msra.mxu0 0.0
    %940 = vmatprep.subr.mxu0 0.0
    %941 = vmatpush1.xpose.msra.mxu0 0.0
    %942 = vmatprep.subr.mxu0 0.0
    %943 = vmatpush1.xpose.msra.mxu0 0.0
    %944 = vmatprep.subr.mxu0 0.0
    %945 = vmatpush1.xpose.msra.mxu0 0.0
    %946 = vmatprep.subr.mxu0 0.0
    %947 = vmatpush1.xpose.msra.mxu0 0.0
    %948 = vmatprep.subr.mxu0 0.0
    %949 = vmatpush1.xpose.msra.mxu0 0.0
    %950 = vmatprep.subr.mxu0 0.0
    %951 = vmatpush1.xpose.msra.mxu0 0.0
    %952 = vmatprep.subr.mxu0 0.0
    %953 = vmatpush1.xpose.msra.mxu0 0.0
    %954 = vmatprep.subr.mxu0 0.0
    %955 = vmatpush1.xpose.msra.mxu0 0.0
    %956 = vmatprep.subr.mxu0 0.0
    %957 = vmatpush1.xpose.msra.mxu0 0.0
    %958 = vmatprep.subr.mxu0 0.0
    %959 = vmatpush1.xpose.msra.mxu0 0.0
    %960 = vmatprep.subr.mxu0 0.0
    %961 = vmatpush1.xpose.msra.mxu0 0.0
    %962 = vmatprep.subr.mxu0 0.0
    %963 = vmatpush1.xpose.msra.mxu0 0.0
    %964 = vmatprep.subr.mxu0 0.0
    %965 = vmatpush1.xpose.msra.mxu0 0.0
    %966 = vmatprep.subr.mxu0 0.0
    %967 = vmatpush1.xpose.msra.mxu0 0.0
    %968 = vmatprep.subr.mxu0 0.0
    %969 = vmatpush1.xpose.msra.mxu0 0.0
    %970 = vmatprep.subr.mxu0 0.0
    %971 = vmatpush1.xpose.msra.mxu0 0.0
    %972 = vmatprep.subr.mxu0 0.0
    %973 = vmatpush1.xpose.msra.mxu0 0.0
    %974 = vmatprep.subr.mxu0 0.0
    %975 = vmatpush1.xpose.msra.mxu0 0.0
    %976 = vmatprep.subr.mxu0 0.0
    %977 = vmatpush1.xpose.msra.mxu0 0.0
    %978 = vmatprep.subr.mxu0 0.0
    %979 = vmatpush1.xpose.msra.mxu0 0.0
    %980 = vmatprep.subr.mxu0 0.0
    %981 = vmatpush1.xpose.msra.mxu0 0.0
    %982 = vmatprep.mubr.f32.mxu0 0.0
    %983 = vmatmul.mubr.f32.gmra.mrb[0].mxu0 %v914
    %v984 = vpop.f32.mrb[0].mxu0
    %v985 = vadd.f32 0.0, %v984
    %v986 = vpop.f32.mrb[0].mxu0
    %987 = vdwg.mxu0
    %v988 = vlaneseq
    %v989 = vshrl.u32 %v988, 7
    %v990 = vsub.s32 0, %v989
    %v991 = vrot.slane %v442, %v990
    %v992 = vmul.f32 %v618, %v991
    %v993 = vsel %vm691, %v992, 0.0
    %994 = vadd.xlane.f32.xlu0 %v993
    %v995 = vpop.xlane.xlu0 %994
    %v996 = vlaneseq
    %v997 = vshrl.u32 %v996, 7
    %v998 = vsub.s32 0, %v997
    %v999 = vrot.slane %v656, %v998
    %v1000 = vmul.f32 %v623, %v999
    %v1001 = vsel %vm691, %v1000, 0.0
    %1002 = vadd.xlane.f32.xlu0 %v1001
    %v1003 = vpop.xlane.xlu0 %1002
    %v1004 = vlaneseq
    %v1005 = vshrl.u32 %v1004, 7
    %v1006 = vsub.s32 0, %v1005
    %v1007 = vrot.slane %v659, %v1006
    %v1008 = vmul.f32 %v629, %v1007
    %v1009 = vsel %vm691, %v1008, 0.0
    %1010 = vadd.xlane.f32.xlu0 %v1009
    %v1011 = vpop.xlane.xlu0 %1010
    %v1012 = vlaneseq
    %v1013 = vshrl.u32 %v1012, 7
    %v1014 = vsub.s32 0, %v1013
    %v1015 = vrot.slane %v662, %v1014
    %v1016 = vmul.f32 %v635, %v1015
    %v1017 = vsel %vm691, %v1016, 0.0
    %1018 = vadd.xlane.f32.xlu0 %v1017
    %v1019 = vpop.xlane.xlu0 %1018
    %v1020 = vsel %vm691, %v763, -inf
    %1021 = vmax.xlane.f32.xlu0 %v1020
    %v1022 = vpop.xlane.xlu0 %1021
    %v1023 = vsel %vm691, %v837, -inf
    %1024 = vmax.xlane.f32.xlu0 %v1023
    %v1025 = vpop.xlane.xlu0 %1024
    %v1026 = vsel %vm691, %v911, -inf
    %1027 = vmax.xlane.f32.xlu0 %v1026
    %v1028 = vpop.xlane.xlu0 %1027
    %v1029 = vsel %vm691, %v985, -inf
    %1030 = vmax.xlane.f32.xlu0 %v1029
    %v1031 = vpop.xlane.xlu0 %1030
    %v1032 = vmax.f32 %v1022, %v995
    %v1033 = vmax.f32 %v1025, %v1003
    %v1034 = vmax.f32 %v1028, %v1011
    %v1035 = vmax.f32 %v1031, %v1019
    %1037 = vset.pattern.permute.xlu0 0
    %1038 = vperm.xlu0 %1037, %v1032
    %v1039 = vpop.permute.xlu0 %1038
    %1042 = vset.pattern.permute.xlu0 0
    %1043 = vperm.xlu0 %1042, %v1033
    %v1044 = vpop.permute.xlu0 %1043
    %1047 = vset.pattern.permute.xlu0 0
    %1048 = vperm.xlu0 %1047, %v1034
    %v1049 = vpop.permute.xlu0 %1048
    %1052 = vset.pattern.permute.xlu0 0
    %1053 = vperm.xlu0 %1052, %v1035
    %v1054 = vpop.permute.xlu0 %1053
    %v1056 = vsub.f32 %v763, %v1039
    %v1057 = vsub.f32 %v837, %v1044
    %v1058 = vsub.f32 %v911, %v1049
    %v1059 = vsub.f32 %v985, %v1054
    %v1060 = vmul.f32 %v1056, 1.442695
    %v1061 = vpow.pop %v1060
    %v1062 = vmul.f32 %v1057, 1.442695
    %v1063 = vpow.pop %v1062
    %v1064 = vmul.f32 %v1058, 1.442695
    %v1065 = vpow.pop %v1064
    %v1066 = vmul.f32 %v1059, 1.442695
    %v1067 = vpow.pop %v1066
    %v1068 = vsub.f32 %v995, %v1032
    %v1069 = vsub.f32 %v1003, %v1033
    %v1070 = vsub.f32 %v1011, %v1034
    %v1071 = vsub.f32 %v1019, %v1035
    %v1072 = vmul.f32 %v1068, 1.442695
    %v1073 = vpow.pop %v1072
    %v1074 = vmul.f32 %v1069, 1.442695
    %v1075 = vpow.pop %v1074
    %v1076 = vmul.f32 %v1070, 1.442695
    %v1077 = vpow.pop %v1076
    %v1078 = vmul.f32 %v1071, 1.442695
    %v1079 = vpow.pop %v1078
    %v1080 = vsel %vm691, %v1061, 0.0
    %1081 = vadd.xlane.f32.xlu0 %v1080
    %v1082 = vpop.xlane.xlu0 %1081
    %v1083 = vsel %vm691, %v1063, 0.0
    %1084 = vadd.xlane.f32.xlu0 %v1083
    %v1085 = vpop.xlane.xlu0 %1084
    %v1086 = vsel %vm691, %v1065, 0.0
    %1087 = vadd.xlane.f32.xlu0 %v1086
    %v1088 = vpop.xlane.xlu0 %1087
    %v1089 = vsel %vm691, %v1067, 0.0
    %1090 = vadd.xlane.f32.xlu0 %v1089
    %v1091 = vpop.xlane.xlu0 %1090
    %v1092 = vadd.f32 %v1073, 0.0
    %v1093 = vadd.f32 %v1075, 0.0
    %v1094 = vadd.f32 %v1077, 0.0
    %v1095 = vadd.f32 %v1079, 0.0
    %v1096 = vadd.f32 %v1082, %v1092
    %v1097 = vadd.f32 %v1085, %v1093
    %v1098 = vadd.f32 %v1088, %v1094
    %v1099 = vadd.f32 %v1091, %v1095
    %v1100 = vrcp.pop %v1096
    %v1101 = vrcp.pop %v1097
    %v1102 = vrcp.pop %v1098
    %v1103 = vrcp.pop %v1099
    %vm1104 = vcmask 7168
    %v1106 = vsel %vm1104, %v1073, 0
    %vm1108 = vcmask 1040384
    %v1109 = vsel %vm1108, %v615, 0
    %1111 = vmatprep.subr.mxu0 0.0
    %1112 = vmatpush1.msra.mxu0 %v1109
    %1113 = vmatprep.subr.mxu0 0.0
    %1114 = vmatpush1.msra.mxu0 0.0
    %1115 = vmatprep.subr.mxu0 0.0
    %1116 = vmatpush1.msra.mxu0 0.0
    %1117 = vmatprep.subr.mxu0 0.0
    %1118 = vmatpush1.msra.mxu0 0.0
    %1119 = vmatprep.subr.mxu0 0.0
    %1120 = vmatpush1.msra.mxu0 0.0
    %1121 = vmatprep.subr.mxu0 0.0
    %1122 = vmatpush1.msra.mxu0 0.0
    %1123 = vmatprep.subr.mxu0 0.0
    %1124 = vmatpush1.msra.mxu0 0.0
    %1125 = vmatprep.subr.mxu0 0.0
    %1126 = vmatpush1.msra.mxu0 0.0
    %1127 = vmatprep.subr.mxu0 0.0
    %1128 = vmatpush1.msra.mxu0 0.0
    %1129 = vmatprep.subr.mxu0 0.0
    %1130 = vmatpush1.msra.mxu0 0.0
    %1131 = vmatprep.subr.mxu0 0.0
    %1132 = vmatpush1.msra.mxu0 0.0
    %1133 = vmatprep.subr.mxu0 0.0
    %1134 = vmatpush1.msra.mxu0 0.0
    %1135 = vmatprep.subr.mxu0 0.0
    %1136 = vmatpush1.msra.mxu0 0.0
    %1137 = vmatprep.subr.mxu0 0.0
    %1138 = vmatpush1.msra.mxu0 0.0
    %1139 = vmatprep.subr.mxu0 0.0
    %1140 = vmatpush1.msra.mxu0 0.0
    %1141 = vmatprep.subr.mxu0 0.0
    %1142 = vmatpush1.msra.mxu0 0.0
    %1143 = vmatprep.subr.mxu0 0.0
    %1144 = vmatpush1.msra.mxu0 0.0
    %1145 = vmatprep.subr.mxu0 0.0
    %1146 = vmatpush1.msra.mxu0 0.0
    %1147 = vmatprep.subr.mxu0 0.0
    %1148 = vmatpush1.msra.mxu0 0.0
    %1149 = vmatprep.subr.mxu0 0.0
    %1150 = vmatpush1.msra.mxu0 0.0
    %1151 = vmatprep.subr.mxu0 0.0
    %1152 = vmatpush1.msra.mxu0 0.0
    %1153 = vmatprep.subr.mxu0 0.0
    %1154 = vmatpush1.msra.mxu0 0.0
    %1155 = vmatprep.subr.mxu0 0.0
    %1156 = vmatpush1.msra.mxu0 0.0
    %1157 = vmatprep.subr.mxu0 0.0
    %1158 = vmatpush1.msra.mxu0 0.0
    %1159 = vmatprep.subr.mxu0 0.0
    %1160 = vmatpush1.msra.mxu0 0.0
    %1161 = vmatprep.subr.mxu0 0.0
    %1162 = vmatpush1.msra.mxu0 0.0
    %1163 = vmatprep.subr.mxu0 0.0
    %1164 = vmatpush1.msra.mxu0 0.0
    %1165 = vmatprep.subr.mxu0 0.0
    %1166 = vmatpush1.msra.mxu0 0.0
    %1167 = vmatprep.subr.mxu0 0.0
    %1168 = vmatpush1.msra.mxu0 0.0
    %1169 = vmatprep.subr.mxu0 0.0
    %1170 = vmatpush1.msra.mxu0 0.0
    %1171 = vmatprep.subr.mxu0 0.0
    %1172 = vmatpush1.msra.mxu0 0.0
    %1173 = vmatprep.subr.mxu0 0.0
    %1174 = vmatpush1.msra.mxu0 0.0
    %1175 = vmatprep.mubr.f32.mxu0 0.0
    %1176 = vmatmul.mubr.f32.gmra.mrb[0].mxu0 %v1106
    %v1177 = vpop.f32.mrb[0].mxu0
    %v1178 = vadd.f32 0.0, %v1177
    %v1179 = vpop.f32.mrb[0].mxu0
    %1180 = vdwg.mxu0
    %v1182 = vsel %vm1104, %v1075, 0
    %v1184 = vsel %vm1108, %v686, 0
    %1186 = vmatprep.subr.mxu0 0.0
    %1187 = vmatpush1.msra.mxu0 %v1184
    %1188 = vmatprep.subr.mxu0 0.0
    %1189 = vmatpush1.msra.mxu0 0.0
    %1190 = vmatprep.subr.mxu0 0.0
    %1191 = vmatpush1.msra.mxu0 0.0
    %1192 = vmatprep.subr.mxu0 0.0
    %1193 = vmatpush1.msra.mxu0 0.0
    %1194 = vmatprep.subr.mxu0 0.0
    %1195 = vmatpush1.msra.mxu0 0.0
    %1196 = vmatprep.subr.mxu0 0.0
    %1197 = vmatpush1.msra.mxu0 0.0
    %1198 = vmatprep.subr.mxu0 0.0
    %1199 = vmatpush1.msra.mxu0 0.0
    %1200 = vmatprep.subr.mxu0 0.0
    %1201 = vmatpush1.msra.mxu0 0.0
    %1202 = vmatprep.subr.mxu0 0.0
    %1203 = vmatpush1.msra.mxu0 0.0
    %1204 = vmatprep.subr.mxu0 0.0
    %1205 = vmatpush1.msra.mxu0 0.0
    %1206 = vmatprep.subr.mxu0 0.0
    %1207 = vmatpush1.msra.mxu0 0.0
    %1208 = vmatprep.subr.mxu0 0.0
    %1209 = vmatpush1.msra.mxu0 0.0
    %1210 = vmatprep.subr.mxu0 0.0
    %1211 = vmatpush1.msra.mxu0 0.0
    %1212 = vmatprep.subr.mxu0 0.0
    %1213 = vmatpush1.msra.mxu0 0.0
    %1214 = vmatprep.subr.mxu0 0.0
    %1215 = vmatpush1.msra.mxu0 0.0
    %1216 = vmatprep.subr.mxu0 0.0
    %1217 = vmatpush1.msra.mxu0 0.0
    %1218 = vmatprep.subr.mxu0 0.0
    %1219 = vmatpush1.msra.mxu0 0.0
    %1220 = vmatprep.subr.mxu0 0.0
    %1221 = vmatpush1.msra.mxu0 0.0
    %1222 = vmatprep.subr.mxu0 0.0
    %1223 = vmatpush1.msra.mxu0 0.0
    %1224 = vmatprep.subr.mxu0 0.0
    %1225 = vmatpush1.msra.mxu0 0.0
    %1226 = vmatprep.subr.mxu0 0.0
    %1227 = vmatpush1.msra.mxu0 0.0
    %1228 = vmatprep.subr.mxu0 0.0
    %1229 = vmatpush1.msra.mxu0 0.0
    %1230 = vmatprep.subr.mxu0 0.0
    %1231 = vmatpush1.msra.mxu0 0.0
    %1232 = vmatprep.subr.mxu0 0.0
    %1233 = vmatpush1.msra.mxu0 0.0
    %1234 = vmatprep.subr.mxu0 0.0
    %1235 = vmatpush1.msra.mxu0 0.0
    %1236 = vmatprep.subr.mxu0 0.0
    %1237 = vmatpush1.msra.mxu0 0.0
    %1238 = vmatprep.subr.mxu0 0.0
    %1239 = vmatpush1.msra.mxu0 0.0
    %1240 = vmatprep.subr.mxu0 0.0
    %1241 = vmatpush1.msra.mxu0 0.0
    %1242 = vmatprep.subr.mxu0 0.0
    %1243 = vmatpush1.msra.mxu0 0.0
    %1244 = vmatprep.subr.mxu0 0.0
    %1245 = vmatpush1.msra.mxu0 0.0
    %1246 = vmatprep.subr.mxu0 0.0
    %1247 = vmatpush1.msra.mxu0 0.0
    %1248 = vmatprep.subr.mxu0 0.0
    %1249 = vmatpush1.msra.mxu0 0.0
    %1250 = vmatprep.mubr.f32.mxu0 0.0
    %1251 = vmatmul.mubr.f32.gmra.mrb[0].mxu0 %v1182
    %v1252 = vpop.f32.mrb[0].mxu0
    %v1253 = vadd.f32 0.0, %v1252
    %v1254 = vpop.f32.mrb[0].mxu0
    %1255 = vdwg.mxu0
    %v1257 = vsel %vm1104, %v1077, 0
    %v1259 = vsel %vm1108, %v688, 0
    %1261 = vmatprep.subr.mxu0 0.0
    %1262 = vmatpush1.msra.mxu0 %v1259
    %1263 = vmatprep.subr.mxu0 0.0
    %1264 = vmatpush1.msra.mxu0 0.0
    %1265 = vmatprep.subr.mxu0 0.0
    %1266 = vmatpush1.msra.mxu0 0.0
    %1267 = vmatprep.subr.mxu0 0.0
    %1268 = vmatpush1.msra.mxu0 0.0
    %1269 = vmatprep.subr.mxu0 0.0
    %1270 = vmatpush1.msra.mxu0 0.0
    %1271 = vmatprep.subr.mxu0 0.0
    %1272 = vmatpush1.msra.mxu0 0.0
    %1273 = vmatprep.subr.mxu0 0.0
    %1274 = vmatpush1.msra.mxu0 0.0
    %1275 = vmatprep.subr.mxu0 0.0
    %1276 = vmatpush1.msra.mxu0 0.0
    %1277 = vmatprep.subr.mxu0 0.0
    %1278 = vmatpush1.msra.mxu0 0.0
    %1279 = vmatprep.subr.mxu0 0.0
    %1280 = vmatpush1.msra.mxu0 0.0
    %1281 = vmatprep.subr.mxu0 0.0
    %1282 = vmatpush1.msra.mxu0 0.0
    %1283 = vmatprep.subr.mxu0 0.0
    %1284 = vmatpush1.msra.mxu0 0.0
    %1285 = vmatprep.subr.mxu0 0.0
    %1286 = vmatpush1.msra.mxu0 0.0
    %1287 = vmatprep.subr.mxu0 0.0
    %1288 = vmatpush1.msra.mxu0 0.0
    %1289 = vmatprep.subr.mxu0 0.0
    %1290 = vmatpush1.msra.mxu0 0.0
    %1291 = vmatprep.subr.mxu0 0.0
    %1292 = vmatpush1.msra.mxu0 0.0
    %1293 = vmatprep.subr.mxu0 0.0
    %1294 = vmatpush1.msra.mxu0 0.0
    %1295 = vmatprep.subr.mxu0 0.0
    %1296 = vmatpush1.msra.mxu0 0.0
    %1297 = vmatprep.subr.mxu0 0.0
    %1298 = vmatpush1.msra.mxu0 0.0
    %1299 = vmatprep.subr.mxu0 0.0
    %1300 = vmatpush1.msra.mxu0 0.0
    %1301 = vmatprep.subr.mxu0 0.0
    %1302 = vmatpush1.msra.mxu0 0.0
    %1303 = vmatprep.subr.mxu0 0.0
    %1304 = vmatpush1.msra.mxu0 0.0
    %1305 = vmatprep.subr.mxu0 0.0
    %1306 = vmatpush1.msra.mxu0 0.0
    %1307 = vmatprep.subr.mxu0 0.0
    %1308 = vmatpush1.msra.mxu0 0.0
    %1309 = vmatprep.subr.mxu0 0.0
    %1310 = vmatpush1.msra.mxu0 0.0
    %1311 = vmatprep.subr.mxu0 0.0
    %1312 = vmatpush1.msra.mxu0 0.0
    %1313 = vmatprep.subr.mxu0 0.0
    %1314 = vmatpush1.msra.mxu0 0.0
    %1315 = vmatprep.subr.mxu0 0.0
    %1316 = vmatpush1.msra.mxu0 0.0
    %1317 = vmatprep.subr.mxu0 0.0
    %1318 = vmatpush1.msra.mxu0 0.0
    %1319 = vmatprep.subr.mxu0 0.0
    %1320 = vmatpush1.msra.mxu0 0.0
    %1321 = vmatprep.subr.mxu0 0.0
    %1322 = vmatpush1.msra.mxu0 0.0
    %1323 = vmatprep.subr.mxu0 0.0
    %1324 = vmatpush1.msra.mxu0 0.0
    %1325 = vmatprep.mubr.f32.mxu0 0.0
    %1326 = vmatmul.mubr.f32.gmra.mrb[0].mxu0 %v1257
    %v1327 = vpop.f32.mrb[0].mxu0
    %v1328 = vadd.f32 0.0, %v1327
    %v1329 = vpop.f32.mrb[0].mxu0
    %1330 = vdwg.mxu0
    %v1332 = vsel %vm1104, %v1079, 0
    %v1334 = vsel %vm1108, %v690, 0
    %1336 = vmatprep.subr.mxu0 0.0
    %1337 = vmatpush1.msra.mxu0 %v1334
    %1338 = vmatprep.subr.mxu0 0.0
    %1339 = vmatpush1.msra.mxu0 0.0
    %1340 = vmatprep.subr.mxu0 0.0
    %1341 = vmatpush1.msra.mxu0 0.0
    %1342 = vmatprep.subr.mxu0 0.0
    %1343 = vmatpush1.msra.mxu0 0.0
    %1344 = vmatprep.subr.mxu0 0.0
    %1345 = vmatpush1.msra.mxu0 0.0
    %1346 = vmatprep.subr.mxu0 0.0
    %1347 = vmatpush1.msra.mxu0 0.0
    %1348 = vmatprep.subr.mxu0 0.0
    %1349 = vmatpush1.msra.mxu0 0.0
    %1350 = vmatprep.subr.mxu0 0.0
    %1351 = vmatpush1.msra.mxu0 0.0
    %1352 = vmatprep.subr.mxu0 0.0
    %1353 = vmatpush1.msra.mxu0 0.0
    %1354 = vmatprep.subr.mxu0 0.0
    %1355 = vmatpush1.msra.mxu0 0.0
    %1356 = vmatprep.subr.mxu0 0.0
    %1357 = vmatpush1.msra.mxu0 0.0
    %1358 = vmatprep.subr.mxu0 0.0
    %1359 = vmatpush1.msra.mxu0 0.0
    %1360 = vmatprep.subr.mxu0 0.0
    %1361 = vmatpush1.msra.mxu0 0.0
    %1362 = vmatprep.subr.mxu0 0.0
    %1363 = vmatpush1.msra.mxu0 0.0
    %1364 = vmatprep.subr.mxu0 0.0
    %1365 = vmatpush1.msra.mxu0 0.0
    %1366 = vmatprep.subr.mxu0 0.0
    %1367 = vmatpush1.msra.mxu0 0.0
    %1368 = vmatprep.subr.mxu0 0.0
    %1369 = vmatpush1.msra.mxu0 0.0
    %1370 = vmatprep.subr.mxu0 0.0
    %1371 = vmatpush1.msra.mxu0 0.0
    %1372 = vmatprep.subr.mxu0 0.0
    %1373 = vmatpush1.msra.mxu0 0.0
    %1374 = vmatprep.subr.mxu0 0.0
    %1375 = vmatpush1.msra.mxu0 0.0
    %1376 = vmatprep.subr.mxu0 0.0
    %1377 = vmatpush1.msra.mxu0 0.0
    %1378 = vmatprep.subr.mxu0 0.0
    %1379 = vmatpush1.msra.mxu0 0.0
    %1380 = vmatprep.subr.mxu0 0.0
    %1381 = vmatpush1.msra.mxu0 0.0
    %1382 = vmatprep.subr.mxu0 0.0
    %1383 = vmatpush1.msra.mxu0 0.0
    %1384 = vmatprep.subr.mxu0 0.0
    %1385 = vmatpush1.msra.mxu0 0.0
    %1386 = vmatprep.subr.mxu0 0.0
    %1387 = vmatpush1.msra.mxu0 0.0
    %1388 = vmatprep.subr.mxu0 0.0
    %1389 = vmatpush1.msra.mxu0 0.0
    %1390 = vmatprep.subr.mxu0 0.0
    %1391 = vmatpush1.msra.mxu0 0.0
    %1392 = vmatprep.subr.mxu0 0.0
    %1393 = vmatpush1.msra.mxu0 0.0
    %1394 = vmatprep.subr.mxu0 0.0
    %1395 = vmatpush1.msra.mxu0 0.0
    %1396 = vmatprep.subr.mxu0 0.0
    %1397 = vmatpush1.msra.mxu0 0.0
    %1398 = vmatprep.subr.mxu0 0.0
    %1399 = vmatpush1.msra.mxu0 0.0
    %1400 = vmatprep.mubr.f32.mxu0 0.0
    %1401 = vmatmul.mubr.f32.gmra.mrb[0].mxu0 %v1332
    %v1402 = vpop.f32.mrb[0].mxu0
    %v1403 = vadd.f32 0.0, %v1402
    %v1404 = vpop.f32.mrb[0].mxu0
    %1405 = vdwg.mxu0
    %v1407 = vsel %vm691, %v1061, 0
    %1409 = vmatprep.subr.mxu0 0.0
    %1410 = vmatpush1.msra.mxu0 %v529
    %1411 = vmatprep.subr.mxu0 0.0
    %1412 = vmatpush1.msra.mxu0 0.0
    %1413 = vmatprep.subr.mxu0 0.0
    %1414 = vmatpush1.msra.mxu0 0.0
    %1415 = vmatprep.subr.mxu0 0.0
    %1416 = vmatpush1.msra.mxu0 0.0
    %1417 = vmatprep.subr.mxu0 0.0
    %1418 = vmatpush1.msra.mxu0 0.0
    %1419 = vmatprep.subr.mxu0 0.0
    %1420 = vmatpush1.msra.mxu0 0.0
    %1421 = vmatprep.subr.mxu0 0.0
    %1422 = vmatpush1.msra.mxu0 0.0
    %1423 = vmatprep.subr.mxu0 0.0
    %1424 = vmatpush1.msra.mxu0 0.0
    %1425 = vmatprep.subr.mxu0 0.0
    %1426 = vmatpush1.msra.mxu0 0.0
    %1427 = vmatprep.subr.mxu0 0.0
    %1428 = vmatpush1.msra.mxu0 0.0
    %1429 = vmatprep.subr.mxu0 0.0
    %1430 = vmatpush1.msra.mxu0 0.0
    %1431 = vmatprep.subr.mxu0 0.0
    %1432 = vmatpush1.msra.mxu0 0.0
    %1433 = vmatprep.subr.mxu0 0.0
    %1434 = vmatpush1.msra.mxu0 0.0
    %1435 = vmatprep.subr.mxu0 0.0
    %1436 = vmatpush1.msra.mxu0 0.0
    %1437 = vmatprep.subr.mxu0 0.0
    %1438 = vmatpush1.msra.mxu0 0.0
    %1439 = vmatprep.subr.mxu0 0.0
    %1440 = vmatpush1.msra.mxu0 0.0
    %1441 = vmatprep.subr.mxu0 0.0
    %1442 = vmatpush1.msra.mxu0 0.0
    %1443 = vmatprep.subr.mxu0 0.0
    %1444 = vmatpush1.msra.mxu0 0.0
    %1445 = vmatprep.subr.mxu0 0.0
    %1446 = vmatpush1.msra.mxu0 0.0
    %1447 = vmatprep.subr.mxu0 0.0
    %1448 = vmatpush1.msra.mxu0 0.0
    %1449 = vmatprep.subr.mxu0 0.0
    %1450 = vmatpush1.msra.mxu0 0.0
    %1451 = vmatprep.subr.mxu0 0.0
    %1452 = vmatpush1.msra.mxu0 0.0
    %1453 = vmatprep.subr.mxu0 0.0
    %1454 = vmatpush1.msra.mxu0 0.0
    %1455 = vmatprep.subr.mxu0 0.0
    %1456 = vmatpush1.msra.mxu0 0.0
    %1457 = vmatprep.subr.mxu0 0.0
    %1458 = vmatpush1.msra.mxu0 0.0
    %1459 = vmatprep.subr.mxu0 0.0
    %1460 = vmatpush1.msra.mxu0 0.0
    %1461 = vmatprep.subr.mxu0 0.0
    %1462 = vmatpush1.msra.mxu0 0.0
    %1463 = vmatprep.subr.mxu0 0.0
    %1464 = vmatpush1.msra.mxu0 0.0
    %1465 = vmatprep.subr.mxu0 0.0
    %1466 = vmatpush1.msra.mxu0 0.0
    %1467 = vmatprep.subr.mxu0 0.0
    %1468 = vmatpush1.msra.mxu0 0.0
    %1469 = vmatprep.subr.mxu0 0.0
    %1470 = vmatpush1.msra.mxu0 0.0
    %1471 = vmatprep.subr.mxu0 0.0
    %1472 = vmatpush1.msra.mxu0 0.0
    %1473 = vmatprep.mubr.f32.mxu0 0.0
    %1474 = vmatmul.mubr.f32.gmra.mrb[0].mxu0 %v1407
    %v1475 = vpop.f32.mrb[0].mxu0
    %v1476 = vadd.f32 %v1178, %v1475
    %v1477 = vpop.f32.mrb[0].mxu0
    %1478 = vdwg.mxu0
    %v1480 = vsel %vm691, %v1063, 0
    %1482 = vmatprep.subr.mxu0 0.0
    %1483 = vmatpush1.msra.mxu0 %v667
    %1484 = vmatprep.subr.mxu0 0.0
    %1485 = vmatpush1.msra.mxu0 0.0
    %1486 = vmatprep.subr.mxu0 0.0
    %1487 = vmatpush1.msra.mxu0 0.0
    %1488 = vmatprep.subr.mxu0 0.0
    %1489 = vmatpush1.msra.mxu0 0.0
    %1490 = vmatprep.subr.mxu0 0.0
    %1491 = vmatpush1.msra.mxu0 0.0
    %1492 = vmatprep.subr.mxu0 0.0
    %1493 = vmatpush1.msra.mxu0 0.0
    %1494 = vmatprep.subr.mxu0 0.0
    %1495 = vmatpush1.msra.mxu0 0.0
    %1496 = vmatprep.subr.mxu0 0.0
    %1497 = vmatpush1.msra.mxu0 0.0
    %1498 = vmatprep.subr.mxu0 0.0
    %1499 = vmatpush1.msra.mxu0 0.0
    %1500 = vmatprep.subr.mxu0 0.0
    %1501 = vmatpush1.msra.mxu0 0.0
    %1502 = vmatprep.subr.mxu0 0.0
    %1503 = vmatpush1.msra.mxu0 0.0
    %1504 = vmatprep.subr.mxu0 0.0
    %1505 = vmatpush1.msra.mxu0 0.0
    %1506 = vmatprep.subr.mxu0 0.0
    %1507 = vmatpush1.msra.mxu0 0.0
    %1508 = vmatprep.subr.mxu0 0.0
    %1509 = vmatpush1.msra.mxu0 0.0
    %1510 = vmatprep.subr.mxu0 0.0
    %1511 = vmatpush1.msra.mxu0 0.0
    %1512 = vmatprep.subr.mxu0 0.0
    %1513 = vmatpush1.msra.mxu0 0.0
    %1514 = vmatprep.subr.mxu0 0.0
    %1515 = vmatpush1.msra.mxu0 0.0
    %1516 = vmatprep.subr.mxu0 0.0
    %1517 = vmatpush1.msra.mxu0 0.0
    %1518 = vmatprep.subr.mxu0 0.0
    %1519 = vmatpush1.msra.mxu0 0.0
    %1520 = vmatprep.subr.mxu0 0.0
    %1521 = vmatpush1.msra.mxu0 0.0
    %1522 = vmatprep.subr.mxu0 0.0
    %1523 = vmatpush1.msra.mxu0 0.0
    %1524 = vmatprep.subr.mxu0 0.0
    %1525 = vmatpush1.msra.mxu0 0.0
    %1526 = vmatprep.subr.mxu0 0.0
    %1527 = vmatpush1.msra.mxu0 0.0
    %1528 = vmatprep.subr.mxu0 0.0
    %1529 = vmatpush1.msra.mxu0 0.0
    %1530 = vmatprep.subr.mxu0 0.0
    %1531 = vmatpush1.msra.mxu0 0.0
    %1532 = vmatprep.subr.mxu0 0.0
    %1533 = vmatpush1.msra.mxu0 0.0
    %1534 = vmatprep.subr.mxu0 0.0
    %1535 = vmatpush1.msra.mxu0 0.0
    %1536 = vmatprep.subr.mxu0 0.0
    %1537 = vmatpush1.msra.mxu0 0.0
    %1538 = vmatprep.subr.mxu0 0.0
    %1539 = vmatpush1.msra.mxu0 0.0
    %1540 = vmatprep.subr.mxu0 0.0
    %1541 = vmatpush1.msra.mxu0 0.0
    %1542 = vmatprep.subr.mxu0 0.0
    %1543 = vmatpush1.msra.mxu0 0.0
    %1544 = vmatprep.subr.mxu0 0.0
    %1545 = vmatpush1.msra.mxu0 0.0
    %1546 = vmatprep.mubr.f32.mxu0 0.0
    %1547 = vmatmul.mubr.f32.gmra.mrb[0].mxu0 %v1480
    %v1548 = vpop.f32.mrb[0].mxu0
    %v1549 = vadd.f32 %v1253, %v1548
    %v1550 = vpop.f32.mrb[0].mxu0
    %1551 = vdwg.mxu0
    %v1553 = vsel %vm691, %v1065, 0
    %1555 = vmatprep.subr.mxu0 0.0
    %1556 = vmatpush1.msra.mxu0 %v673
    %1557 = vmatprep.subr.mxu0 0.0
    %1558 = vmatpush1.msra.mxu0 0.0
    %1559 = vmatprep.subr.mxu0 0.0
    %1560 = vmatpush1.msra.mxu0 0.0
    %1561 = vmatprep.subr.mxu0 0.0
    %1562 = vmatpush1.msra.mxu0 0.0
    %1563 = vmatprep.subr.mxu0 0.0
    %1564 = vmatpush1.msra.mxu0 0.0
    %1565 = vmatprep.subr.mxu0 0.0
    %1566 = vmatpush1.msra.mxu0 0.0
    %1567 = vmatprep.subr.mxu0 0.0
    %1568 = vmatpush1.msra.mxu0 0.0
    %1569 = vmatprep.subr.mxu0 0.0
    %1570 = vmatpush1.msra.mxu0 0.0
    %1571 = vmatprep.subr.mxu0 0.0
    %1572 = vmatpush1.msra.mxu0 0.0
    %1573 = vmatprep.subr.mxu0 0.0
    %1574 = vmatpush1.msra.mxu0 0.0
    %1575 = vmatprep.subr.mxu0 0.0
    %1576 = vmatpush1.msra.mxu0 0.0
    %1577 = vmatprep.subr.mxu0 0.0
    %1578 = vmatpush1.msra.mxu0 0.0
    %1579 = vmatprep.subr.mxu0 0.0
    %1580 = vmatpush1.msra.mxu0 0.0
    %1581 = vmatprep.subr.mxu0 0.0
    %1582 = vmatpush1.msra.mxu0 0.0
    %1583 = vmatprep.subr.mxu0 0.0
    %1584 = vmatpush1.msra.mxu0 0.0
    %1585 = vmatprep.subr.mxu0 0.0
    %1586 = vmatpush1.msra.mxu0 0.0
    %1587 = vmatprep.subr.mxu0 0.0
    %1588 = vmatpush1.msra.mxu0 0.0
    %1589 = vmatprep.subr.mxu0 0.0
    %1590 = vmatpush1.msra.mxu0 0.0
    %1591 = vmatprep.subr.mxu0 0.0
    %1592 = vmatpush1.msra.mxu0 0.0
    %1593 = vmatprep.subr.mxu0 0.0
    %1594 = vmatpush1.msra.mxu0 0.0
    %1595 = vmatprep.subr.mxu0 0.0
    %1596 = vmatpush1.msra.mxu0 0.0
    %1597 = vmatprep.subr.mxu0 0.0
    %1598 = vmatpush1.msra.mxu0 0.0
    %1599 = vmatprep.subr.mxu0 0.0
    %1600 = vmatpush1.msra.mxu0 0.0
    %1601 = vmatprep.subr.mxu0 0.0
    %1602 = vmatpush1.msra.mxu0 0.0
    %1603 = vmatprep.subr.mxu0 0.0
    %1604 = vmatpush1.msra.mxu0 0.0
    %1605 = vmatprep.subr.mxu0 0.0
    %1606 = vmatpush1.msra.mxu0 0.0
    %1607 = vmatprep.subr.mxu0 0.0
    %1608 = vmatpush1.msra.mxu0 0.0
    %1609 = vmatprep.subr.mxu0 0.0
    %1610 = vmatpush1.msra.mxu0 0.0
    %1611 = vmatprep.subr.mxu0 0.0
    %1612 = vmatpush1.msra.mxu0 0.0
    %1613 = vmatprep.subr.mxu0 0.0
    %1614 = vmatpush1.msra.mxu0 0.0
    %1615 = vmatprep.subr.mxu0 0.0
    %1616 = vmatpush1.msra.mxu0 0.0
    %1617 = vmatprep.subr.mxu0 0.0
    %1618 = vmatpush1.msra.mxu0 0.0
    %1619 = vmatprep.mubr.f32.mxu0 0.0
    %1620 = vmatmul.mubr.f32.gmra.mrb[0].mxu0 %v1553
    %v1621 = vpop.f32.mrb[0].mxu0
    %v1622 = vadd.f32 %v1328, %v1621
    %v1623 = vpop.f32.mrb[0].mxu0
    %1624 = vdwg.mxu0
    %v1626 = vsel %vm691, %v1067, 0
    %1628 = vmatprep.subr.mxu0 0.0
    %1629 = vmatpush1.msra.mxu0 %v679
    %1630 = vmatprep.subr.mxu0 0.0
    %1631 = vmatpush1.msra.mxu0 0.0
    %1632 = vmatprep.subr.mxu0 0.0
    %1633 = vmatpush1.msra.mxu0 0.0
    %1634 = vmatprep.subr.mxu0 0.0
    %1635 = vmatpush1.msra.mxu0 0.0
    %1636 = vmatprep.subr.mxu0 0.0
    %1637 = vmatpush1.msra.mxu0 0.0
    %1638 = vmatprep.subr.mxu0 0.0
    %1639 = vmatpush1.msra.mxu0 0.0
    %1640 = vmatprep.subr.mxu0 0.0
    %1641 = vmatpush1.msra.mxu0 0.0
    %1642 = vmatprep.subr.mxu0 0.0
    %1643 = vmatpush1.msra.mxu0 0.0
    %1644 = vmatprep.subr.mxu0 0.0
    %1645 = vmatpush1.msra.mxu0 0.0
    %1646 = vmatprep.subr.mxu0 0.0
    %1647 = vmatpush1.msra.mxu0 0.0
    %1648 = vmatprep.subr.mxu0 0.0
    %1649 = vmatpush1.msra.mxu0 0.0
    %1650 = vmatprep.subr.mxu0 0.0
    %1651 = vmatpush1.msra.mxu0 0.0
    %1652 = vmatprep.subr.mxu0 0.0
    %1653 = vmatpush1.msra.mxu0 0.0
    %1654 = vmatprep.subr.mxu0 0.0
    %1655 = vmatpush1.msra.mxu0 0.0
    %1656 = vmatprep.subr.mxu0 0.0
    %1657 = vmatpush1.msra.mxu0 0.0
    %1658 = vmatprep.subr.mxu0 0.0
    %1659 = vmatpush1.msra.mxu0 0.0
    %1660 = vmatprep.subr.mxu0 0.0
    %1661 = vmatpush1.msra.mxu0 0.0
    %1662 = vmatprep.subr.mxu0 0.0
    %1663 = vmatpush1.msra.mxu0 0.0
    %1664 = vmatprep.subr.mxu0 0.0
    %1665 = vmatpush1.msra.mxu0 0.0
    %1666 = vmatprep.subr.mxu0 0.0
    %1667 = vmatpush1.msra.mxu0 0.0
    %1668 = vmatprep.subr.mxu0 0.0
    %1669 = vmatpush1.msra.mxu0 0.0
    %1670 = vmatprep.subr.mxu0 0.0
    %1671 = vmatpush1.msra.mxu0 0.0
    %1672 = vmatprep.subr.mxu0 0.0
    %1673 = vmatpush1.msra.mxu0 0.0
    %1674 = vmatprep.subr.mxu0 0.0
    %1675 = vmatpush1.msra.mxu0 0.0
    %1676 = vmatprep.subr.mxu0 0.0
    %1677 = vmatpush1.msra.mxu0 0.0
    %1678 = vmatprep.subr.mxu0 0.0
    %1679 = vmatpush1.msra.mxu0 0.0
    %1680 = vmatprep.subr.mxu0 0.0
    %1681 = vmatpush1.msra.mxu0 0.0
    %1682 = vmatprep.subr.mxu0 0.0
    %1683 = vmatpush1.msra.mxu0 0.0
    %1684 = vmatprep.subr.mxu0 0.0
    %1685 = vmatpush1.msra.mxu0 0.0
    %1686 = vmatprep.subr.mxu0 0.0
    %1687 = vmatpush1.msra.mxu0 0.0
    %1688 = vmatprep.subr.mxu0 0.0
    %1689 = vmatpush1.msra.mxu0 0.0
    %1690 = vmatprep.subr.mxu0 0.0
    %1691 = vmatpush1.msra.mxu0 0.0
    %1692 = vmatprep.mubr.f32.mxu0 0.0
    %1693 = vmatmul.mubr.f32.gmra.mrb[0].mxu0 %v1626
    %v1694 = vpop.f32.mrb[0].mxu0
    %v1695 = vadd.f32 %v1403, %v1694
    %v1696 = vpop.f32.mrb[0].mxu0
    %1697 = vdwg.mxu0
    %1699 = vset.pattern.permute.xlu0 0
    %1700 = vperm.xlu0 %1699, %v1100
    %v1701 = vpop.permute.xlu0 %1700
    %1704 = vset.pattern.permute.xlu0 0
    %1705 = vperm.xlu0 %1704, %v1101
    %v1706 = vpop.permute.xlu0 %1705
    %1709 = vset.pattern.permute.xlu0 0
    %1710 = vperm.xlu0 %1709, %v1102
    %v1711 = vpop.permute.xlu0 %1710
    %1714 = vset.pattern.permute.xlu0 0
    %1715 = vperm.xlu0 %1714, %v1103
    %v1716 = vpop.permute.xlu0 %1715
    %v1718 = vmul.f32 %v1476, %v1701
    %v1719 = vmul.f32 %v1549, %v1706
    %v1720 = vmul.f32 %v1622, %v1711
    %v1721 = vmul.f32 %v1695, %v1716
    %1723 = vrot.lane.b32.xlu0 %v1719, 8
    %v1724 = vpop.permute.xlu0 %1723
    %1727 = vrot.lane.b32.xlu0 %v1720, 16
    %v1728 = vpop.permute.xlu0 %1727
    %1731 = vrot.lane.b32.xlu0 %v1721, 24
    %v1732 = vpop.permute.xlu0 %1731
    %v1734 = vsel %vm691, %v1718, %v1724
    %vm1735 = vcmask 130048
    %v1736 = vsel %vm1735, %v1734, %v1728
    %vm1737 = vcmask 195584
    %v1738 = vsel %vm1737, %v1736, %v1732
    %v1739 = vsel %vm691, %v619, 0
    %v1741 = vsel %vm691, %v358, 0
    %1743 = vmatprep.subr.mxu0 0.0
    %1744 = vmatpush1.xpose.msra.mxu0 %v1741
    %1745 = vmatprep.subr.mxu0 0.0
    %1746 = vmatpush1.xpose.msra.mxu0 0.0
    %1747 = vmatprep.subr.mxu0 0.0
    %1748 = vmatpush1.xpose.msra.mxu0 0.0
    %1749 = vmatprep.subr.mxu0 0.0
    %1750 = vmatpush1.xpose.msra.mxu0 0.0
    %1751 = vmatprep.subr.mxu0 0.0
    %1752 = vmatpush1.xpose.msra.mxu0 0.0
    %1753 = vmatprep.subr.mxu0 0.0
    %1754 = vmatpush1.xpose.msra.mxu0 0.0
    %1755 = vmatprep.subr.mxu0 0.0
    %1756 = vmatpush1.xpose.msra.mxu0 0.0
    %1757 = vmatprep.subr.mxu0 0.0
    %1758 = vmatpush1.xpose.msra.mxu0 0.0
    %1759 = vmatprep.subr.mxu0 0.0
    %1760 = vmatpush1.xpose.msra.mxu0 0.0
    %1761 = vmatprep.subr.mxu0 0.0
    %1762 = vmatpush1.xpose.msra.mxu0 0.0
    %1763 = vmatprep.subr.mxu0 0.0
    %1764 = vmatpush1.xpose.msra.mxu0 0.0
    %1765 = vmatprep.subr.mxu0 0.0
    %1766 = vmatpush1.xpose.msra.mxu0 0.0
    %1767 = vmatprep.subr.mxu0 0.0
    %1768 = vmatpush1.xpose.msra.mxu0 0.0
    %1769 = vmatprep.subr.mxu0 0.0
    %1770 = vmatpush1.xpose.msra.mxu0 0.0
    %1771 = vmatprep.subr.mxu0 0.0
    %1772 = vmatpush1.xpose.msra.mxu0 0.0
    %1773 = vmatprep.subr.mxu0 0.0
    %1774 = vmatpush1.xpose.msra.mxu0 0.0
    %1775 = vmatprep.subr.mxu0 0.0
    %1776 = vmatpush1.xpose.msra.mxu0 0.0
    %1777 = vmatprep.subr.mxu0 0.0
    %1778 = vmatpush1.xpose.msra.mxu0 0.0
    %1779 = vmatprep.subr.mxu0 0.0
    %1780 = vmatpush1.xpose.msra.mxu0 0.0
    %1781 = vmatprep.subr.mxu0 0.0
    %1782 = vmatpush1.xpose.msra.mxu0 0.0
    %1783 = vmatprep.subr.mxu0 0.0
    %1784 = vmatpush1.xpose.msra.mxu0 0.0
    %1785 = vmatprep.subr.mxu0 0.0
    %1786 = vmatpush1.xpose.msra.mxu0 0.0
    %1787 = vmatprep.subr.mxu0 0.0
    %1788 = vmatpush1.xpose.msra.mxu0 0.0
    %1789 = vmatprep.subr.mxu0 0.0
    %1790 = vmatpush1.xpose.msra.mxu0 0.0
    %1791 = vmatprep.subr.mxu0 0.0
    %1792 = vmatpush1.xpose.msra.mxu0 0.0
    %1793 = vmatprep.subr.mxu0 0.0
    %1794 = vmatpush1.xpose.msra.mxu0 0.0
    %1795 = vmatprep.subr.mxu0 0.0
    %1796 = vmatpush1.xpose.msra.mxu0 0.0
    %1797 = vmatprep.subr.mxu0 0.0
    %1798 = vmatpush1.xpose.msra.mxu0 0.0
    %1799 = vmatprep.subr.mxu0 0.0
    %1800 = vmatpush1.xpose.msra.mxu0 0.0
    %1801 = vmatprep.subr.mxu0 0.0
    %1802 = vmatpush1.xpose.msra.mxu0 0.0
    %1803 = vmatprep.subr.mxu0 0.0
    %1804 = vmatpush1.xpose.msra.mxu0 0.0
    %1805 = vmatprep.subr.mxu0 0.0
    %1806 = vmatpush1.xpose.msra.mxu0 0.0
    %1807 = vmatprep.mubr.f32.mxu0 0.0
    %1808 = vmatmul.mubr.f32.gmra.mrb[0].mxu0 %v1739
    %v1809 = vpop.f32.mrb[0].mxu0
    %v1810 = vadd.f32 0.0, %v1809
    %v1811 = vpop.f32.mrb[0].mxu0
    %1812 = vdwg.mxu0
    %v1813 = vsel %vm691, %v625, 0
    %v1815 = vsel %vm691, %v645, 0
    %1817 = vmatprep.subr.mxu0 0.0
    %1818 = vmatpush1.xpose.msra.mxu0 %v1815
    %1819 = vmatprep.subr.mxu0 0.0
    %1820 = vmatpush1.xpose.msra.mxu0 0.0
    %1821 = vmatprep.subr.mxu0 0.0
    %1822 = vmatpush1.xpose.msra.mxu0 0.0
    %1823 = vmatprep.subr.mxu0 0.0
    %1824 = vmatpush1.xpose.msra.mxu0 0.0
    %1825 = vmatprep.subr.mxu0 0.0
    %1826 = vmatpush1.xpose.msra.mxu0 0.0
    %1827 = vmatprep.subr.mxu0 0.0
    %1828 = vmatpush1.xpose.msra.mxu0 0.0
    %1829 = vmatprep.subr.mxu0 0.0
    %1830 = vmatpush1.xpose.msra.mxu0 0.0
    %1831 = vmatprep.subr.mxu0 0.0
    %1832 = vmatpush1.xpose.msra.mxu0 0.0
    %1833 = vmatprep.subr.mxu0 0.0
    %1834 = vmatpush1.xpose.msra.mxu0 0.0
    %1835 = vmatprep.subr.mxu0 0.0
    %1836 = vmatpush1.xpose.msra.mxu0 0.0
    %1837 = vmatprep.subr.mxu0 0.0
    %1838 = vmatpush1.xpose.msra.mxu0 0.0
    %1839 = vmatprep.subr.mxu0 0.0
    %1840 = vmatpush1.xpose.msra.mxu0 0.0
    %1841 = vmatprep.subr.mxu0 0.0
    %1842 = vmatpush1.xpose.msra.mxu0 0.0
    %1843 = vmatprep.subr.mxu0 0.0
    %1844 = vmatpush1.xpose.msra.mxu0 0.0
    %1845 = vmatprep.subr.mxu0 0.0
    %1846 = vmatpush1.xpose.msra.mxu0 0.0
    %1847 = vmatprep.subr.mxu0 0.0
    %1848 = vmatpush1.xpose.msra.mxu0 0.0
    %1849 = vmatprep.subr.mxu0 0.0
    %1850 = vmatpush1.xpose.msra.mxu0 0.0
    %1851 = vmatprep.subr.mxu0 0.0
    %1852 = vmatpush1.xpose.msra.mxu0 0.0
    %1853 = vmatprep.subr.mxu0 0.0
    %1854 = vmatpush1.xpose.msra.mxu0 0.0
    %1855 = vmatprep.subr.mxu0 0.0
    %1856 = vmatpush1.xpose.msra.mxu0 0.0
    %1857 = vmatprep.subr.mxu0 0.0
    %1858 = vmatpush1.xpose.msra.mxu0 0.0
    %1859 = vmatprep.subr.mxu0 0.0
    %1860 = vmatpush1.xpose.msra.mxu0 0.0
    %1861 = vmatprep.subr.mxu0 0.0
    %1862 = vmatpush1.xpose.msra.mxu0 0.0
    %1863 = vmatprep.subr.mxu0 0.0
    %1864 = vmatpush1.xpose.msra.mxu0 0.0
    %1865 = vmatprep.subr.mxu0 0.0
    %1866 = vmatpush1.xpose.msra.mxu0 0.0
    %1867 = vmatprep.subr.mxu0 0.0
    %1868 = vmatpush1.xpose.msra.mxu0 0.0
    %1869 = vmatprep.subr.mxu0 0.0
    %1870 = vmatpush1.xpose.msra.mxu0 0.0
    %1871 = vmatprep.subr.mxu0 0.0
    %1872 = vmatpush1.xpose.msra.mxu0 0.0
    %1873 = vmatprep.subr.mxu0 0.0
    %1874 = vmatpush1.xpose.msra.mxu0 0.0
    %1875 = vmatprep.subr.mxu0 0.0
    %1876 = vmatpush1.xpose.msra.mxu0 0.0
    %1877 = vmatprep.subr.mxu0 0.0
    %1878 = vmatpush1.xpose.msra.mxu0 0.0
    %1879 = vmatprep.subr.mxu0 0.0
    %1880 = vmatpush1.xpose.msra.mxu0 0.0
    %1881 = vmatprep.mubr.f32.mxu0 0.0
    %1882 = vmatmul.mubr.f32.gmra.mrb[0].mxu0 %v1813
    %v1883 = vpop.f32.mrb[0].mxu0
    %v1884 = vadd.f32 0.0, %v1883
    %v1885 = vpop.f32.mrb[0].mxu0
    %1886 = vdwg.mxu0
    %v1887 = vsel %vm691, %v631, 0
    %v1889 = vsel %vm691, %v649, 0
    %1891 = vmatprep.subr.mxu0 0.0
    %1892 = vmatpush1.xpose.msra.mxu0 %v1889
    %1893 = vmatprep.subr.mxu0 0.0
    %1894 = vmatpush1.xpose.msra.mxu0 0.0
    %1895 = vmatprep.subr.mxu0 0.0
    %1896 = vmatpush1.xpose.msra.mxu0 0.0
    %1897 = vmatprep.subr.mxu0 0.0
    %1898 = vmatpush1.xpose.msra.mxu0 0.0
    %1899 = vmatprep.subr.mxu0 0.0
    %1900 = vmatpush1.xpose.msra.mxu0 0.0
    %1901 = vmatprep.subr.mxu0 0.0
    %1902 = vmatpush1.xpose.msra.mxu0 0.0
    %1903 = vmatprep.subr.mxu0 0.0
    %1904 = vmatpush1.xpose.msra.mxu0 0.0
    %1905 = vmatprep.subr.mxu0 0.0
    %1906 = vmatpush1.xpose.msra.mxu0 0.0
    %1907 = vmatprep.subr.mxu0 0.0
    %1908 = vmatpush1.xpose.msra.mxu0 0.0
    %1909 = vmatprep.subr.mxu0 0.0
    %1910 = vmatpush1.xpose.msra.mxu0 0.0
    %1911 = vmatprep.subr.mxu0 0.0
    %1912 = vmatpush1.xpose.msra.mxu0 0.0
    %1913 = vmatprep.subr.mxu0 0.0
    %1914 = vmatpush1.xpose.msra.mxu0 0.0
    %1915 = vmatprep.subr.mxu0 0.0
    %1916 = vmatpush1.xpose.msra.mxu0 0.0
    %1917 = vmatprep.subr.mxu0 0.0
    %1918 = vmatpush1.xpose.msra.mxu0 0.0
    %1919 = vmatprep.subr.mxu0 0.0
    %1920 = vmatpush1.xpose.msra.mxu0 0.0
    %1921 = vmatprep.subr.mxu0 0.0
    %1922 = vmatpush1.xpose.msra.mxu0 0.0
    %1923 = vmatprep.subr.mxu0 0.0
    %1924 = vmatpush1.xpose.msra.mxu0 0.0
    %1925 = vmatprep.subr.mxu0 0.0
    %1926 = vmatpush1.xpose.msra.mxu0 0.0
    %1927 = vmatprep.subr.mxu0 0.0
    %1928 = vmatpush1.xpose.msra.mxu0 0.0
    %1929 = vmatprep.subr.mxu0 0.0
    %1930 = vmatpush1.xpose.msra.mxu0 0.0
    %1931 = vmatprep.subr.mxu0 0.0
    %1932 = vmatpush1.xpose.msra.mxu0 0.0
    %1933 = vmatprep.subr.mxu0 0.0
    %1934 = vmatpush1.xpose.msra.mxu0 0.0
    %1935 = vmatprep.subr.mxu0 0.0
    %1936 = vmatpush1.xpose.msra.mxu0 0.0
    %1937 = vmatprep.subr.mxu0 0.0
    %1938 = vmatpush1.xpose.msra.mxu0 0.0
    %1939 = vmatprep.subr.mxu0 0.0
    %1940 = vmatpush1.xpose.msra.mxu0 0.0
    %1941 = vmatprep.subr.mxu0 0.0
    %1942 = vmatpush1.xpose.msra.mxu0 0.0
    %1943 = vmatprep.subr.mxu0 0.0
    %1944 = vmatpush1.xpose.msra.mxu0 0.0
    %1945 = vmatprep.subr.mxu0 0.0
    %1946 = vmatpush1.xpose.msra.mxu0 0.0
    %1947 = vmatprep.subr.mxu0 0.0
    %1948 = vmatpush1.xpose.msra.mxu0 0.0
    %1949 = vmatprep.subr.mxu0 0.0
    %1950 = vmatpush1.xpose.msra.mxu0 0.0
    %1951 = vmatprep.subr.mxu0 0.0
    %1952 = vmatpush1.xpose.msra.mxu0 0.0
    %1953 = vmatprep.subr.mxu0 0.0
    %1954 = vmatpush1.xpose.msra.mxu0 0.0
    %1955 = vmatprep.mubr.f32.mxu0 0.0
    %1956 = vmatmul.mubr.f32.gmra.mrb[0].mxu0 %v1887
    %v1957 = vpop.f32.mrb[0].mxu0
    %v1958 = vadd.f32 0.0, %v1957
    %v1959 = vpop.f32.mrb[0].mxu0
    %1960 = vdwg.mxu0
    %v1961 = vsel %vm691, %v637, 0
    %v1963 = vsel %vm691, %v653, 0
    %1965 = vmatprep.subr.mxu0 0.0
    %1966 = vmatpush1.xpose.msra.mxu0 %v1963
    %1967 = vmatprep.subr.mxu0 0.0
    %1968 = vmatpush1.xpose.msra.mxu0 0.0
    %1969 = vmatprep.subr.mxu0 0.0
    %1970 = vmatpush1.xpose.msra.mxu0 0.0
    %1971 = vmatprep.subr.mxu0 0.0
    %1972 = vmatpush1.xpose.msra.mxu0 0.0
    %1973 = vmatprep.subr.mxu0 0.0
    %1974 = vmatpush1.xpose.msra.mxu0 0.0
    %1975 = vmatprep.subr.mxu0 0.0
    %1976 = vmatpush1.xpose.msra.mxu0 0.0
    %1977 = vmatprep.subr.mxu0 0.0
    %1978 = vmatpush1.xpose.msra.mxu0 0.0
    %1979 = vmatprep.subr.mxu0 0.0
    %1980 = vmatpush1.xpose.msra.mxu0 0.0
    %1981 = vmatprep.subr.mxu0 0.0
    %1982 = vmatpush1.xpose.msra.mxu0 0.0
    %1983 = vmatprep.subr.mxu0 0.0
    %1984 = vmatpush1.xpose.msra.mxu0 0.0
    %1985 = vmatprep.subr.mxu0 0.0
    %1986 = vmatpush1.xpose.msra.mxu0 0.0
    %1987 = vmatprep.subr.mxu0 0.0
    %1988 = vmatpush1.xpose.msra.mxu0 0.0
    %1989 = vmatprep.subr.mxu0 0.0
    %1990 = vmatpush1.xpose.msra.mxu0 0.0
    %1991 = vmatprep.subr.mxu0 0.0
    %1992 = vmatpush1.xpose.msra.mxu0 0.0
    %1993 = vmatprep.subr.mxu0 0.0
    %1994 = vmatpush1.xpose.msra.mxu0 0.0
    %1995 = vmatprep.subr.mxu0 0.0
    %1996 = vmatpush1.xpose.msra.mxu0 0.0
    %1997 = vmatprep.subr.mxu0 0.0
    %1998 = vmatpush1.xpose.msra.mxu0 0.0
    %1999 = vmatprep.subr.mxu0 0.0
    %2000 = vmatpush1.xpose.msra.mxu0 0.0
    %2001 = vmatprep.subr.mxu0 0.0
    %2002 = vmatpush1.xpose.msra.mxu0 0.0
    %2003 = vmatprep.subr.mxu0 0.0
    %2004 = vmatpush1.xpose.msra.mxu0 0.0
    %2005 = vmatprep.subr.mxu0 0.0
    %2006 = vmatpush1.xpose.msra.mxu0 0.0
    %2007 = vmatprep.subr.mxu0 0.0
    %2008 = vmatpush1.xpose.msra.mxu0 0.0
    %2009 = vmatprep.subr.mxu0 0.0
    %2010 = vmatpush1.xpose.msra.mxu0 0.0
    %2011 = vmatprep.subr.mxu0 0.0
    %2012 = vmatpush1.xpose.msra.mxu0 0.0
    %2013 = vmatprep.subr.mxu0 0.0
    %2014 = vmatpush1.xpose.msra.mxu0 0.0
    %2015 = vmatprep.subr.mxu0 0.0
    %2016 = vmatpush1.xpose.msra.mxu0 0.0
    %2017 = vmatprep.subr.mxu0 0.0
    %2018 = vmatpush1.xpose.msra.mxu0 0.0
    %2019 = vmatprep.subr.mxu0 0.0
    %2020 = vmatpush1.xpose.msra.mxu0 0.0
    %2021 = vmatprep.subr.mxu0 0.0
    %2022 = vmatpush1.xpose.msra.mxu0 0.0
    %2023 = vmatprep.subr.mxu0 0.0
    %2024 = vmatpush1.xpose.msra.mxu0 0.0
    %2025 = vmatprep.subr.mxu0 0.0
    %2026 = vmatpush1.xpose.msra.mxu0 0.0
    %2027 = vmatprep.subr.mxu0 0.0
    %2028 = vmatpush1.xpose.msra.mxu0 0.0
    %2029 = vmatprep.mubr.f32.mxu0 0.0
    %2030 = vmatmul.mubr.f32.gmra.mrb[0].mxu0 %v1961
    %v2031 = vpop.f32.mrb[0].mxu0
    %v2032 = vadd.f32 0.0, %v2031
    %v2033 = vpop.f32.mrb[0].mxu0
    %2034 = vdwg.mxu0
    %v2035 = vlaneseq
    %v2036 = vshrl.u32 %v2035, 7
    %v2037 = vsub.s32 1, %v2036
    %v2038 = vrot.slane %v442, %v2037
    %v2039 = vmul.f32 %v619, %v2038
    %v2040 = vsel %vm691, %v2039, 0.0
    %2041 = vadd.xlane.f32.xlu0 %v2040
    %v2042 = vpop.xlane.xlu0 %2041
    %v2043 = vlaneseq
    %v2044 = vshrl.u32 %v2043, 7
    %v2045 = vsub.s32 1, %v2044
    %v2046 = vrot.slane %v656, %v2045
    %v2047 = vmul.f32 %v625, %v2046
    %v2048 = vsel %vm691, %v2047, 0.0
    %2049 = vadd.xlane.f32.xlu0 %v2048
    %v2050 = vpop.xlane.xlu0 %2049
    %v2051 = vlaneseq
    %v2052 = vshrl.u32 %v2051, 7
    %v2053 = vsub.s32 1, %v2052
    %v2054 = vrot.slane %v659, %v2053
    %v2055 = vmul.f32 %v631, %v2054
    %v2056 = vsel %vm691, %v2055, 0.0
    %2057 = vadd.xlane.f32.xlu0 %v2056
    %v2058 = vpop.xlane.xlu0 %2057
    %v2059 = vlaneseq
    %v2060 = vshrl.u32 %v2059, 7
    %v2061 = vsub.s32 1, %v2060
    %v2062 = vrot.slane %v662, %v2061
    %v2063 = vmul.f32 %v637, %v2062
    %v2064 = vsel %vm691, %v2063, 0.0
    %2065 = vadd.xlane.f32.xlu0 %v2064
    %v2066 = vpop.xlane.xlu0 %2065
    %v2067 = vsel %vm691, %v1810, -inf
    %2068 = vmax.xlane.f32.xlu0 %v2067
    %v2069 = vpop.xlane.xlu0 %2068
    %v2070 = vsel %vm691, %v1884, -inf
    %2071 = vmax.xlane.f32.xlu0 %v2070
    %v2072 = vpop.xlane.xlu0 %2071
    %v2073 = vsel %vm691, %v1958, -inf
    %2074 = vmax.xlane.f32.xlu0 %v2073
    %v2075 = vpop.xlane.xlu0 %2074
    %v2076 = vsel %vm691, %v2032, -inf
    %2077 = vmax.xlane.f32.xlu0 %v2076
    %v2078 = vpop.xlane.xlu0 %2077
    %v2079 = vmax.f32 %v2069, %v2042
    %v2080 = vmax.f32 %v2072, %v2050
    %v2081 = vmax.f32 %v2075, %v2058
    %v2082 = vmax.f32 %v2078, %v2066
    %2084 = vset.pattern.permute.xlu0 0
    %2085 = vperm.xlu0 %2084, %v2079
    %v2086 = vpop.permute.xlu0 %2085
    %2089 = vset.pattern.permute.xlu0 0
    %2090 = vperm.xlu0 %2089, %v2080
    %v2091 = vpop.permute.xlu0 %2090
    %2094 = vset.pattern.permute.xlu0 0
    %2095 = vperm.xlu0 %2094, %v2081
    %v2096 = vpop.permute.xlu0 %2095
    %2099 = vset.pattern.permute.xlu0 0
    %2100 = vperm.xlu0 %2099, %v2082
    %v2101 = vpop.permute.xlu0 %2100
    %v2103 = vsub.f32 %v1810, %v2086
    %v2104 = vsub.f32 %v1884, %v2091
    %v2105 = vsub.f32 %v1958, %v2096
    %v2106 = vsub.f32 %v2032, %v2101
    %v2107 = vmul.f32 %v2103, 1.442695
    %v2108 = vpow.pop %v2107
    %v2109 = vmul.f32 %v2104, 1.442695
    %v2110 = vpow.pop %v2109
    %v2111 = vmul.f32 %v2105, 1.442695
    %v2112 = vpow.pop %v2111
    %v2113 = vmul.f32 %v2106, 1.442695
    %v2114 = vpow.pop %v2113
    %v2115 = vsub.f32 %v2042, %v2079
    %v2116 = vsub.f32 %v2050, %v2080
    %v2117 = vsub.f32 %v2058, %v2081
    %v2118 = vsub.f32 %v2066, %v2082
    %v2119 = vmul.f32 %v2115, 1.442695
    %v2120 = vpow.pop %v2119
    %v2121 = vmul.f32 %v2116, 1.442695
    %v2122 = vpow.pop %v2121
    %v2123 = vmul.f32 %v2117, 1.442695
    %v2124 = vpow.pop %v2123
    %v2125 = vmul.f32 %v2118, 1.442695
    %v2126 = vpow.pop %v2125
    %v2127 = vsel %vm691, %v2108, 0.0
    %2128 = vadd.xlane.f32.xlu0 %v2127
    %v2129 = vpop.xlane.xlu0 %2128
    %v2130 = vsel %vm691, %v2110, 0.0
    %2131 = vadd.xlane.f32.xlu0 %v2130
    %v2132 = vpop.xlane.xlu0 %2131
    %v2133 = vsel %vm691, %v2112, 0.0
    %2134 = vadd.xlane.f32.xlu0 %v2133
    %v2135 = vpop.xlane.xlu0 %2134
    %v2136 = vsel %vm691, %v2114, 0.0
    %2137 = vadd.xlane.f32.xlu0 %v2136
    %v2138 = vpop.xlane.xlu0 %2137
    %v2139 = vadd.f32 %v2120, 0.0
    %v2140 = vadd.f32 %v2122, 0.0
    %v2141 = vadd.f32 %v2124, 0.0
    %v2142 = vadd.f32 %v2126, 0.0
    %v2143 = vadd.f32 %v2129, %v2139
    %v2144 = vadd.f32 %v2132, %v2140
    %v2145 = vadd.f32 %v2135, %v2141
    %v2146 = vadd.f32 %v2138, %v2142
    %v2147 = vrcp.pop %v2143
    %v2148 = vrcp.pop %v2144
    %v2149 = vrcp.pop %v2145
    %v2150 = vrcp.pop %v2146
    %v2151 = vrot.slane %v615, 1
    %v2153 = vsel %vm1104, %v2120, 0
    %v2155 = vsel %vm1108, %v2151, 0
    %2157 = vmatprep.subr.mxu0 0.0
    %2158 = vmatpush1.msra.mxu0 %v2155
    %2159 = vmatprep.subr.mxu0 0.0
    %2160 = vmatpush1.msra.mxu0 0.0
    %2161 = vmatprep.subr.mxu0 0.0
    %2162 = vmatpush1.msra.mxu0 0.0
    %2163 = vmatprep.subr.mxu0 0.0
    %2164 = vmatpush1.msra.mxu0 0.0
    %2165 = vmatprep.subr.mxu0 0.0
    %2166 = vmatpush1.msra.mxu0 0.0
    %2167 = vmatprep.subr.mxu0 0.0
    %2168 = vmatpush1.msra.mxu0 0.0
    %2169 = vmatprep.subr.mxu0 0.0
    %2170 = vmatpush1.msra.mxu0 0.0
    %2171 = vmatprep.subr.mxu0 0.0
    %2172 = vmatpush1.msra.mxu0 0.0
    %2173 = vmatprep.subr.mxu0 0.0
    %2174 = vmatpush1.msra.mxu0 0.0
    %2175 = vmatprep.subr.mxu0 0.0
    %2176 = vmatpush1.msra.mxu0 0.0
    %2177 = vmatprep.subr.mxu0 0.0
    %2178 = vmatpush1.msra.mxu0 0.0
    %2179 = vmatprep.subr.mxu0 0.0
    %2180 = vmatpush1.msra.mxu0 0.0
    %2181 = vmatprep.subr.mxu0 0.0
    %2182 = vmatpush1.msra.mxu0 0.0
    %2183 = vmatprep.subr.mxu0 0.0
    %2184 = vmatpush1.msra.mxu0 0.0
    %2185 = vmatprep.subr.mxu0 0.0
    %2186 = vmatpush1.msra.mxu0 0.0
    %2187 = vmatprep.subr.mxu0 0.0
    %2188 = vmatpush1.msra.mxu0 0.0
    %2189 = vmatprep.subr.mxu0 0.0
    %2190 = vmatpush1.msra.mxu0 0.0
    %2191 = vmatprep.subr.mxu0 0.0
    %2192 = vmatpush1.msra.mxu0 0.0
    %2193 = vmatprep.subr.mxu0 0.0
    %2194 = vmatpush1.msra.mxu0 0.0
    %2195 = vmatprep.subr.mxu0 0.0
    %2196 = vmatpush1.msra.mxu0 0.0
    %2197 = vmatprep.subr.mxu0 0.0
    %2198 = vmatpush1.msra.mxu0 0.0
    %2199 = vmatprep.subr.mxu0 0.0
    %2200 = vmatpush1.msra.mxu0 0.0
    %2201 = vmatprep.subr.mxu0 0.0
    %2202 = vmatpush1.msra.mxu0 0.0
    %2203 = vmatprep.subr.mxu0 0.0
    %2204 = vmatpush1.msra.mxu0 0.0
    %2205 = vmatprep.subr.mxu0 0.0
    %2206 = vmatpush1.msra.mxu0 0.0
    %2207 = vmatprep.subr.mxu0 0.0
    %2208 = vmatpush1.msra.mxu0 0.0
    %2209 = vmatprep.subr.mxu0 0.0
    %2210 = vmatpush1.msra.mxu0 0.0
    %2211 = vmatprep.subr.mxu0 0.0
    %2212 = vmatpush1.msra.mxu0 0.0
    %2213 = vmatprep.subr.mxu0 0.0
    %2214 = vmatpush1.msra.mxu0 0.0
    %2215 = vmatprep.subr.mxu0 0.0
    %2216 = vmatpush1.msra.mxu0 0.0
    %2217 = vmatprep.subr.mxu0 0.0
    %2218 = vmatpush1.msra.mxu0 0.0
    %2219 = vmatprep.subr.mxu0 0.0
    %2220 = vmatpush1.msra.mxu0 0.0
    %2221 = vmatprep.mubr.f32.mxu0 0.0
    %2222 = vmatmul.mubr.f32.gmra.mrb[0].mxu0 %v2153
    %v2223 = vpop.f32.mrb[0].mxu0
    %v2224 = vadd.f32 0.0, %v2223
    %v2225 = vpop.f32.mrb[0].mxu0
    %2226 = vdwg.mxu0
    %v2227 = vrot.slane %v686, 1
    %v2229 = vsel %vm1104, %v2122, 0
    %v2231 = vsel %vm1108, %v2227, 0
    %2233 = vmatprep.subr.mxu0 0.0
    %2234 = vmatpush1.msra.mxu0 %v2231
    %2235 = vmatprep.subr.mxu0 0.0
    %2236 = vmatpush1.msra.mxu0 0.0
    %2237 = vmatprep.subr.mxu0 0.0
    %2238 = vmatpush1.msra.mxu0 0.0
    %2239 = vmatprep.subr.mxu0 0.0
    %2240 = vmatpush1.msra.mxu0 0.0
    %2241 = vmatprep.subr.mxu0 0.0
    %2242 = vmatpush1.msra.mxu0 0.0
    %2243 = vmatprep.subr.mxu0 0.0
    %2244 = vmatpush1.msra.mxu0 0.0
    %2245 = vmatprep.subr.mxu0 0.0
    %2246 = vmatpush1.msra.mxu0 0.0
    %2247 = vmatprep.subr.mxu0 0.0
    %2248 = vmatpush1.msra.mxu0 0.0
    %2249 = vmatprep.subr.mxu0 0.0
    %2250 = vmatpush1.msra.mxu0 0.0
    %2251 = vmatprep.subr.mxu0 0.0
    %2252 = vmatpush1.msra.mxu0 0.0
    %2253 = vmatprep.subr.mxu0 0.0
    %2254 = vmatpush1.msra.mxu0 0.0
    %2255 = vmatprep.subr.mxu0 0.0
    %2256 = vmatpush1.msra.mxu0 0.0
    %2257 = vmatprep.subr.mxu0 0.0
    %2258 = vmatpush1.msra.mxu0 0.0
    %2259 = vmatprep.subr.mxu0 0.0
    %2260 = vmatpush1.msra.mxu0 0.0
    %2261 = vmatprep.subr.mxu0 0.0
    %2262 = vmatpush1.msra.mxu0 0.0
    %2263 = vmatprep.subr.mxu0 0.0
    %2264 = vmatpush1.msra.mxu0 0.0
    %2265 = vmatprep.subr.mxu0 0.0
    %2266 = vmatpush1.msra.mxu0 0.0
    %2267 = vmatprep.subr.mxu0 0.0
    %2268 = vmatpush1.msra.mxu0 0.0
    %2269 = vmatprep.subr.mxu0 0.0
    %2270 = vmatpush1.msra.mxu0 0.0
    %2271 = vmatprep.subr.mxu0 0.0
    %2272 = vmatpush1.msra.mxu0 0.0
    %2273 = vmatprep.subr.mxu0 0.0
    %2274 = vmatpush1.msra.mxu0 0.0
    %2275 = vmatprep.subr.mxu0 0.0
    %2276 = vmatpush1.msra.mxu0 0.0
    %2277 = vmatprep.subr.mxu0 0.0
    %2278 = vmatpush1.msra.mxu0 0.0
    %2279 = vmatprep.subr.mxu0 0.0
    %2280 = vmatpush1.msra.mxu0 0.0
    %2281 = vmatprep.subr.mxu0 0.0
    %2282 = vmatpush1.msra.mxu0 0.0
    %2283 = vmatprep.subr.mxu0 0.0
    %2284 = vmatpush1.msra.mxu0 0.0
    %2285 = vmatprep.subr.mxu0 0.0
    %2286 = vmatpush1.msra.mxu0 0.0
    %2287 = vmatprep.subr.mxu0 0.0
    %2288 = vmatpush1.msra.mxu0 0.0
    %2289 = vmatprep.subr.mxu0 0.0
    %2290 = vmatpush1.msra.mxu0 0.0
    %2291 = vmatprep.subr.mxu0 0.0
    %2292 = vmatpush1.msra.mxu0 0.0
    %2293 = vmatprep.subr.mxu0 0.0
    %2294 = vmatpush1.msra.mxu0 0.0
    %2295 = vmatprep.subr.mxu0 0.0
    %2296 = vmatpush1.msra.mxu0 0.0
    %2297 = vmatprep.mubr.f32.mxu0 0.0
    %2298 = vmatmul.mubr.f32.gmra.mrb[0].mxu0 %v2229
    %v2299 = vpop.f32.mrb[0].mxu0
    %v2300 = vadd.f32 0.0, %v2299
    %v2301 = vpop.f32.mrb[0].mxu0
    %2302 = vdwg.mxu0
    %v2303 = vrot.slane %v688, 1
    %v2305 = vsel %vm1104, %v2124, 0
    %v2307 = vsel %vm1108, %v2303, 0
    %2309 = vmatprep.subr.mxu0 0.0
    %2310 = vmatpush1.msra.mxu0 %v2307
    %2311 = vmatprep.subr.mxu0 0.0
    %2312 = vmatpush1.msra.mxu0 0.0
    %2313 = vmatprep.subr.mxu0 0.0
    %2314 = vmatpush1.msra.mxu0 0.0
    %2315 = vmatprep.subr.mxu0 0.0
    %2316 = vmatpush1.msra.mxu0 0.0
    %2317 = vmatprep.subr.mxu0 0.0
    %2318 = vmatpush1.msra.mxu0 0.0
    %2319 = vmatprep.subr.mxu0 0.0
    %2320 = vmatpush1.msra.mxu0 0.0
    %2321 = vmatprep.subr.mxu0 0.0
    %2322 = vmatpush1.msra.mxu0 0.0
    %2323 = vmatprep.subr.mxu0 0.0
    %2324 = vmatpush1.msra.mxu0 0.0
    %2325 = vmatprep.subr.mxu0 0.0
    %2326 = vmatpush1.msra.mxu0 0.0
    %2327 = vmatprep.subr.mxu0 0.0
    %2328 = vmatpush1.msra.mxu0 0.0
    %2329 = vmatprep.subr.mxu0 0.0
    %2330 = vmatpush1.msra.mxu0 0.0
    %2331 = vmatprep.subr.mxu0 0.0
    %2332 = vmatpush1.msra.mxu0 0.0
    %2333 = vmatprep.subr.mxu0 0.0
    %2334 = vmatpush1.msra.mxu0 0.0
    %2335 = vmatprep.subr.mxu0 0.0
    %2336 = vmatpush1.msra.mxu0 0.0
    %2337 = vmatprep.subr.mxu0 0.0
    %2338 = vmatpush1.msra.mxu0 0.0
    %2339 = vmatprep.subr.mxu0 0.0
    %2340 = vmatpush1.msra.mxu0 0.0
    %2341 = vmatprep.subr.mxu0 0.0
    %2342 = vmatpush1.msra.mxu0 0.0
    %2343 = vmatprep.subr.mxu0 0.0
    %2344 = vmatpush1.msra.mxu0 0.0
    %2345 = vmatprep.subr.mxu0 0.0
    %2346 = vmatpush1.msra.mxu0 0.0
    %2347 = vmatprep.subr.mxu0 0.0
    %2348 = vmatpush1.msra.mxu0 0.0
    %2349 = vmatprep.subr.mxu0 0.0
    %2350 = vmatpush1.msra.mxu0 0.0
    %2351 = vmatprep.subr.mxu0 0.0
    %2352 = vmatpush1.msra.mxu0 0.0
    %2353 = vmatprep.subr.mxu0 0.0
    %2354 = vmatpush1.msra.mxu0 0.0
    %2355 = vmatprep.subr.mxu0 0.0
    %2356 = vmatpush1.msra.mxu0 0.0
    %2357 = vmatprep.subr.mxu0 0.0
    %2358 = vmatpush1.msra.mxu0 0.0
    %2359 = vmatprep.subr.mxu0 0.0
    %2360 = vmatpush1.msra.mxu0 0.0
    %2361 = vmatprep.subr.mxu0 0.0
    %2362 = vmatpush1.msra.mxu0 0.0
    %2363 = vmatprep.subr.mxu0 0.0
    %2364 = vmatpush1.msra.mxu0 0.0
    %2365 = vmatprep.subr.mxu0 0.0
    %2366 = vmatpush1.msra.mxu0 0.0
    %2367 = vmatprep.subr.mxu0 0.0
    %2368 = vmatpush1.msra.mxu0 0.0
    %2369 = vmatprep.subr.mxu0 0.0
    %2370 = vmatpush1.msra.mxu0 0.0
    %2371 = vmatprep.subr.mxu0 0.0
    %2372 = vmatpush1.msra.mxu0 0.0
    %2373 = vmatprep.mubr.f32.mxu0 0.0
    %2374 = vmatmul.mubr.f32.gmra.mrb[0].mxu0 %v2305
    %v2375 = vpop.f32.mrb[0].mxu0
    %v2376 = vadd.f32 0.0, %v2375
    %v2377 = vpop.f32.mrb[0].mxu0
    %2378 = vdwg.mxu0
    %v2379 = vrot.slane %v690, 1
    %v2381 = vsel %vm1104, %v2126, 0
    %v2383 = vsel %vm1108, %v2379, 0
    %2385 = vmatprep.subr.mxu0 0.0
    %2386 = vmatpush1.msra.mxu0 %v2383
    %2387 = vmatprep.subr.mxu0 0.0
    %2388 = vmatpush1.msra.mxu0 0.0
    %2389 = vmatprep.subr.mxu0 0.0
    %2390 = vmatpush1.msra.mxu0 0.0
    %2391 = vmatprep.subr.mxu0 0.0
    %2392 = vmatpush1.msra.mxu0 0.0
    %2393 = vmatprep.subr.mxu0 0.0
    %2394 = vmatpush1.msra.mxu0 0.0
    %2395 = vmatprep.subr.mxu0 0.0
    %2396 = vmatpush1.msra.mxu0 0.0
    %2397 = vmatprep.subr.mxu0 0.0
    %2398 = vmatpush1.msra.mxu0 0.0
    %2399 = vmatprep.subr.mxu0 0.0
    %2400 = vmatpush1.msra.mxu0 0.0
    %2401 = vmatprep.subr.mxu0 0.0
    %2402 = vmatpush1.msra.mxu0 0.0
    %2403 = vmatprep.subr.mxu0 0.0
    %2404 = vmatpush1.msra.mxu0 0.0
    %2405 = vmatprep.subr.mxu0 0.0
    %2406 = vmatpush1.msra.mxu0 0.0
    %2407 = vmatprep.subr.mxu0 0.0
    %2408 = vmatpush1.msra.mxu0 0.0
    %2409 = vmatprep.subr.mxu0 0.0
    %2410 = vmatpush1.msra.mxu0 0.0
    %2411 = vmatprep.subr.mxu0 0.0
    %2412 = vmatpush1.msra.mxu0 0.0
    %2413 = vmatprep.subr.mxu0 0.0
    %2414 = vmatpush1.msra.mxu0 0.0
    %2415 = vmatprep.subr.mxu0 0.0
    %2416 = vmatpush1.msra.mxu0 0.0
    %2417 = vmatprep.subr.mxu0 0.0
    %2418 = vmatpush1.msra.mxu0 0.0
    %2419 = vmatprep.subr.mxu0 0.0
    %2420 = vmatpush1.msra.mxu0 0.0
    %2421 = vmatprep.subr.mxu0 0.0
    %2422 = vmatpush1.msra.mxu0 0.0
    %2423 = vmatprep.subr.mxu0 0.0
    %2424 = vmatpush1.msra.mxu0 0.0
    %2425 = vmatprep.subr.mxu0 0.0
    %2426 = vmatpush1.msra.mxu0 0.0
    %2427 = vmatprep.subr.mxu0 0.0
    %2428 = vmatpush1.msra.mxu0 0.0
    %2429 = vmatprep.subr.mxu0 0.0
    %2430 = vmatpush1.msra.mxu0 0.0
    %2431 = vmatprep.subr.mxu0 0.0
    %2432 = vmatpush1.msra.mxu0 0.0
    %2433 = vmatprep.subr.mxu0 0.0
    %2434 = vmatpush1.msra.mxu0 0.0
    %2435 = vmatprep.subr.mxu0 0.0
    %2436 = vmatpush1.msra.mxu0 0.0
    %2437 = vmatprep.subr.mxu0 0.0
    %2438 = vmatpush1.msra.mxu0 0.0
    %2439 = vmatprep.subr.mxu0 0.0
    %2440 = vmatpush1.msra.mxu0 0.0
    %2441 = vmatprep.subr.mxu0 0.0
    %2442 = vmatpush1.msra.mxu0 0.0
    %2443 = vmatprep.subr.mxu0 0.0
    %2444 = vmatpush1.msra.mxu0 0.0
    %2445 = vmatprep.subr.mxu0 0.0
    %2446 = vmatpush1.msra.mxu0 0.0
    %2447 = vmatprep.subr.mxu0 0.0
    %2448 = vmatpush1.msra.mxu0 0.0
    %2449 = vmatprep.mubr.f32.mxu0 0.0
    %2450 = vmatmul.mubr.f32.gmra.mrb[0].mxu0 %v2381
    %v2451 = vpop.f32.mrb[0].mxu0
    %v2452 = vadd.f32 0.0, %v2451
    %v2453 = vpop.f32.mrb[0].mxu0
    %2454 = vdwg.mxu0
    %v2456 = vsel %vm691, %v2108, 0
    %2458 = vmatprep.subr.mxu0 0.0
    %2459 = vmatpush1.msra.mxu0 %v534
    %2460 = vmatprep.subr.mxu0 0.0
    %2461 = vmatpush1.msra.mxu0 0.0
    %2462 = vmatprep.subr.mxu0 0.0
    %2463 = vmatpush1.msra.mxu0 0.0
    %2464 = vmatprep.subr.mxu0 0.0
    %2465 = vmatpush1.msra.mxu0 0.0
    %2466 = vmatprep.subr.mxu0 0.0
    %2467 = vmatpush1.msra.mxu0 0.0
    %2468 = vmatprep.subr.mxu0 0.0
    %2469 = vmatpush1.msra.mxu0 0.0
    %2470 = vmatprep.subr.mxu0 0.0
    %2471 = vmatpush1.msra.mxu0 0.0
    %2472 = vmatprep.subr.mxu0 0.0
    %2473 = vmatpush1.msra.mxu0 0.0
    %2474 = vmatprep.subr.mxu0 0.0
    %2475 = vmatpush1.msra.mxu0 0.0
    %2476 = vmatprep.subr.mxu0 0.0
    %2477 = vmatpush1.msra.mxu0 0.0
    %2478 = vmatprep.subr.mxu0 0.0
    %2479 = vmatpush1.msra.mxu0 0.0
    %2480 = vmatprep.subr.mxu0 0.0
    %2481 = vmatpush1.msra.mxu0 0.0
    %2482 = vmatprep.subr.mxu0 0.0
    %2483 = vmatpush1.msra.mxu0 0.0
    %2484 = vmatprep.subr.mxu0 0.0
    %2485 = vmatpush1.msra.mxu0 0.0
    %2486 = vmatprep.subr.mxu0 0.0
    %2487 = vmatpush1.msra.mxu0 0.0
    %2488 = vmatprep.subr.mxu0 0.0
    %2489 = vmatpush1.msra.mxu0 0.0
    %2490 = vmatprep.subr.mxu0 0.0
    %2491 = vmatpush1.msra.mxu0 0.0
    %2492 = vmatprep.subr.mxu0 0.0
    %2493 = vmatpush1.msra.mxu0 0.0
    %2494 = vmatprep.subr.mxu0 0.0
    %2495 = vmatpush1.msra.mxu0 0.0
    %2496 = vmatprep.subr.mxu0 0.0
    %2497 = vmatpush1.msra.mxu0 0.0
    %2498 = vmatprep.subr.mxu0 0.0
    %2499 = vmatpush1.msra.mxu0 0.0
    %2500 = vmatprep.subr.mxu0 0.0
    %2501 = vmatpush1.msra.mxu0 0.0
    %2502 = vmatprep.subr.mxu0 0.0
    %2503 = vmatpush1.msra.mxu0 0.0
    %2504 = vmatprep.subr.mxu0 0.0
    %2505 = vmatpush1.msra.mxu0 0.0
    %2506 = vmatprep.subr.mxu0 0.0
    %2507 = vmatpush1.msra.mxu0 0.0
    %2508 = vmatprep.subr.mxu0 0.0
    %2509 = vmatpush1.msra.mxu0 0.0
    %2510 = vmatprep.subr.mxu0 0.0
    %2511 = vmatpush1.msra.mxu0 0.0
    %2512 = vmatprep.subr.mxu0 0.0
    %2513 = vmatpush1.msra.mxu0 0.0
    %2514 = vmatprep.subr.mxu0 0.0
    %2515 = vmatpush1.msra.mxu0 0.0
    %2516 = vmatprep.subr.mxu0 0.0
    %2517 = vmatpush1.msra.mxu0 0.0
    %2518 = vmatprep.subr.mxu0 0.0
    %2519 = vmatpush1.msra.mxu0 0.0
    %2520 = vmatprep.subr.mxu0 0.0
    %2521 = vmatpush1.msra.mxu0 0.0
    %2522 = vmatprep.mubr.f32.mxu0 0.0
    %2523 = vmatmul.mubr.f32.gmra.mrb[0].mxu0 %v2456
    %v2524 = vpop.f32.mrb[0].mxu0
    %v2525 = vadd.f32 %v2224, %v2524
    %v2526 = vpop.f32.mrb[0].mxu0
    %2527 = vdwg.mxu0
    %v2529 = vsel %vm691, %v2110, 0
    %2531 = vmatprep.subr.mxu0 0.0
    %2532 = vmatpush1.msra.mxu0 %v669
    %2533 = vmatprep.subr.mxu0 0.0
    %2534 = vmatpush1.msra.mxu0 0.0
    %2535 = vmatprep.subr.mxu0 0.0
    %2536 = vmatpush1.msra.mxu0 0.0
    %2537 = vmatprep.subr.mxu0 0.0
    %2538 = vmatpush1.msra.mxu0 0.0
    %2539 = vmatprep.subr.mxu0 0.0
    %2540 = vmatpush1.msra.mxu0 0.0
    %2541 = vmatprep.subr.mxu0 0.0
    %2542 = vmatpush1.msra.mxu0 0.0
    %2543 = vmatprep.subr.mxu0 0.0
    %2544 = vmatpush1.msra.mxu0 0.0
    %2545 = vmatprep.subr.mxu0 0.0
    %2546 = vmatpush1.msra.mxu0 0.0
    %2547 = vmatprep.subr.mxu0 0.0
    %2548 = vmatpush1.msra.mxu0 0.0
    %2549 = vmatprep.subr.mxu0 0.0
    %2550 = vmatpush1.msra.mxu0 0.0
    %2551 = vmatprep.subr.mxu0 0.0
    %2552 = vmatpush1.msra.mxu0 0.0
    %2553 = vmatprep.subr.mxu0 0.0
    %2554 = vmatpush1.msra.mxu0 0.0
    %2555 = vmatprep.subr.mxu0 0.0
    %2556 = vmatpush1.msra.mxu0 0.0
    %2557 = vmatprep.subr.mxu0 0.0
    %2558 = vmatpush1.msra.mxu0 0.0
    %2559 = vmatprep.subr.mxu0 0.0
    %2560 = vmatpush1.msra.mxu0 0.0
    %2561 = vmatprep.subr.mxu0 0.0
    %2562 = vmatpush1.msra.mxu0 0.0
    %2563 = vmatprep.subr.mxu0 0.0
    %2564 = vmatpush1.msra.mxu0 0.0
    %2565 = vmatprep.subr.mxu0 0.0
    %2566 = vmatpush1.msra.mxu0 0.0
    %2567 = vmatprep.subr.mxu0 0.0
    %2568 = vmatpush1.msra.mxu0 0.0
    %2569 = vmatprep.subr.mxu0 0.0
    %2570 = vmatpush1.msra.mxu0 0.0
    %2571 = vmatprep.subr.mxu0 0.0
    %2572 = vmatpush1.msra.mxu0 0.0
    %2573 = vmatprep.subr.mxu0 0.0
    %2574 = vmatpush1.msra.mxu0 0.0
    %2575 = vmatprep.subr.mxu0 0.0
    %2576 = vmatpush1.msra.mxu0 0.0
    %2577 = vmatprep.subr.mxu0 0.0
    %2578 = vmatpush1.msra.mxu0 0.0
    %2579 = vmatprep.subr.mxu0 0.0
    %2580 = vmatpush1.msra.mxu0 0.0
    %2581 = vmatprep.subr.mxu0 0.0
    %2582 = vmatpush1.msra.mxu0 0.0
    %2583 = vmatprep.subr.mxu0 0.0
    %2584 = vmatpush1.msra.mxu0 0.0
    %2585 = vmatprep.subr.mxu0 0.0
    %2586 = vmatpush1.msra.mxu0 0.0
    %2587 = vmatprep.subr.mxu0 0.0
    %2588 = vmatpush1.msra.mxu0 0.0
    %2589 = vmatprep.subr.mxu0 0.0
    %2590 = vmatpush1.msra.mxu0 0.0
    %2591 = vmatprep.subr.mxu0 0.0
    %2592 = vmatpush1.msra.mxu0 0.0
    %2593 = vmatprep.subr.mxu0 0.0
    %2594 = vmatpush1.msra.mxu0 0.0
    %2595 = vmatprep.mubr.f32.mxu0 0.0
    %2596 = vmatmul.mubr.f32.gmra.mrb[0].mxu0 %v2529
    %v2597 = vpop.f32.mrb[0].mxu0
    %v2598 = vadd.f32 %v2300, %v2597
    %v2599 = vpop.f32.mrb[0].mxu0
    %2600 = vdwg.mxu0
    %v2602 = vsel %vm691, %v2112, 0
    %2604 = vmatprep.subr.mxu0 0.0
    %2605 = vmatpush1.msra.mxu0 %v675
    %2606 = vmatprep.subr.mxu0 0.0
    %2607 = vmatpush1.msra.mxu0 0.0
    %2608 = vmatprep.subr.mxu0 0.0
    %2609 = vmatpush1.msra.mxu0 0.0
    %2610 = vmatprep.subr.mxu0 0.0
    %2611 = vmatpush1.msra.mxu0 0.0
    %2612 = vmatprep.subr.mxu0 0.0
    %2613 = vmatpush1.msra.mxu0 0.0
    %2614 = vmatprep.subr.mxu0 0.0
    %2615 = vmatpush1.msra.mxu0 0.0
    %2616 = vmatprep.subr.mxu0 0.0
    %2617 = vmatpush1.msra.mxu0 0.0
    %2618 = vmatprep.subr.mxu0 0.0
    %2619 = vmatpush1.msra.mxu0 0.0
    %2620 = vmatprep.subr.mxu0 0.0
    %2621 = vmatpush1.msra.mxu0 0.0
    %2622 = vmatprep.subr.mxu0 0.0
    %2623 = vmatpush1.msra.mxu0 0.0
    %2624 = vmatprep.subr.mxu0 0.0
    %2625 = vmatpush1.msra.mxu0 0.0
    %2626 = vmatprep.subr.mxu0 0.0
    %2627 = vmatpush1.msra.mxu0 0.0
    %2628 = vmatprep.subr.mxu0 0.0
    %2629 = vmatpush1.msra.mxu0 0.0
    %2630 = vmatprep.subr.mxu0 0.0
    %2631 = vmatpush1.msra.mxu0 0.0
    %2632 = vmatprep.subr.mxu0 0.0
    %2633 = vmatpush1.msra.mxu0 0.0
    %2634 = vmatprep.subr.mxu0 0.0
    %2635 = vmatpush1.msra.mxu0 0.0
    %2636 = vmatprep.subr.mxu0 0.0
    %2637 = vmatpush1.msra.mxu0 0.0
    %2638 = vmatprep.subr.mxu0 0.0
    %2639 = vmatpush1.msra.mxu0 0.0
    %2640 = vmatprep.subr.mxu0 0.0
    %2641 = vmatpush1.msra.mxu0 0.0
    %2642 = vmatprep.subr.mxu0 0.0
    %2643 = vmatpush1.msra.mxu0 0.0
    %2644 = vmatprep.subr.mxu0 0.0
    %2645 = vmatpush1.msra.mxu0 0.0
    %2646 = vmatprep.subr.mxu0 0.0
    %2647 = vmatpush1.msra.mxu0 0.0
    %2648 = vmatprep.subr.mxu0 0.0
    %2649 = vmatpush1.msra.mxu0 0.0
    %2650 = vmatprep.subr.mxu0 0.0
    %2651 = vmatpush1.msra.mxu0 0.0
    %2652 = vmatprep.subr.mxu0 0.0
    %2653 = vmatpush1.msra.mxu0 0.0
    %2654 = vmatprep.subr.mxu0 0.0
    %2655 = vmatpush1.msra.mxu0 0.0
    %2656 = vmatprep.subr.mxu0 0.0
    %2657 = vmatpush1.msra.mxu0 0.0
    %2658 = vmatprep.subr.mxu0 0.0
    %2659 = vmatpush1.msra.mxu0 0.0
    %2660 = vmatprep.subr.mxu0 0.0
    %2661 = vmatpush1.msra.mxu0 0.0
    %2662 = vmatprep.subr.mxu0 0.0
    %2663 = vmatpush1.msra.mxu0 0.0
    %2664 = vmatprep.subr.mxu0 0.0
    %2665 = vmatpush1.msra.mxu0 0.0
    %2666 = vmatprep.subr.mxu0 0.0
    %2667 = vmatpush1.msra.mxu0 0.0
    %2668 = vmatprep.mubr.f32.mxu0 0.0
    %2669 = vmatmul.mubr.f32.gmra.mrb[0].mxu0 %v2602
    %v2670 = vpop.f32.mrb[0].mxu0
    %v2671 = vadd.f32 %v2376, %v2670
    %v2672 = vpop.f32.mrb[0].mxu0
    %2673 = vdwg.mxu0
    %v2675 = vsel %vm691, %v2114, 0
    %2677 = vmatprep.subr.mxu0 0.0
    %2678 = vmatpush1.msra.mxu0 %v681
    %2679 = vmatprep.subr.mxu0 0.0
    %2680 = vmatpush1.msra.mxu0 0.0
    %2681 = vmatprep.subr.mxu0 0.0
    %2682 = vmatpush1.msra.mxu0 0.0
    %2683 = vmatprep.subr.mxu0 0.0
    %2684 = vmatpush1.msra.mxu0 0.0
    %2685 = vmatprep.subr.mxu0 0.0
    %2686 = vmatpush1.msra.mxu0 0.0
    %2687 = vmatprep.subr.mxu0 0.0
    %2688 = vmatpush1.msra.mxu0 0.0
    %2689 = vmatprep.subr.mxu0 0.0
    %2690 = vmatpush1.msra.mxu0 0.0
    %2691 = vmatprep.subr.mxu0 0.0
    %2692 = vmatpush1.msra.mxu0 0.0
    %2693 = vmatprep.subr.mxu0 0.0
    %2694 = vmatpush1.msra.mxu0 0.0
    %2695 = vmatprep.subr.mxu0 0.0
    %2696 = vmatpush1.msra.mxu0 0.0
    %2697 = vmatprep.subr.mxu0 0.0
    %2698 = vmatpush1.msra.mxu0 0.0
    %2699 = vmatprep.subr.mxu0 0.0
    %2700 = vmatpush1.msra.mxu0 0.0
    %2701 = vmatprep.subr.mxu0 0.0
    %2702 = vmatpush1.msra.mxu0 0.0
    %2703 = vmatprep.subr.mxu0 0.0
    %2704 = vmatpush1.msra.mxu0 0.0
    %2705 = vmatprep.subr.mxu0 0.0
    %2706 = vmatpush1.msra.mxu0 0.0
    %2707 = vmatprep.subr.mxu0 0.0
    %2708 = vmatpush1.msra.mxu0 0.0
    %2709 = vmatprep.subr.mxu0 0.0
    %2710 = vmatpush1.msra.mxu0 0.0
    %2711 = vmatprep.subr.mxu0 0.0
    %2712 = vmatpush1.msra.mxu0 0.0
    %2713 = vmatprep.subr.mxu0 0.0
    %2714 = vmatpush1.msra.mxu0 0.0
    %2715 = vmatprep.subr.mxu0 0.0
    %2716 = vmatpush1.msra.mxu0 0.0
    %2717 = vmatprep.subr.mxu0 0.0
    %2718 = vmatpush1.msra.mxu0 0.0
    %2719 = vmatprep.subr.mxu0 0.0
    %2720 = vmatpush1.msra.mxu0 0.0
    %2721 = vmatprep.subr.mxu0 0.0
    %2722 = vmatpush1.msra.mxu0 0.0
    %2723 = vmatprep.subr.mxu0 0.0
    %2724 = vmatpush1.msra.mxu0 0.0
    %2725 = vmatprep.subr.mxu0 0.0
    %2726 = vmatpush1.msra.mxu0 0.0
    %2727 = vmatprep.subr.mxu0 0.0
    %2728 = vmatpush1.msra.mxu0 0.0
    %2729 = vmatprep.subr.mxu0 0.0
    %2730 = vmatpush1.msra.mxu0 0.0
    %2731 = vmatprep.subr.mxu0 0.0
    %2732 = vmatpush1.msra.mxu0 0.0
    %2733 = vmatprep.subr.mxu0 0.0
    %2734 = vmatpush1.msra.mxu0 0.0
    %2735 = vmatprep.subr.mxu0 0.0
    %2736 = vmatpush1.msra.mxu0 0.0
    %2737 = vmatprep.subr.mxu0 0.0
    %2738 = vmatpush1.msra.mxu0 0.0
    %2739 = vmatprep.subr.mxu0 0.0
    %2740 = vmatpush1.msra.mxu0 0.0
    %2741 = vmatprep.mubr.f32.mxu0 0.0
    %2742 = vmatmul.mubr.f32.gmra.mrb[0].mxu0 %v2675
    %v2743 = vpop.f32.mrb[0].mxu0
    %v2744 = vadd.f32 %v2452, %v2743
    %v2745 = vpop.f32.mrb[0].mxu0
    %2746 = vdwg.mxu0
    %2748 = vset.pattern.permute.xlu0 0
    %2749 = vperm.xlu0 %2748, %v2147
    %v2750 = vpop.permute.xlu0 %2749
    %2753 = vset.pattern.permute.xlu0 0
    %2754 = vperm.xlu0 %2753, %v2148
    %v2755 = vpop.permute.xlu0 %2754
    %2758 = vset.pattern.permute.xlu0 0
    %2759 = vperm.xlu0 %2758, %v2149
    %v2760 = vpop.permute.xlu0 %2759
    %2763 = vset.pattern.permute.xlu0 0
    %2764 = vperm.xlu0 %2763, %v2150
    %v2765 = vpop.permute.xlu0 %2764
    %v2767 = vmul.f32 %v2525, %v2750
    %v2768 = vmul.f32 %v2598, %v2755
    %v2769 = vmul.f32 %v2671, %v2760
    %v2770 = vmul.f32 %v2744, %v2765
    %2772 = vrot.lane.b32.xlu0 %v2768, 8
    %v2773 = vpop.permute.xlu0 %2772
    %2776 = vrot.lane.b32.xlu0 %v2769, 16
    %v2777 = vpop.permute.xlu0 %2776
    %2780 = vrot.lane.b32.xlu0 %v2770, 24
    %v2781 = vpop.permute.xlu0 %2780
    %v2783 = vsel %vm691, %v2767, %v2773
    %v2784 = vsel %vm1735, %v2783, %v2777
    %v2785 = vsel %vm1737, %v2784, %v2781
    %v2786 = vld [vmem:[#allocation14] sm:$0xff]
    %v2787 = vld [vmem:[#allocation14 + $0x8] sm:$0xff]
    %v2788 = vld [vmem:[#allocation14 + $0x10] sm:$0xff]
    %v2789 = vld [vmem:[#allocation14 + $0x18] sm:$0xff]
    %v2790 = vld [vmem:[%s15] sm:$0x1]
    %v2792 = vlaneseq
    %v2793 = vshrl.u32 %v2792, 7
    %v2794 = vsub.s32 0, %v2793
    %v2795 = vrot.slane %v2790, %v2794
    %v2798 = vsel %vm187, %v1738, 0
    %v2801 = vsel %vm187, %v2785, 0
    %2803 = vmatprep.subr.mxu0 0.0
    %2804 = vmatpush1.msra.mxu0 %v2786
    %2805 = vmatprep.subr.mxu0 0.0
    %2806 = vmatpush1.msra.mxu0 %v2787
    %2807 = vmatprep.subr.mxu0 0.0
    %2808 = vmatpush1.msra.mxu0 %v2788
    %2809 = vmatprep.subr.mxu0 0.0
    %2810 = vmatpush1.msra.mxu0 %v2789
    %2811 = vmatprep.subr.mxu0 0.0
    %2812 = vmatpush1.msra.mxu0 0.0
    %2813 = vmatprep.subr.mxu0 0.0
    %2814 = vmatpush1.msra.mxu0 0.0
    %2815 = vmatprep.subr.mxu0 0.0
    %2816 = vmatpush1.msra.mxu0 0.0
    %2817 = vmatprep.subr.mxu0 0.0
    %2818 = vmatpush1.msra.mxu0 0.0
    %2819 = vmatprep.subr.mxu0 0.0
    %2820 = vmatpush1.msra.mxu0 0.0
    %2821 = vmatprep.subr.mxu0 0.0
    %2822 = vmatpush1.msra.mxu0 0.0
    %2823 = vmatprep.subr.mxu0 0.0
    %2824 = vmatpush1.msra.mxu0 0.0
    %2825 = vmatprep.subr.mxu0 0.0
    %2826 = vmatpush1.msra.mxu0 0.0
    %2827 = vmatprep.subr.mxu0 0.0
    %2828 = vmatpush1.msra.mxu0 0.0
    %2829 = vmatprep.subr.mxu0 0.0
    %2830 = vmatpush1.msra.mxu0 0.0
    %2831 = vmatprep.subr.mxu0 0.0
    %2832 = vmatpush1.msra.mxu0 0.0
    %2833 = vmatprep.subr.mxu0 0.0
    %2834 = vmatpush1.msra.mxu0 0.0
    %2835 = vmatprep.subr.mxu0 0.0
    %2836 = vmatpush1.msra.mxu0 0.0
    %2837 = vmatprep.subr.mxu0 0.0
    %2838 = vmatpush1.msra.mxu0 0.0
    %2839 = vmatprep.subr.mxu0 0.0
    %2840 = vmatpush1.msra.mxu0 0.0
    %2841 = vmatprep.subr.mxu0 0.0
    %2842 = vmatpush1.msra.mxu0 0.0
    %2843 = vmatprep.subr.mxu0 0.0
    %2844 = vmatpush1.msra.mxu0 0.0
    %2845 = vmatprep.subr.mxu0 0.0
    %2846 = vmatpush1.msra.mxu0 0.0
    %2847 = vmatprep.subr.mxu0 0.0
    %2848 = vmatpush1.msra.mxu0 0.0
    %2849 = vmatprep.subr.mxu0 0.0
    %2850 = vmatpush1.msra.mxu0 0.0
    %2851 = vmatprep.subr.mxu0 0.0
    %2852 = vmatpush1.msra.mxu0 0.0
    %2853 = vmatprep.subr.mxu0 0.0
    %2854 = vmatpush1.msra.mxu0 0.0
    %2855 = vmatprep.subr.mxu0 0.0
    %2856 = vmatpush1.msra.mxu0 0.0
    %2857 = vmatprep.subr.mxu0 0.0
    %2858 = vmatpush1.msra.mxu0 0.0
    %2859 = vmatprep.subr.mxu0 0.0
    %2860 = vmatpush1.msra.mxu0 0.0
    %2861 = vmatprep.subr.mxu0 0.0
    %2862 = vmatpush1.msra.mxu0 0.0
    %2863 = vmatprep.subr.mxu0 0.0
    %2864 = vmatpush1.msra.mxu0 0.0
    %2865 = vmatprep.subr.mxu0 0.0
    %2866 = vmatpush1.msra.mxu0 0.0
    %2867 = vmatprep.mubr.f32.mxu0 0.0
    %2868 = vmatmul.mubr.f32.gmra.mrb[0].mxu0 %v2798
    %v2869 = vpop.f32.mrb[0].mxu0
    %v2870 = vadd.f32 %v2795, %v2869
    %v2871 = vpop.f32.mrb[0].mxu0
    %2872 = vmatprep.mubr.f32.mxu0 0.0
    %2873 = vmatmul.mubr.f32.gmra.mrb[0].mxu0 %v2801
    %v2874 = vpop.f32.mrb[0].mxu0
    %v2875 = vadd.f32 %v2795, %v2874
    %v2876 = vpop.f32.mrb[0].mxu0
    %2877 = vdwg.mxu0
    %v2878 = vadd.f32 %v169, %v2870
    %v2879 = vadd.f32 %v170, %v2875
    %v2880 = vsel %vm187, %v2878, 0.0
    %2881 = vadd.xlane.f32.xlu0 %v2880
    %v2882 = vpop.xlane.xlu0 %2881
    %v2883 = vsel %vm187, %v2879, 0.0
    %2884 = vadd.xlane.f32.xlu0 %v2883
    %v2885 = vpop.xlane.xlu0 %2884
    %v2886 = vrcp.pop 32.0
    %v2887 = vmul.f32 %v2882, %v2886
    %v2888 = vmul.f32 %v2885, %v2886
    %v2889 = vsub.f32 %v2878, %v2887
    %v2890 = vsub.f32 %v2879, %v2888
    %v2891 = vmul.f32 %v2889, %v2889
    %v2892 = vmul.f32 %v2890, %v2890
    %v2893 = vsel %vm187, %v2891, 0.0
    %2894 = vadd.xlane.f32.xlu0 %v2893
    %v2895 = vpop.xlane.xlu0 %2894
    %v2896 = vsel %vm187, %v2892, 0.0
    %2897 = vadd.xlane.f32.xlu0 %v2896
    %v2898 = vpop.xlane.xlu0 %2897
    %v2899 = vmul.f32 %v2895, %v2886
    %v2900 = vmul.f32 %v2898, %v2886
    %v2901 = vadd.f32 %v2899, 1e-05
    %v2902 = vadd.f32 %v2900, 1e-05
    %v2903 = vrsqrt.pop %v2901
    %v2904 = vrsqrt.pop %v2902
    %v2905 = vmul.f32 %v2889, %v2903
    %v2906 = vmul.f32 %v2890, %v2904
    %v2907 = vld [vmem:[%s16] sm:$0x1]
    %v2909 = vlaneseq
    %v2910 = vshrl.u32 %v2909, 7
    %v2911 = vsub.s32 0, %v2910
    %v2912 = vrot.slane %v2907, %v2911
    %v2914 = vmul.f32 %v2905, %v2912
    %v2915 = vmul.f32 %v2906, %v2912
    %v2916 = vld [vmem:[%s17] sm:$0x1]
    %v2918 = vlaneseq
    %v2919 = vshrl.u32 %v2918, 7
    %v2920 = vsub.s32 0, %v2919
    %v2921 = vrot.slane %v2916, %v2920
    %v2923 = vadd.f32 %v2914, %v2921
    %v2924 = vadd.f32 %v2915, %v2921
    %2925 = vst.msk [vmem:[#allocation16] sm:$0xff] %vm187, %v2923
    %2926 = vst.msk [vmem:[#allocation16 + $0x8] sm:$0xff] %vm187, %v2924
    // Predicated region
    $region106: #{tpu_custom_call.1} parent=1 // pred_check
      _
    $region107: #{tpu_custom_call.1} parent=1 // pred_check_branch
      %2928 = sbr.rel (0) target = $region109
    $region108: #{tpu_custom_call.1} parent=1 // pred_region
      %s2930 = ssub.s32 256, 256
      %2931 = vsyncadd [#allocation4], %s2930
      %s2932 = sshll.u32 [#allocation16], 4
      %s2933 = int_to_ptr.vmem [resolvable:$true] %s2932
      %2938 = dma.vmem_to_hbm [thread:$0]  %s2933, 256, %s18, [#allocation4], 128, 128, 8
    $region109: #{tpu_custom_call.1} parent=1 // pred_fallthru
      _
    // Predicated region
    $region110: #{tpu_custom_call.1} parent=1 // pred_check
      _
    $region111: #{tpu_custom_call.1} parent=1 // pred_check_branch
      %2940 = sbr.rel (0) target = $region113
    $region112: #{tpu_custom_call.1} parent=1 // pred_region
      %2941 = dma.done [#allocation4], 256
    $region113: #{tpu_custom_call.1} parent=1 // pred_fallthru
      _
    %2942 = vsyncpa [#allocation3], 1
    %2943 = vsyncpa [#allocation6], 1
    %2944 = vsyncpa [#allocation9], 1
    %2945 = vsyncpa [#allocation12], 1
    %2946 = vsyncpa [#allocation15], 1
    %2947 = vsyncpa [#allocation4], 1

</llo_original>
